<compile_context>
chip_gen: v7x
topology: tpu7x:2x2x1
jax: 0.10.0
libtpu: 0.0.40
codegen_flags: <defaults>
</compile_context>

<pallas_src>
import functools

import jax
import jax.numpy as jnp
from jax.experimental import pallas as pl
from jax.experimental.pallas import tpu as pltpu


# ----------------------------------------------------------------------------
# kernel: operates on a (L, B*N) lane-dense activation slab
# ----------------------------------------------------------------------------
def _ssm_kernel(x_ref, b_ref, minv_ref, c_ref, d_ref, o_ref):
    # x_ref   : (L, B*N) f32   -- batches packed along the lane axis
    # b_ref   : (N, L)   bf16
    # minv_ref: (N, N)   bf16  == inv(I - a)
    # c_ref   : (L, N)   bf16
    # d_ref   : (L, B*N) f32   -- d tiled once per batch column-block
    # o_ref   : (L, B*N) f32
    f32, bf16 = jnp.float32, jnp.bfloat16

    xb = x_ref[...].astype(bf16)

    # bx = b @ x                                                (N, B*N)
    bx = jnp.dot(b_ref[...], xb, preferred_element_type=f32)

    # h = solve(I - a, bx);  tanh(a @ h + bx) == tanh(h)  (exact identity)
    h = jnp.tanh(jnp.dot(minv_ref[...], bx.astype(bf16),
                         preferred_element_type=f32))

    # yhat = c @ h + d                                          (L, B*N)
    o_ref[...] = jnp.dot(c_ref[...], h.astype(bf16),
                         preferred_element_type=f32) + d_ref[...]


# ----------------------------------------------------------------------------
# wrapper: parameter precompute + lane-dense layout plumbing + pallas_call
# ----------------------------------------------------------------------------
def ssm_calc(x, a, b, c, d):
    B, L, N = x.shape
    f32 = jnp.float32

    # Parameter-only precompute (replaces torch.linalg.solve inside forward).
    minv = jnp.linalg.inv(jnp.eye(N, dtype=f32) - a)

    # Lane-dense activation slab: (B, L, N) -> (L, B*N)
    x_slab = jnp.transpose(x, (1, 0, 2)).reshape(L, B * N)
    d_slab = jnp.tile(d, (1, B))                                 # (L, B*N)

    out = pl.pallas_call(
        _ssm_kernel,
        out_shape=jax.ShapeDtypeStruct((L, B * N), f32),
        in_specs=[pl.BlockSpec(memory_space=pltpu.MemorySpace.VMEM)] * 5,
        out_specs=pl.BlockSpec(memory_space=pltpu.MemorySpace.VMEM),
    )(
        x_slab,
        b.astype(jnp.bfloat16),
        minv.astype(jnp.bfloat16),
        c.astype(jnp.bfloat16),
        d_slab,
    )
    # back to the module's (B, L, N) layout
    return jnp.transpose(out.reshape(L, B, N), (1, 0, 2))


# ----------------------------------------------------------------------------
# pure-JAX reference (mirrors the torch forward exactly)
# ----------------------------------------------------------------------------
def ssm_calc_reference(x, a, b, c, d):
    eye = jnp.eye(a.shape[0], dtype=x.dtype)
    bx = jnp.einsum('ij,bjk->bik', b, x)
    h = jax.vmap(lambda rhs: jnp.linalg.solve(eye - a, rhs))(bx)
    h = jnp.tanh(jnp.einsum('ij,bjk->bik', a, h) + bx)
    y = jnp.einsum('ij,bjk->bik', c, h)
    return y + d


if __name__ == "__main__":
    B, L, N = 2, 64, 64          # x: (B, l_dim, n_dim);  B*N = 128 -> lane-dense
    key = jax.random.PRNGKey(0)
    kx, ka, kb, kc, kd = jax.random.split(key, 5)
    x = jax.random.normal(kx, (B, L, N), jnp.float32)
    a = jax.random.normal(ka, (N, N), jnp.float32) * 0.1
    b = jax.random.normal(kb, (N, L), jnp.float32) * 0.1
    c = jax.random.normal(kc, (L, N), jnp.float32) * 0.1
    d = jax.random.normal(kd, (L, N), jnp.float32) * 0.1

    fwd = jax.jit(ssm_calc)
    out = jax.block_until_ready(fwd(x, a, b, c, d))
    assert out.shape == (B, L, N), out.shape
    assert bool(jnp.all(jnp.isfinite(out)))

    # bf16-operand matmuls with f32 accumulation -> ~1e-2 absolute drift max.
    ref = jax.block_until_ready(ssm_calc_reference(x, a, b, c, d))
    max_err = float(jnp.max(jnp.abs(out - ref)))
    assert max_err < 5e-2, f"max abs error vs reference: {max_err}"

    print("KERNEL_OK")
</pallas_src>

<mosaic_0001>
module attributes {stable_mosaic.version = 11 : i64} {
  func.func @_ssm_kernel(%arg0: memref<64x128xf32, #tpu.memory_space<vmem>>, %arg1: memref<64x64xbf16, #tpu.memory_space<vmem>>, %arg2: memref<64x64xbf16, #tpu.memory_space<vmem>>, %arg3: memref<64x64xbf16, #tpu.memory_space<vmem>>, %arg4: memref<64x128xf32, #tpu.memory_space<vmem>>, %arg5: memref<64x128xf32, #tpu.memory_space<vmem>>) attributes {dimension_semantics = [], scalar_prefetch = 0 : i64, scratch_operands = 0 : i64, tpu.core_type = #tpu.core_type<tc>} {
    %c0 = arith.constant 0 : index
    %c0_0 = arith.constant 0 : index
    %0 = vector.load %arg0[%c0, %c0_0] : memref<64x128xf32, #tpu.memory_space<vmem>>, vector<64x128xf32>
    %1 = arith.truncf %0 : vector<64x128xf32> to vector<64x128xbf16>
    %c0_1 = arith.constant 0 : index
    %c0_2 = arith.constant 0 : index
    %2 = vector.load %arg1[%c0_1, %c0_2] : memref<64x64xbf16, #tpu.memory_space<vmem>>, vector<64x64xbf16>
    %cst = arith.constant dense<0.000000e+00> : vector<64x128xf32>
    %3 = tpu.matmul %2, %1, %cst {dimension_numbers = #tpu.dot_dimension_numbers<[1], [0], [0], [1], [0, 0, 1, 1], [], []>} : vector<64x64xbf16>, vector<64x128xbf16>, vector<64x128xf32> -> vector<64x128xf32>
    %c0_3 = arith.constant 0 : index
    %c0_4 = arith.constant 0 : index
    %4 = vector.load %arg2[%c0_3, %c0_4] : memref<64x64xbf16, #tpu.memory_space<vmem>>, vector<64x64xbf16>
    %5 = arith.truncf %3 : vector<64x128xf32> to vector<64x128xbf16>
    %cst_5 = arith.constant dense<0.000000e+00> : vector<64x128xf32>
    %6 = tpu.matmul %4, %5, %cst_5 {dimension_numbers = #tpu.dot_dimension_numbers<[1], [0], [0], [1], [0, 0, 1, 1], [], []>} : vector<64x64xbf16>, vector<64x128xbf16>, vector<64x128xf32> -> vector<64x128xf32>
    %7 = math.tanh %6 : vector<64x128xf32>
    %c0_6 = arith.constant 0 : index
    %c0_7 = arith.constant 0 : index
    %8 = vector.load %arg3[%c0_6, %c0_7] : memref<64x64xbf16, #tpu.memory_space<vmem>>, vector<64x64xbf16>
    %9 = arith.truncf %7 : vector<64x128xf32> to vector<64x128xbf16>
    %cst_8 = arith.constant dense<0.000000e+00> : vector<64x128xf32>
    %10 = tpu.matmul %8, %9, %cst_8 {dimension_numbers = #tpu.dot_dimension_numbers<[1], [0], [0], [1], [0, 0, 1, 1], [], []>} : vector<64x64xbf16>, vector<64x128xbf16>, vector<64x128xf32> -> vector<64x128xf32>
    %c0_9 = arith.constant 0 : index
    %c0_10 = arith.constant 0 : index
    %11 = vector.load %arg4[%c0_9, %c0_10] : memref<64x128xf32, #tpu.memory_space<vmem>>, vector<64x128xf32>
    %12 = arith.addf %10, %11 : vector<64x128xf32>
    %c0_11 = arith.constant 0 : index
    %c0_12 = arith.constant 0 : index
    %13 = vector.load %arg5[%c0_11, %c0_12] : memref<64x128xf32, #tpu.memory_space<vmem>>, vector<64x128xf32>
    tpu.vector_store %arg5[%c0_11, %c0_12], %12 {strides = array<i32>} : memref<64x128xf32, #tpu.memory_space<vmem>>, vector<64x128xf32>,
    return
  }
}

</mosaic_0001>

<llo_original>
// kernel: custom-call.11
$region0: #{custom-call.11}
  %s0 = inlined_call_operand.vmem [shape: f32[64,64], index: 0, kind: input, shape index: {}]
  %s1 = inlined_call_operand.vmem [shape: f32[64,64], index: 1, kind: output, shape index: {0}]
  %s2 = inlined_call_operand.hbm [shape: s32[64], index: 2, kind: output, shape index: {1}]
  %s3 = inlined_call_operand.vmem [shape: s32[64], index: 3, kind: output, shape index: {2}]
  %4 = xla_tuple %s1, %s2, %s3
  $region1: #{custom-call.11} parent=0
    #allocation0 [shape = 'u8[32768]{0}', space=vmem, size = 0x8000, scoped, tag = 'operand span for operand 0']
    #allocation1 [shape = 'u8[32768]{0}', space=vmem, size = 0x8000, scoped, tag = 'operand span for operand 1']
    #allocation2 [shape = 'u8[4096]{0}', space=vmem, size = 0x1000, scoped, tag = 'operand span for operand 2']
    #allocation3 [shape = 'u8[512]{0}', space=vmem, size = 0x400, scoped, tag = 'packed  for operand 2']
    #allocation4 [shape = 's32[1]{0}', space=sflag, size = 0x4, scoped, tag = 'scoped memory for custom-call.11']
    #allocation5 [shape = 'u8[4096]{0}', space=vmem, size = 0x1000, scoped, tag = 'operand span for operand 3']
    #allocation6 [shape = 'u8[512]{0}', space=vmem, size = 0x400, scoped, tag = 'packed  for operand 3']
    #allocation7 [shape = 's32[64,128]{1,0}', space=vmem, size = 0x8000, scoped, tag = 'scratch for permutations']
    %5 = vsyncpa [#allocation4], 0
    %p7 = scmp.gt.s32.totalorder 64, 0
    // Predicated region
    $region2: #{custom-call.11} parent=1 // pred_check
      %p8 = pneg %p7
    $region3: #{custom-call.11} parent=1 // pred_check_branch
      %10 = sbr.rel (%p8) target = $region5
    $region4: #{custom-call.11} parent=1 // pred_region
      %s11 = sshra.s32 64, 3
      %p12 = scmp.gt.s32.totalorder %s11, 0
      // Predicated region
      $region6: #{custom-call.11} parent=4 // pred_check
        %p13 = pneg %p12
      $region7: #{custom-call.11} parent=4 // pred_check_branch
        %15 = sbr.rel (%p13) target = $region9
      $region8: #{custom-call.11} parent=4 // pred_region
        %s16 = ssub.s32 %s11, 1
        %s17 = smul.u32 %s16, 128
        %s18 = sshra.s32 %s17, 4
        %s19 = scalar_lea.vmem %s0, %s18
        %v20 = vld [vmem:[%s0] sm:$0xff]
        // While loop
        $region10: #{custom-call.11} parent=8 // loop_pre_header
          _
        $region11: #{custom-call.11} parent=8 // loop_header
          %s21 = sphi %s0, %s43
          %s22 = sphi [#allocation0], %s44
          %v23 = vphi %v20, %v45
          %s24 = ssub.s32 %s19, 64
          %p25 = scmp.gt.s32.totalorder %s21, %s24
        $region12: #{custom-call.11} parent=8 // loop_header_branch
          %27 = sbr.rel (%p25) target = $region16
        $region13: #{custom-call.11} parent=8 // loop_body
          %28 = vst [vmem:[%s22] sm:$0xff] %v23
          %v29 = vld [vmem:[%s21 + $0x8] sm:$0xff]
          %30 = vst [vmem:[%s22 + $0x8] sm:$0xff] %v29
          %v31 = vld [vmem:[%s21 + $0x10] sm:$0xff]
          %32 = vst [vmem:[%s22 + $0x10] sm:$0xff] %v31
          %v33 = vld [vmem:[%s21 + $0x18] sm:$0xff]
          %34 = vst [vmem:[%s22 + $0x18] sm:$0xff] %v33
          %v35 = vld [vmem:[%s21 + $0x20] sm:$0xff]
          %36 = vst [vmem:[%s22 + $0x20] sm:$0xff] %v35
          %v37 = vld [vmem:[%s21 + $0x28] sm:$0xff]
          %38 = vst [vmem:[%s22 + $0x28] sm:$0xff] %v37
          %v39 = vld [vmem:[%s21 + $0x30] sm:$0xff]
          %40 = vst [vmem:[%s22 + $0x30] sm:$0xff] %v39
          %v41 = vld [vmem:[%s21 + $0x38] sm:$0xff]
          %42 = vst [vmem:[%s22 + $0x38] sm:$0xff] %v41
        $region14: #{custom-call.11} parent=8 // loop_footer
          %s43 = scalar_lea.vmem %s21, 64
          %s44 = scalar_lea.vmem %s22, 64
          %v45 = vld [vmem:[%s21 + $0x40] sm:$0xff]
        $region15: #{custom-call.11} parent=8 // loop_footer_branch
          %46 = sbr.rel target = $region11
        $region16: #{custom-call.11} parent=8 // loop_exit
          _
        // While loop
        $region17: #{custom-call.11} parent=8 // loop_pre_header
          _
        $region18: #{custom-call.11} parent=8 // loop_header
          %s47 = sphi %s21, %s55
          %s48 = sphi %s22, %s56
          %v49 = vphi %v23, %v49
          %p50 = scmp.gt.s32.totalorder %s47, %s19
        $region19: #{custom-call.11} parent=8 // loop_header_branch
          %52 = sbr.rel (%p50) target = $region23
        $region20: #{custom-call.11} parent=8 // loop_body
          %v53 = vld [vmem:[%s47] sm:$0xff]
          %54 = vst [vmem:[%s48] sm:$0xff] %v53
        $region21: #{custom-call.11} parent=8 // loop_footer
          %s55 = scalar_lea.vmem %s47, 8
          %s56 = scalar_lea.vmem %s48, 8
        $region22: #{custom-call.11} parent=8 // loop_footer_branch
          %57 = sbr.rel target = $region18
        $region23: #{custom-call.11} parent=8 // loop_exit
          _
      $region9: #{custom-call.11} parent=4 // pred_fallthru
        _
      %s58 = sand.u32 64, 7
      %s59 = sshllo.u32 0, %s58
      %s60 = smul.u32 %s11, 128
      %s61 = sshra.s32 %s60, 4
      %s62 = scalar_lea.vmem [#allocation0], %s61
      %s63 = smul.u32 %s11, 128
      %s64 = sshra.s32 %s63, 4
      %s65 = scalar_lea.vmem %s0, %s64
      %v66 = vld [vmem:[%s65] sm:%s59]
      %67 = vst [vmem:[%s62] sm:%s59] %v66
    $region5: #{custom-call.11} parent=1 // pred_fallthru
      _
    %v68 = vld [vmem:[#allocation0] sm:$0xff]
    %69 = vst [vmem:[#allocation1] sm:$0xff] %v68
    %s70 = scalar_lea.vmem [#allocation1], 8
    %s71 = scalar_lea.vmem [#allocation0], 8
    %v72 = vld [vmem:[%s71] sm:$0xff]
    %73 = vst [vmem:[%s70] sm:$0xff] %v72
    %s74 = scalar_lea.vmem [#allocation1], 16
    %s75 = scalar_lea.vmem [#allocation0], 16
    %v76 = vld [vmem:[%s75] sm:$0xff]
    %77 = vst [vmem:[%s74] sm:$0xff] %v76
    %s78 = scalar_lea.vmem [#allocation1], 24
    %s79 = scalar_lea.vmem [#allocation0], 24
    %v80 = vld [vmem:[%s79] sm:$0xff]
    %81 = vst [vmem:[%s78] sm:$0xff] %v80
    %s82 = scalar_lea.vmem [#allocation1], 32
    %s83 = scalar_lea.vmem [#allocation0], 32
    %v84 = vld [vmem:[%s83] sm:$0xff]
    %85 = vst [vmem:[%s82] sm:$0xff] %v84
    %s86 = scalar_lea.vmem [#allocation1], 40
    %s87 = scalar_lea.vmem [#allocation0], 40
    %v88 = vld [vmem:[%s87] sm:$0xff]
    %89 = vst [vmem:[%s86] sm:$0xff] %v88
    %s90 = scalar_lea.vmem [#allocation1], 48
    %s91 = scalar_lea.vmem [#allocation0], 48
    %v92 = vld [vmem:[%s91] sm:$0xff]
    %93 = vst [vmem:[%s90] sm:$0xff] %v92
    %s94 = scalar_lea.vmem [#allocation1], 56
    %s95 = scalar_lea.vmem [#allocation0], 56
    %v96 = vld [vmem:[%s95] sm:$0xff]
    %97 = vst [vmem:[%s94] sm:$0xff] %v96
    %98 = vst [vmem:[#allocation2] sm:$0x1] 0
    %v99 = vlaneseq
    %v100 = vshrl.u32 %v99, 7
    %v101 = vmov %v100
    loop: start=0, step=1, limit=8
    $region24: #{custom-call.11} parent=1 // loop_pre_header
      _
    $region25: #{custom-call.11} parent=1 // loop_header
      %s103 = sphi 0, %s107
      %p104 = scmp.ge.s32.totalorder %s103, 8
    $region26: #{custom-call.11} parent=1 // loop_header_branch
      %106 = sbr.rel (%p104) target = $region30
    $region27: #{custom-call.11} parent=1 // loop_body
      %s108 = smul.addr %s103, 8
      %s109 = scalar_lea.vmem [#allocation7], %s108
      %s110 = smul.u32 %s103, 8
      %v111 = vstv %s110
      %v112 = vadd.s32 %v101, %v111
      %113 = vst [vmem:[%s109] sm:$0xff] %v112
    $region28: #{custom-call.11} parent=1 // loop_footer
      %s107 = sadd.s32 1, %s103
    $region29: #{custom-call.11} parent=1 // loop_footer_branch
      %102 = sbr.rel target = $region25
    $region30: #{custom-call.11} parent=1 // loop_exit
      _
    loop: start=0, step=1, limit=64
    $region31: #{custom-call.11} parent=1 // loop_pre_header
      _
    $region32: #{custom-call.11} parent=1 // loop_header
      %s115 = sphi 0, %s119
      %p116 = scmp.ge.s32.totalorder %s115, 64
    $region33: #{custom-call.11} parent=1 // loop_header_branch
      %118 = sbr.rel (%p116) target = $region37
    $region34: #{custom-call.11} parent=1 // loop_body
      %v120 = vstv %s115
      %v121 = vlaneseq
      %v122 = vshrl.u32 %v121, 7
      %v123 = vmov %v122
      %v124 = vld [vmem:[#allocation1] sm:$0xff]
      %v125 = vand.u32 2147483647, %v124
      %v127 = vstv %s115
      %vm128 = vcmp.ge.s32.totalorder %v123, %v127
      %vm129 = vcmp.lt.s32.totalorder %v123, 64
      %vm130 = vmand %vm128, %vm129
      %vm131 = vcmp.lt.f32.partialorder -inf, %v125
      %vm132 = vmand %vm130, %vm131
      %v133 = vsel %vm132, %v123, %v120
      %v134 = vsel %vm132, %v125, -inf
      %s135 = scalar_lea.vmem [#allocation1], 8
      %v136 = vld [vmem:[%s135] sm:$0xff]
      %v137 = vand.u32 2147483647, %v136
      %v138 = vadd.s32 %v123, 8
      %v139 = vstv %s115
      %vm140 = vcmp.ge.s32.totalorder %v138, %v139
      %vm141 = vcmp.lt.s32.totalorder %v138, 64
      %vm142 = vmand %vm140, %vm141
      %vm143 = vcmp.lt.f32.partialorder %v134, %v137
      %vm144 = vmand %vm142, %vm143
      %v145 = vsel %vm144, %v138, %v133
      %v146 = vsel %vm144, %v137, %v134
      %s147 = scalar_lea.vmem [#allocation1], 16
      %v148 = vld [vmem:[%s147] sm:$0xff]
      %v149 = vand.u32 2147483647, %v148
      %v150 = vadd.s32 %v123, 16
      %v151 = vstv %s115
      %vm152 = vcmp.ge.s32.totalorder %v150, %v151
      %vm153 = vcmp.lt.s32.totalorder %v150, 64
      %vm154 = vmand %vm152, %vm153
      %vm155 = vcmp.lt.f32.partialorder %v146, %v149
      %vm156 = vmand %vm154, %vm155
      %v157 = vsel %vm156, %v150, %v145
      %v158 = vsel %vm156, %v149, %v146
      %s159 = scalar_lea.vmem [#allocation1], 24
      %v160 = vld [vmem:[%s159] sm:$0xff]
      %v161 = vand.u32 2147483647, %v160
      %v162 = vadd.s32 %v123, 24
      %v163 = vstv %s115
      %vm164 = vcmp.ge.s32.totalorder %v162, %v163
      %vm165 = vcmp.lt.s32.totalorder %v162, 64
      %vm166 = vmand %vm164, %vm165
      %vm167 = vcmp.lt.f32.partialorder %v158, %v161
      %vm168 = vmand %vm166, %vm167
      %v169 = vsel %vm168, %v162, %v157
      %v170 = vsel %vm168, %v161, %v158
      %s171 = scalar_lea.vmem [#allocation1], 32
      %v172 = vld [vmem:[%s171] sm:$0xff]
      %v173 = vand.u32 2147483647, %v172
      %v174 = vadd.s32 %v123, 32
      %v175 = vstv %s115
      %vm176 = vcmp.ge.s32.totalorder %v174, %v175
      %vm177 = vcmp.lt.s32.totalorder %v174, 64
      %vm178 = vmand %vm176, %vm177
      %vm179 = vcmp.lt.f32.partialorder %v170, %v173
      %vm180 = vmand %vm178, %vm179
      %v181 = vsel %vm180, %v174, %v169
      %v182 = vsel %vm180, %v173, %v170
      %s183 = scalar_lea.vmem [#allocation1], 40
      %v184 = vld [vmem:[%s183] sm:$0xff]
      %v185 = vand.u32 2147483647, %v184
      %v186 = vadd.s32 %v123, 40
      %v187 = vstv %s115
      %vm188 = vcmp.ge.s32.totalorder %v186, %v187
      %vm189 = vcmp.lt.s32.totalorder %v186, 64
      %vm190 = vmand %vm188, %vm189
      %vm191 = vcmp.lt.f32.partialorder %v182, %v185
      %vm192 = vmand %vm190, %vm191
      %v193 = vsel %vm192, %v186, %v181
      %v194 = vsel %vm192, %v185, %v182
      %s195 = scalar_lea.vmem [#allocation1], 48
      %v196 = vld [vmem:[%s195] sm:$0xff]
      %v197 = vand.u32 2147483647, %v196
      %v198 = vadd.s32 %v123, 48
      %v199 = vstv %s115
      %vm200 = vcmp.ge.s32.totalorder %v198, %v199
      %vm201 = vcmp.lt.s32.totalorder %v198, 64
      %vm202 = vmand %vm200, %vm201
      %vm203 = vcmp.lt.f32.partialorder %v194, %v197
      %vm204 = vmand %vm202, %vm203
      %v205 = vsel %vm204, %v198, %v193
      %v206 = vsel %vm204, %v197, %v194
      %s207 = scalar_lea.vmem [#allocation1], 56
      %v208 = vld [vmem:[%s207] sm:$0xff]
      %v209 = vand.u32 2147483647, %v208
      %v210 = vadd.s32 %v123, 56
      %v211 = vstv %s115
      %vm212 = vcmp.ge.s32.totalorder %v210, %v211
      %vm213 = vcmp.lt.s32.totalorder %v210, 64
      %vm214 = vmand %vm212, %vm213
      %vm215 = vcmp.lt.f32.partialorder %v206, %v209
      %vm216 = vmand %vm214, %vm215
      %v217 = vsel %vm216, %v210, %v205
      %v218 = vsel %vm216, %v209, %v206
      %v219 = vrot.slane %v218, 1
      %v220 = vrot.slane %v217, 1
      %vm221 = vcmp.ge.f32.partialorder %v219, %v218
      %v222 = vsel %vm221, %v219, %v218
      %v223 = vsel %vm221, %v220, %v217
      %v224 = vrot.slane %v219, 1
      %v225 = vrot.slane %v220, 1
      %vm226 = vcmp.ge.f32.partialorder %v224, %v222
      %v227 = vsel %vm226, %v224, %v222
      %v228 = vsel %vm226, %v225, %v223
      %v229 = vrot.slane %v224, 1
      %v230 = vrot.slane %v225, 1
      %vm231 = vcmp.ge.f32.partialorder %v229, %v227
      %v232 = vsel %vm231, %v229, %v227
      %v233 = vsel %vm231, %v230, %v228
      %v234 = vrot.slane %v229, 1
      %v235 = vrot.slane %v230, 1
      %vm236 = vcmp.ge.f32.partialorder %v234, %v232
      %v237 = vsel %vm236, %v234, %v232
      %v238 = vsel %vm236, %v235, %v233
      %v239 = vrot.slane %v234, 1
      %v240 = vrot.slane %v235, 1
      %vm241 = vcmp.ge.f32.partialorder %v239, %v237
      %v242 = vsel %vm241, %v239, %v237
      %v243 = vsel %vm241, %v240, %v238
      %v244 = vrot.slane %v239, 1
      %v245 = vrot.slane %v240, 1
      %vm246 = vcmp.ge.f32.partialorder %v244, %v242
      %v247 = vsel %vm246, %v244, %v242
      %v248 = vsel %vm246, %v245, %v243
      %v249 = vrot.slane %v244, 1
      %v250 = vrot.slane %v245, 1
      %vm251 = vcmp.ge.f32.partialorder %v249, %v247
      %v252 = vsel %vm251, %v249, %v247
      %v253 = vsel %vm251, %v250, %v248
      %s254 = ssub.s32 128, %s115
      %255 = vrot.lane.b32.xlu0 %v253, %s254
      %v256 = vpop.permute.xlu0 %255
      %s257 = vtos %v256
      %v258 = vstv %s115
      %v259 = vlaneseq
      %v260 = vand.u32 %v259, 127
      %vm261 = vcmp.eq.s32.totalorder %v260, %v258
      %v262 = vstv %s257
      %v263 = vld [vmem:[#allocation2] ss:$0 sm:$0xff]
      %v264 = vsel %vm261, %v262, %v263
      %265 = vst [vmem:[#allocation2] sm:$0x1] %v264
      %s266 = scalar_lea.vmem [#allocation1], %s115
      %s267 = scalar_lea.vmem [#allocation1], %s257
      %v268 = vld [vmem:[%s266] ss:$0 sm:$0xff]
      %v269 = vld [vmem:[%s267] ss:$0 sm:$0xff]
      %270 = vst [vmem:[%s267] sm:$0x1] %v268
      %271 = vst [vmem:[%s266] sm:$0x1] %v269
      %s272 = scalar_lea.vmem [#allocation7], %s115
      %s273 = scalar_lea.vmem [#allocation7], %s257
      %v274 = vld [vmem:[%s272] ss:$0 sm:$0xff]
      %v275 = vld [vmem:[%s273] ss:$0 sm:$0xff]
      %276 = vst [vmem:[%s273] sm:$0x1] %v274
      %277 = vst [vmem:[%s272] sm:$0x1] %v275
      %vm278 = vcmp.ne.f32.partialorder %v269, 0.0
      %vm279 = vmand %vm261, %vm278
      %v280 = vsel %vm279, %v269, 1.0
      %v281 = vlaneseq
      %v282 = vand.u32 %v281, 127
      %v283 = vstv %s115
      %vm284 = vcmp.gt.s32.totalorder %v282, %v283
      %v285 = vsel %vm284, %v269, 0.0
      %v286 = vlaneseq
      %v287 = vshrl.u32 %v286, 7
      %v288 = vmov %v287
      %v289 = vld [vmem:[#allocation1] sm:$0xff]
      %v291 = vstv %s115
      %vm292 = vcmp.gt.s32.totalorder %v288, %v291
      %v293 = vsel %vm292, %v280, 1.0
      %v294 = vrcp.pop %v293
      %v295 = vmul.f32 %v289, %v294
      %vm296 = vmand %vm292, %vm261
      %v297 = vsel %vm296, %v295, 0.0
      %298 = vadd.xlane.f32.xlu0 %v297
      %v299 = vpop.xlane.xlu0 %298
      %v300 = vmul.f32 %v299, %v285
      %v301 = vsub.f32 %v295, %v300
      %302 = vst [vmem:[#allocation1] sm:$0xff] %v301
      %s303 = scalar_lea.vmem [#allocation1], 8
      %v304 = vld [vmem:[%s303] sm:$0xff]
      %v305 = vadd.s32 %v288, 8
      %v306 = vstv %s115
      %vm307 = vcmp.gt.s32.totalorder %v305, %v306
      %v308 = vsel %vm307, %v280, 1.0
      %v309 = vrcp.pop %v308
      %v310 = vmul.f32 %v304, %v309
      %vm311 = vmand %vm307, %vm261
      %v312 = vsel %vm311, %v310, 0.0
      %313 = vadd.xlane.f32.xlu0 %v312
      %v314 = vpop.xlane.xlu0 %313
      %v315 = vmul.f32 %v314, %v285
      %v316 = vsub.f32 %v310, %v315
      %317 = vst [vmem:[%s303] sm:$0xff] %v316
      %s318 = scalar_lea.vmem [#allocation1], 16
      %v319 = vld [vmem:[%s318] sm:$0xff]
      %v320 = vadd.s32 %v288, 16
      %v321 = vstv %s115
      %vm322 = vcmp.gt.s32.totalorder %v320, %v321
      %v323 = vsel %vm322, %v280, 1.0
      %v324 = vrcp.pop %v323
      %v325 = vmul.f32 %v319, %v324
      %vm326 = vmand %vm322, %vm261
      %v327 = vsel %vm326, %v325, 0.0
      %328 = vadd.xlane.f32.xlu0 %v327
      %v329 = vpop.xlane.xlu0 %328
      %v330 = vmul.f32 %v329, %v285
      %v331 = vsub.f32 %v325, %v330
      %332 = vst [vmem:[%s318] sm:$0xff] %v331
      %s333 = scalar_lea.vmem [#allocation1], 24
      %v334 = vld [vmem:[%s333] sm:$0xff]
      %v335 = vadd.s32 %v288, 24
      %v336 = vstv %s115
      %vm337 = vcmp.gt.s32.totalorder %v335, %v336
      %v338 = vsel %vm337, %v280, 1.0
      %v339 = vrcp.pop %v338
      %v340 = vmul.f32 %v334, %v339
      %vm341 = vmand %vm337, %vm261
      %v342 = vsel %vm341, %v340, 0.0
      %343 = vadd.xlane.f32.xlu0 %v342
      %v344 = vpop.xlane.xlu0 %343
      %v345 = vmul.f32 %v344, %v285
      %v346 = vsub.f32 %v340, %v345
      %347 = vst [vmem:[%s333] sm:$0xff] %v346
      %s348 = scalar_lea.vmem [#allocation1], 32
      %v349 = vld [vmem:[%s348] sm:$0xff]
      %v350 = vadd.s32 %v288, 32
      %v351 = vstv %s115
      %vm352 = vcmp.gt.s32.totalorder %v350, %v351
      %v353 = vsel %vm352, %v280, 1.0
      %v354 = vrcp.pop %v353
      %v355 = vmul.f32 %v349, %v354
      %vm356 = vmand %vm352, %vm261
      %v357 = vsel %vm356, %v355, 0.0
      %358 = vadd.xlane.f32.xlu0 %v357
      %v359 = vpop.xlane.xlu0 %358
      %v360 = vmul.f32 %v359, %v285
      %v361 = vsub.f32 %v355, %v360
      %362 = vst [vmem:[%s348] sm:$0xff] %v361
      %s363 = scalar_lea.vmem [#allocation1], 40
      %v364 = vld [vmem:[%s363] sm:$0xff]
      %v365 = vadd.s32 %v288, 40
      %v366 = vstv %s115
      %vm367 = vcmp.gt.s32.totalorder %v365, %v366
      %v368 = vsel %vm367, %v280, 1.0
      %v369 = vrcp.pop %v368
      %v370 = vmul.f32 %v364, %v369
      %vm371 = vmand %vm367, %vm261
      %v372 = vsel %vm371, %v370, 0.0
      %373 = vadd.xlane.f32.xlu0 %v372
      %v374 = vpop.xlane.xlu0 %373
      %v375 = vmul.f32 %v374, %v285
      %v376 = vsub.f32 %v370, %v375
      %377 = vst [vmem:[%s363] sm:$0xff] %v376
      %s378 = scalar_lea.vmem [#allocation1], 48
      %v379 = vld [vmem:[%s378] sm:$0xff]
      %v380 = vadd.s32 %v288, 48
      %v381 = vstv %s115
      %vm382 = vcmp.gt.s32.totalorder %v380, %v381
      %v383 = vsel %vm382, %v280, 1.0
      %v384 = vrcp.pop %v383
      %v385 = vmul.f32 %v379, %v384
      %vm386 = vmand %vm382, %vm261
      %v387 = vsel %vm386, %v385, 0.0
      %388 = vadd.xlane.f32.xlu0 %v387
      %v389 = vpop.xlane.xlu0 %388
      %v390 = vmul.f32 %v389, %v285
      %v391 = vsub.f32 %v385, %v390
      %392 = vst [vmem:[%s378] sm:$0xff] %v391
      %s393 = scalar_lea.vmem [#allocation1], 56
      %v394 = vld [vmem:[%s393] sm:$0xff]
      %v395 = vadd.s32 %v288, 56
      %v396 = vstv %s115
      %vm397 = vcmp.gt.s32.totalorder %v395, %v396
      %v398 = vsel %vm397, %v280, 1.0
      %v399 = vrcp.pop %v398
      %v400 = vmul.f32 %v394, %v399
      %vm401 = vmand %vm397, %vm261
      %v402 = vsel %vm401, %v400, 0.0
      %403 = vadd.xlane.f32.xlu0 %v402
      %v404 = vpop.xlane.xlu0 %403
      %v405 = vmul.f32 %v404, %v285
      %v406 = vsub.f32 %v400, %v405
      %407 = vst [vmem:[%s393] sm:$0xff] %v406
    $region35: #{custom-call.11} parent=1 // loop_footer
      %s119 = sadd.s32 1, %s115
    $region36: #{custom-call.11} parent=1 // loop_footer_branch
      %114 = sbr.rel target = $region32
    $region37: #{custom-call.11} parent=1 // loop_exit
      _
    %v408 = vld [vmem:[#allocation7] sm:$0xff]
    %s409 = scalar_lea.vmem [#allocation7], 8
    %v410 = vld [vmem:[%s409] sm:$0xff]
    %s411 = scalar_lea.vmem [#allocation7], 16
    %v412 = vld [vmem:[%s411] sm:$0xff]
    %s413 = scalar_lea.vmem [#allocation7], 24
    %v414 = vld [vmem:[%s413] sm:$0xff]
    %s415 = scalar_lea.vmem [#allocation7], 32
    %v416 = vld [vmem:[%s415] sm:$0xff]
    %s417 = scalar_lea.vmem [#allocation7], 40
    %v418 = vld [vmem:[%s417] sm:$0xff]
    %s419 = scalar_lea.vmem [#allocation7], 48
    %v420 = vld [vmem:[%s419] sm:$0xff]
    %s421 = scalar_lea.vmem [#allocation7], 56
    %v422 = vld [vmem:[%s421] sm:$0xff]
    %s423 = scalar_lea.vmem [#allocation7], 64
    %s424 = scalar_lea.vmem [#allocation7], 72
    %s425 = scalar_lea.vmem [#allocation7], 80
    %s426 = scalar_lea.vmem [#allocation7], 88
    %s427 = scalar_lea.vmem [#allocation7], 96
    %s428 = scalar_lea.vmem [#allocation7], 104
    %s429 = scalar_lea.vmem [#allocation7], 112
    %s430 = scalar_lea.vmem [#allocation7], 120
    %431 = vxpose.xlu0.b32.start [1/16] %v408, 128
    %432 = vxpose.xlu0.b32.cont [2/16] %v410, 128
    %433 = vxpose.xlu0.b32.cont [3/16] %v412, 128
    %434 = vxpose.xlu0.b32.cont [4/16] %v414, 128
    %435 = vxpose.xlu0.b32.cont [5/16] %v416, 128
    %436 = vxpose.xlu0.b32.cont [6/16] %v418, 128
    %437 = vxpose.xlu0.b32.cont [7/16] %v420, 128
    %438 = vxpose.xlu0.b32.cont [8/16] %v422, 128
    %439 = vxpose.xlu0.b32.cont [9/16] 0, 128
    %440 = vxpose.xlu0.b32.cont [10/16] 0, 128
    %441 = vxpose.xlu0.b32.cont [11/16] 0, 128
    %442 = vxpose.xlu0.b32.cont [12/16] 0, 128
    %443 = vxpose.xlu0.b32.cont [13/16] 0, 128
    %444 = vxpose.xlu0.b32.cont [14/16] 0, 128
    %445 = vxpose.xlu0.b32.cont [15/16] 0, 128
    %446 = vxpose.xlu0.b32.end [16/16] 0, 128
    %v447 = vpop.trf.xlu0
    %v448 = vpop.trf.xlu0
    %v449 = vpop.trf.xlu0
    %v450 = vpop.trf.xlu0
    %v451 = vpop.trf.xlu0
    %v452 = vpop.trf.xlu0
    %v453 = vpop.trf.xlu0
    %v454 = vpop.trf.xlu0
    %v455 = vpop.trf.xlu0
    %v456 = vpop.trf.xlu0
    %v457 = vpop.trf.xlu0
    %v458 = vpop.trf.xlu0
    %v459 = vpop.trf.xlu0
    %v460 = vpop.trf.xlu0
    %v461 = vpop.trf.xlu0
    %v462 = vpop.trf.xlu0
    %463 = vst [vmem:[#allocation5] sm:$0x1] %v447
    %s465 = sshllo.u32 0, 1
    %v467 = vld [vmem:[#allocation2] sm:%s465]
    %s468 = sshllo.u32 0, 1
    %469 = vst [vmem:[#allocation3] sm:%s468] %v467
    %s471 = sshllo.u32 0, 1
    %v473 = vld [vmem:[#allocation5] sm:%s471]
    %s474 = sshllo.u32 0, 1
    %475 = vst [vmem:[#allocation6] sm:%s474] %v473
    %p477 = scmp.gt.s32.totalorder 64, 0
    // Predicated region
    $region38: #{custom-call.11} parent=1 // pred_check
      %p478 = pneg %p477
    $region39: #{custom-call.11} parent=1 // pred_check_branch
      %480 = sbr.rel (%p478) target = $region41
    $region40: #{custom-call.11} parent=1 // pred_region
      %s481 = sshra.s32 64, 3
      %p482 = scmp.gt.s32.totalorder %s481, 0
      // Predicated region
      $region42: #{custom-call.11} parent=40 // pred_check
        %p483 = pneg %p482
      $region43: #{custom-call.11} parent=40 // pred_check_branch
        %485 = sbr.rel (%p483) target = $region45
      $region44: #{custom-call.11} parent=40 // pred_region
        %s486 = ssub.s32 %s481, 1
        %s487 = smul.u32 %s486, 128
        %s488 = sshra.s32 %s487, 4
        %s489 = scalar_lea.vmem [#allocation1], %s488
        %v490 = vld [vmem:[#allocation1] sm:$0xff]
        // While loop
        $region46: #{custom-call.11} parent=44 // loop_pre_header
          _
        $region47: #{custom-call.11} parent=44 // loop_header
          %s491 = sphi [#allocation1], %s513
          %s492 = sphi %s1, %s514
          %v493 = vphi %v490, %v515
          %s494 = ssub.s32 %s489, 64
          %p495 = scmp.gt.s32.totalorder %s491, %s494
        $region48: #{custom-call.11} parent=44 // loop_header_branch
          %497 = sbr.rel (%p495) target = $region52
        $region49: #{custom-call.11} parent=44 // loop_body
          %498 = vst [vmem:[%s492] sm:$0xff] %v493
          %v499 = vld [vmem:[%s491 + $0x8] sm:$0xff]
          %500 = vst [vmem:[%s492 + $0x8] sm:$0xff] %v499
          %v501 = vld [vmem:[%s491 + $0x10] sm:$0xff]
          %502 = vst [vmem:[%s492 + $0x10] sm:$0xff] %v501
          %v503 = vld [vmem:[%s491 + $0x18] sm:$0xff]
          %504 = vst [vmem:[%s492 + $0x18] sm:$0xff] %v503
          %v505 = vld [vmem:[%s491 + $0x20] sm:$0xff]
          %506 = vst [vmem:[%s492 + $0x20] sm:$0xff] %v505
          %v507 = vld [vmem:[%s491 + $0x28] sm:$0xff]
          %508 = vst [vmem:[%s492 + $0x28] sm:$0xff] %v507
          %v509 = vld [vmem:[%s491 + $0x30] sm:$0xff]
          %510 = vst [vmem:[%s492 + $0x30] sm:$0xff] %v509
          %v511 = vld [vmem:[%s491 + $0x38] sm:$0xff]
          %512 = vst [vmem:[%s492 + $0x38] sm:$0xff] %v511
        $region50: #{custom-call.11} parent=44 // loop_footer
          %s513 = scalar_lea.vmem %s491, 64
          %s514 = scalar_lea.vmem %s492, 64
          %v515 = vld [vmem:[%s491 + $0x40] sm:$0xff]
        $region51: #{custom-call.11} parent=44 // loop_footer_branch
          %516 = sbr.rel target = $region47
        $region52: #{custom-call.11} parent=44 // loop_exit
          _
        // While loop
        $region53: #{custom-call.11} parent=44 // loop_pre_header
          _
        $region54: #{custom-call.11} parent=44 // loop_header
          %s517 = sphi %s491, %s525
          %s518 = sphi %s492, %s526
          %v519 = vphi %v493, %v519
          %p520 = scmp.gt.s32.totalorder %s517, %s489
        $region55: #{custom-call.11} parent=44 // loop_header_branch
          %522 = sbr.rel (%p520) target = $region59
        $region56: #{custom-call.11} parent=44 // loop_body
          %v523 = vld [vmem:[%s517] sm:$0xff]
          %524 = vst [vmem:[%s518] sm:$0xff] %v523
        $region57: #{custom-call.11} parent=44 // loop_footer
          %s525 = scalar_lea.vmem %s517, 8
          %s526 = scalar_lea.vmem %s518, 8
        $region58: #{custom-call.11} parent=44 // loop_footer_branch
          %527 = sbr.rel target = $region54
        $region59: #{custom-call.11} parent=44 // loop_exit
          _
      $region45: #{custom-call.11} parent=40 // pred_fallthru
        _
      %s528 = sand.u32 64, 7
      %s529 = sshllo.u32 0, %s528
      %s530 = smul.u32 %s481, 128
      %s531 = sshra.s32 %s530, 4
      %s532 = scalar_lea.vmem %s1, %s531
      %s533 = smul.u32 %s481, 128
      %s534 = sshra.s32 %s533, 4
      %s535 = scalar_lea.vmem [#allocation1], %s534
      %v536 = vld [vmem:[%s535] sm:%s529]
      %537 = vst [vmem:[%s532] sm:%s529] %v536
    $region41: #{custom-call.11} parent=1 // pred_fallthru
      _
    // Predicated region
    $region60: #{custom-call.11} parent=1 // pred_check
      _
    $region61: #{custom-call.11} parent=1 // pred_check_branch
      %539 = sbr.rel (0) target = $region63
    $region62: #{custom-call.11} parent=1 // pred_region
      %s541 = ssub.s32 16, 16
      %542 = vsyncadd [#allocation4], %s541
      %s543 = sshll.u32 [#allocation3], 4
      %s544 = int_to_ptr.vmem [resolvable:$true] %s543
      %546 = dma.vmem_to_hbm [thread:$0]  %s544, 16, %s2, [#allocation4]
    $region63: #{custom-call.11} parent=1 // pred_fallthru
      _
    // Predicated region
    $region64: #{custom-call.11} parent=1 // pred_check
      _
    $region65: #{custom-call.11} parent=1 // pred_check_branch
      %548 = sbr.rel (0) target = $region67
    $region66: #{custom-call.11} parent=1 // pred_region
      %p550 = scmp.gt.s32.totalorder 1, 0
      // Predicated region
      $region68: #{custom-call.11} parent=66 // pred_check
        %p551 = pneg %p550
      $region69: #{custom-call.11} parent=66 // pred_check_branch
        %553 = sbr.rel (%p551) target = $region71
      $region70: #{custom-call.11} parent=66 // pred_region
        %s554 = sshra.s32 1, 3
        %p555 = scmp.gt.s32.totalorder %s554, 0
        // Predicated region
        $region72: #{custom-call.11} parent=70 // pred_check
          %p556 = pneg %p555
        $region73: #{custom-call.11} parent=70 // pred_check_branch
          %558 = sbr.rel (%p556) target = $region75
        $region74: #{custom-call.11} parent=70 // pred_region
          %s559 = ssub.s32 %s554, 1
          %s560 = smul.u32 %s559, 128
          %s561 = sshra.s32 %s560, 4
          %s562 = scalar_lea.vmem [#allocation6], %s561
          %v563 = vld [vmem:[#allocation6] sm:$0xff]
          // While loop
          $region76: #{custom-call.11} parent=74 // loop_pre_header
            _
          $region77: #{custom-call.11} parent=74 // loop_header
            %s564 = sphi [#allocation6], %s586
            %s565 = sphi %s3, %s587
            %v566 = vphi %v563, %v588
            %s567 = ssub.s32 %s562, 64
            %p568 = scmp.gt.s32.totalorder %s564, %s567
          $region78: #{custom-call.11} parent=74 // loop_header_branch
            %570 = sbr.rel (%p568) target = $region82
          $region79: #{custom-call.11} parent=74 // loop_body
            %571 = vst [vmem:[%s565] sm:$0xff] %v566
            %v572 = vld [vmem:[%s564 + $0x8] sm:$0xff]
            %573 = vst [vmem:[%s565 + $0x8] sm:$0xff] %v572
            %v574 = vld [vmem:[%s564 + $0x10] sm:$0xff]
            %575 = vst [vmem:[%s565 + $0x10] sm:$0xff] %v574
            %v576 = vld [vmem:[%s564 + $0x18] sm:$0xff]
            %577 = vst [vmem:[%s565 + $0x18] sm:$0xff] %v576
            %v578 = vld [vmem:[%s564 + $0x20] sm:$0xff]
            %579 = vst [vmem:[%s565 + $0x20] sm:$0xff] %v578
            %v580 = vld [vmem:[%s564 + $0x28] sm:$0xff]
            %581 = vst [vmem:[%s565 + $0x28] sm:$0xff] %v580
            %v582 = vld [vmem:[%s564 + $0x30] sm:$0xff]
            %583 = vst [vmem:[%s565 + $0x30] sm:$0xff] %v582
            %v584 = vld [vmem:[%s564 + $0x38] sm:$0xff]
            %585 = vst [vmem:[%s565 + $0x38] sm:$0xff] %v584
          $region80: #{custom-call.11} parent=74 // loop_footer
            %s586 = scalar_lea.vmem %s564, 64
            %s587 = scalar_lea.vmem %s565, 64
            %v588 = vld [vmem:[%s564 + $0x40] sm:$0xff]
          $region81: #{custom-call.11} parent=74 // loop_footer_branch
            %589 = sbr.rel target = $region77
          $region82: #{custom-call.11} parent=74 // loop_exit
            _
          // While loop
          $region83: #{custom-call.11} parent=74 // loop_pre_header
            _
          $region84: #{custom-call.11} parent=74 // loop_header
            %s590 = sphi %s564, %s598
            %s591 = sphi %s565, %s599
            %v592 = vphi %v566, %v592
            %p593 = scmp.gt.s32.totalorder %s590, %s562
          $region85: #{custom-call.11} parent=74 // loop_header_branch
            %595 = sbr.rel (%p593) target = $region89
          $region86: #{custom-call.11} parent=74 // loop_body
            %v596 = vld [vmem:[%s590] sm:$0xff]
            %597 = vst [vmem:[%s591] sm:$0xff] %v596
          $region87: #{custom-call.11} parent=74 // loop_footer
            %s598 = scalar_lea.vmem %s590, 8
            %s599 = scalar_lea.vmem %s591, 8
          $region88: #{custom-call.11} parent=74 // loop_footer_branch
            %600 = sbr.rel target = $region84
          $region89: #{custom-call.11} parent=74 // loop_exit
            _
        $region75: #{custom-call.11} parent=70 // pred_fallthru
          _
        %s601 = sand.u32 1, 7
        %s602 = sshllo.u32 0, %s601
        %s603 = smul.u32 %s554, 128
        %s604 = sshra.s32 %s603, 4
        %s605 = scalar_lea.vmem %s3, %s604
        %s606 = smul.u32 %s554, 128
        %s607 = sshra.s32 %s606, 4
        %s608 = scalar_lea.vmem [#allocation6], %s607
        %v609 = vld [vmem:[%s608] sm:%s602]
        %610 = vst [vmem:[%s605] sm:%s602] %v609
      $region71: #{custom-call.11} parent=66 // pred_fallthru
        _
    $region67: #{custom-call.11} parent=1 // pred_fallthru
      _
    // Predicated region
    $region90: #{custom-call.11} parent=1 // pred_check
      _
    $region91: #{custom-call.11} parent=1 // pred_check_branch
      %612 = sbr.rel (0) target = $region93
    $region92: #{custom-call.11} parent=1 // pred_region
      %613 = dma.done [#allocation4], 16
    $region93: #{custom-call.11} parent=1 // pred_fallthru
      _
    // Predicated region
    $region94: #{custom-call.11} parent=1 // pred_check
      _
    $region95: #{custom-call.11} parent=1 // pred_check_branch
      %615 = sbr.rel (0) target = $region97
    $region96: #{custom-call.11} parent=1 // pred_region
      _
    $region97: #{custom-call.11} parent=1 // pred_fallthru
      _
    %616 = vsyncpa [#allocation4], 1

// kernel: custom-call.13
$region0: #{custom-call.13}
  %s0 = inlined_call_operand.vmem [shape: f32[1,64,64], index: 0, kind: input, shape index: {}]
  %s1 = inlined_call_operand.vmem [shape: f32[1,64,64], index: 1, kind: output, shape index: {}]
  $region1: #{custom-call.13} parent=0
    #allocation0 [shape = 'u8[32768]{0}', space=vmem, size = 0x8000, scoped, tag = 'operand span for operand 0']
    #allocation1 [shape = 'u8[32768]{0}', space=vmem, size = 0x8000, scoped, tag = 'operand span for operand 1']
    #allocation2 [shape = 'f32[64,64]{1,0}', space=vmem, size = 0x8000, scoped, tag = 'rescaled input a']
    // Predicated region
    $region2: #{custom-call.13} parent=1 // pred_check
      _
    $region3: #{custom-call.13} parent=1 // pred_check_branch
      %3 = sbr.rel (0) target = $region5
    $region4: #{custom-call.13} parent=1 // pred_region
      // Predicated region
      $region6: #{custom-call.13} parent=4 // pred_check
        _
      $region7: #{custom-call.13} parent=4 // pred_check_branch
        %5 = sbr.rel (0) target = $region9
      $region8: #{custom-call.13} parent=4 // pred_region
        // Predicated region
        $region21: #{custom-call.13} parent=8 // pred_check
          _
        $region22: #{custom-call.13} parent=8 // pred_check_branch
          %34 = sbr.rel (0) target = $region24
        $region23: #{custom-call.13} parent=8 // pred_region
          loop: start=0, step=1, limit=1
          $region25: #{custom-call.13} parent=23 // loop_pre_header
            _
          $region26: #{custom-call.13} parent=23 // loop_header
            %s36 = sphi 0, %s40
            %p37 = scmp.ge.s32.totalorder %s36, 1
            %s41 = sphi %s0, %s0
            %s42 = sphi [#allocation0], [#allocation0]
          $region27: #{custom-call.13} parent=23 // loop_header_branch
            %39 = sbr.rel (%p37) target = $region31
          $region28: #{custom-call.13} parent=23 // loop_body
            %v43 = vld [vmem:[%s41] sm:$0xff]
            %44 = vst [vmem:[%s42] sm:$0xff] %v43
            %v45 = vld [vmem:[%s41 + $0x8] sm:$0xff]
            %46 = vst [vmem:[%s42 + $0x8] sm:$0xff] %v45
            %v47 = vld [vmem:[%s41 + $0x10] sm:$0xff]
            %48 = vst [vmem:[%s42 + $0x10] sm:$0xff] %v47
            %v49 = vld [vmem:[%s41 + $0x18] sm:$0xff]
            %50 = vst [vmem:[%s42 + $0x18] sm:$0xff] %v49
            %v51 = vld [vmem:[%s41 + $0x20] sm:$0xff]
            %52 = vst [vmem:[%s42 + $0x20] sm:$0xff] %v51
            %v53 = vld [vmem:[%s41 + $0x28] sm:$0xff]
            %54 = vst [vmem:[%s42 + $0x28] sm:$0xff] %v53
            %v55 = vld [vmem:[%s41 + $0x30] sm:$0xff]
            %56 = vst [vmem:[%s42 + $0x30] sm:$0xff] %v55
            %v57 = vld [vmem:[%s41 + $0x38] sm:$0xff]
            %58 = vst [vmem:[%s42 + $0x38] sm:$0xff] %v57
          $region29: #{custom-call.13} parent=23 // loop_footer
            %s40 = sadd.s32 1, %s36
          $region30: #{custom-call.13} parent=23 // loop_footer_branch
            %35 = sbr.rel target = $region26
          $region31: #{custom-call.13} parent=23 // loop_exit
            _
        $region24: #{custom-call.13} parent=8 // pred_fallthru
          _
        // Predicated region
        $region32: #{custom-call.13} parent=8 // pred_check
          _
        $region33: #{custom-call.13} parent=8 // pred_check_branch
          %60 = sbr.rel target = $region35
        $region34: #{custom-call.13} parent=8 // pred_region
          _
        $region35: #{custom-call.13} parent=8 // pred_fallthru
          _
      $region9: #{custom-call.13} parent=4 // pred_fallthru
        _
      // Predicated region
      $region10: #{custom-call.13} parent=4 // pred_check
        _
      $region11: #{custom-call.13} parent=4 // pred_check_branch
        %7 = sbr.rel target = $region13
      $region12: #{custom-call.13} parent=4 // pred_region
        loop: start=0, step=1, limit=1
        $region14: #{custom-call.13} parent=12 // loop_pre_header
          _
        $region15: #{custom-call.13} parent=12 // loop_header
          %s10 = sphi 0, %s14
          %p11 = scmp.ge.s32.totalorder %s10, 1
          %s15 = sphi %s0, %s0
          %s16 = sphi [#allocation0], [#allocation0]
        $region16: #{custom-call.13} parent=12 // loop_header_branch
          %13 = sbr.rel (%p11) target = $region20
        $region17: #{custom-call.13} parent=12 // loop_body
          %v17 = vld [vmem:[%s15] sm:$0xff]
          %18 = vst [vmem:[%s16] sm:$0xff] %v17
          %v19 = vld [vmem:[%s15 + $0x8] sm:$0xff]
          %20 = vst [vmem:[%s16 + $0x8] sm:$0xff] %v19
          %v21 = vld [vmem:[%s15 + $0x10] sm:$0xff]
          %22 = vst [vmem:[%s16 + $0x10] sm:$0xff] %v21
          %v23 = vld [vmem:[%s15 + $0x18] sm:$0xff]
          %24 = vst [vmem:[%s16 + $0x18] sm:$0xff] %v23
          %v25 = vld [vmem:[%s15 + $0x20] sm:$0xff]
          %26 = vst [vmem:[%s16 + $0x20] sm:$0xff] %v25
          %v27 = vld [vmem:[%s15 + $0x28] sm:$0xff]
          %28 = vst [vmem:[%s16 + $0x28] sm:$0xff] %v27
          %v29 = vld [vmem:[%s15 + $0x30] sm:$0xff]
          %30 = vst [vmem:[%s16 + $0x30] sm:$0xff] %v29
          %v31 = vld [vmem:[%s15 + $0x38] sm:$0xff]
          %32 = vst [vmem:[%s16 + $0x38] sm:$0xff] %v31
        $region18: #{custom-call.13} parent=12 // loop_footer
          %s14 = sadd.s32 1, %s10
        $region19: #{custom-call.13} parent=12 // loop_footer_branch
          %9 = sbr.rel target = $region15
        $region20: #{custom-call.13} parent=12 // loop_exit
          _
      $region13: #{custom-call.13} parent=4 // pred_fallthru
        _
    $region5: #{custom-call.13} parent=1 // pred_fallthru
      _
    %61 = vnop
    %v62 = vlaneseq
    %v63 = vand.u32 %v62, 127
    %vm64 = vcmp.lt.s32.totalorder %v63, 64
    %v65 = vlaneseq
    %v66 = vshrl.u32 %v65, 7
    %vm68 = vcmp.eq.s32.totalorder %v66, %v63
    %v69 = vld [vmem:[#allocation0] sm:$0xff]
    %v70 = vsel %vm68, %v69, 0.0
    %71 = vadd.xlane.f32.xlu0 %v70
    %v72 = vpop.xlane.xlu0 %71
    %vm73 = vcmp.ge.s32.totalorder %v66, %v63
    %vm74 = vmand %vm73, %vm64
    %v75 = vsel %vm74, %v69, 0.0
    %v76 = vrcp.pop %v72
    %v77 = vmul.f32 %v75, %v76
    %78 = vst [vmem:[#allocation2] sm:$0xff] %v77
    %s79 = scalar_lea.vmem [#allocation0], 8
    %s80 = scalar_lea.vmem [#allocation2], 8
    %v81 = vlaneseq
    %v82 = vshrl.u32 %v81, 7
    %v83 = vadd.s32 %v82, 8
    %vm84 = vcmp.eq.s32.totalorder %v83, %v63
    %v85 = vld [vmem:[%s79] sm:$0xff]
    %v86 = vsel %vm84, %v85, 0.0
    %87 = vadd.xlane.f32.xlu0 %v86
    %v88 = vpop.xlane.xlu0 %87
    %vm89 = vcmp.ge.s32.totalorder %v83, %v63
    %vm90 = vmand %vm89, %vm64
    %v91 = vsel %vm90, %v85, 0.0
    %v92 = vrcp.pop %v88
    %v93 = vmul.f32 %v91, %v92
    %94 = vst [vmem:[%s80] sm:$0xff] %v93
    %s95 = scalar_lea.vmem [#allocation0], 16
    %s96 = scalar_lea.vmem [#allocation2], 16
    %v97 = vlaneseq
    %v98 = vshrl.u32 %v97, 7
    %v99 = vadd.s32 %v98, 16
    %vm100 = vcmp.eq.s32.totalorder %v99, %v63
    %v101 = vld [vmem:[%s95] sm:$0xff]
    %v102 = vsel %vm100, %v101, 0.0
    %103 = vadd.xlane.f32.xlu0 %v102
    %v104 = vpop.xlane.xlu0 %103
    %vm105 = vcmp.ge.s32.totalorder %v99, %v63
    %vm106 = vmand %vm105, %vm64
    %v107 = vsel %vm106, %v101, 0.0
    %v108 = vrcp.pop %v104
    %v109 = vmul.f32 %v107, %v108
    %110 = vst [vmem:[%s96] sm:$0xff] %v109
    %s111 = scalar_lea.vmem [#allocation0], 24
    %s112 = scalar_lea.vmem [#allocation2], 24
    %v113 = vlaneseq
    %v114 = vshrl.u32 %v113, 7
    %v115 = vadd.s32 %v114, 24
    %vm116 = vcmp.eq.s32.totalorder %v115, %v63
    %v117 = vld [vmem:[%s111] sm:$0xff]
    %v118 = vsel %vm116, %v117, 0.0
    %119 = vadd.xlane.f32.xlu0 %v118
    %v120 = vpop.xlane.xlu0 %119
    %vm121 = vcmp.ge.s32.totalorder %v115, %v63
    %vm122 = vmand %vm121, %vm64
    %v123 = vsel %vm122, %v117, 0.0
    %v124 = vrcp.pop %v120
    %v125 = vmul.f32 %v123, %v124
    %126 = vst [vmem:[%s112] sm:$0xff] %v125
    %s127 = scalar_lea.vmem [#allocation0], 32
    %s128 = scalar_lea.vmem [#allocation2], 32
    %v129 = vlaneseq
    %v130 = vshrl.u32 %v129, 7
    %v131 = vadd.s32 %v130, 32
    %vm132 = vcmp.eq.s32.totalorder %v131, %v63
    %v133 = vld [vmem:[%s127] sm:$0xff]
    %v134 = vsel %vm132, %v133, 0.0
    %135 = vadd.xlane.f32.xlu0 %v134
    %v136 = vpop.xlane.xlu0 %135
    %vm137 = vcmp.ge.s32.totalorder %v131, %v63
    %vm138 = vmand %vm137, %vm64
    %v139 = vsel %vm138, %v133, 0.0
    %v140 = vrcp.pop %v136
    %v141 = vmul.f32 %v139, %v140
    %142 = vst [vmem:[%s128] sm:$0xff] %v141
    %s143 = scalar_lea.vmem [#allocation0], 40
    %s144 = scalar_lea.vmem [#allocation2], 40
    %v145 = vlaneseq
    %v146 = vshrl.u32 %v145, 7
    %v147 = vadd.s32 %v146, 40
    %vm148 = vcmp.eq.s32.totalorder %v147, %v63
    %v149 = vld [vmem:[%s143] sm:$0xff]
    %v150 = vsel %vm148, %v149, 0.0
    %151 = vadd.xlane.f32.xlu0 %v150
    %v152 = vpop.xlane.xlu0 %151
    %vm153 = vcmp.ge.s32.totalorder %v147, %v63
    %vm154 = vmand %vm153, %vm64
    %v155 = vsel %vm154, %v149, 0.0
    %v156 = vrcp.pop %v152
    %v157 = vmul.f32 %v155, %v156
    %158 = vst [vmem:[%s144] sm:$0xff] %v157
    %s159 = scalar_lea.vmem [#allocation0], 48
    %s160 = scalar_lea.vmem [#allocation2], 48
    %v161 = vlaneseq
    %v162 = vshrl.u32 %v161, 7
    %v163 = vadd.s32 %v162, 48
    %vm164 = vcmp.eq.s32.totalorder %v163, %v63
    %v165 = vld [vmem:[%s159] sm:$0xff]
    %v166 = vsel %vm164, %v165, 0.0
    %167 = vadd.xlane.f32.xlu0 %v166
    %v168 = vpop.xlane.xlu0 %167
    %vm169 = vcmp.ge.s32.totalorder %v163, %v63
    %vm170 = vmand %vm169, %vm64
    %v171 = vsel %vm170, %v165, 0.0
    %v172 = vrcp.pop %v168
    %v173 = vmul.f32 %v171, %v172
    %174 = vst [vmem:[%s160] sm:$0xff] %v173
    %s175 = scalar_lea.vmem [#allocation0], 56
    %s176 = scalar_lea.vmem [#allocation2], 56
    %v177 = vlaneseq
    %v178 = vshrl.u32 %v177, 7
    %v179 = vadd.s32 %v178, 56
    %vm180 = vcmp.eq.s32.totalorder %v179, %v63
    %v181 = vld [vmem:[%s175] sm:$0xff]
    %v182 = vsel %vm180, %v181, 0.0
    %183 = vadd.xlane.f32.xlu0 %v182
    %v184 = vpop.xlane.xlu0 %183
    %vm185 = vcmp.ge.s32.totalorder %v179, %v63
    %vm186 = vmand %vm185, %vm64
    %v187 = vsel %vm186, %v181, 0.0
    %v188 = vrcp.pop %v184
    %v189 = vmul.f32 %v187, %v188
    %190 = vst [vmem:[%s176] sm:$0xff] %v189
    %v191 = vlaneseq
    %v192 = vand.u32 %v191, 127
    %v193 = vlaneseq
    %v194 = vshrl.u32 %v193, 7
    %vm196 = vcmp.eq.s32.totalorder %v192, %v194
    %v197 = vlaneseq
    %v198 = vand.u32 %v197, 127
    %vm199 = vcmp.eq.s32.totalorder %v198, 0
    %v200 = vsel %vm199, 1.0, -1.0
    %v201 = vsel %vm196, %v200, 0.0
    %v202 = vlaneseq
    %v203 = vand.u32 %v202, 127
    %v204 = vlaneseq
    %v205 = vshrl.u32 %v204, 7
    %v206 = vadd.s32 %v205, 8
    %vm207 = vcmp.eq.s32.totalorder %v203, %v206
    %v208 = vsel %vm207, -1.0, 0.0
    %v209 = vlaneseq
    %v210 = vand.u32 %v209, 127
    %v211 = vlaneseq
    %v212 = vshrl.u32 %v211, 7
    %v213 = vadd.s32 %v212, 16
    %vm214 = vcmp.eq.s32.totalorder %v210, %v213
    %v215 = vsel %vm214, -1.0, 0.0
    %v216 = vlaneseq
    %v217 = vand.u32 %v216, 127
    %v218 = vlaneseq
    %v219 = vshrl.u32 %v218, 7
    %v220 = vadd.s32 %v219, 24
    %vm221 = vcmp.eq.s32.totalorder %v217, %v220
    %v222 = vsel %vm221, -1.0, 0.0
    %v223 = vlaneseq
    %v224 = vand.u32 %v223, 127
    %v225 = vlaneseq
    %v226 = vshrl.u32 %v225, 7
    %v227 = vadd.s32 %v226, 32
    %vm228 = vcmp.eq.s32.totalorder %v224, %v227
    %v229 = vsel %vm228, -1.0, 0.0
    %v230 = vlaneseq
    %v231 = vand.u32 %v230, 127
    %v232 = vlaneseq
    %v233 = vshrl.u32 %v232, 7
    %v234 = vadd.s32 %v233, 40
    %vm235 = vcmp.eq.s32.totalorder %v231, %v234
    %v236 = vsel %vm235, -1.0, 0.0
    %v237 = vlaneseq
    %v238 = vand.u32 %v237, 127
    %v239 = vlaneseq
    %v240 = vshrl.u32 %v239, 7
    %v241 = vadd.s32 %v240, 48
    %vm242 = vcmp.eq.s32.totalorder %v238, %v241
    %v243 = vsel %vm242, -1.0, 0.0
    %v244 = vlaneseq
    %v245 = vand.u32 %v244, 127
    %v246 = vlaneseq
    %v247 = vshrl.u32 %v246, 7
    %v248 = vadd.s32 %v247, 56
    %vm249 = vcmp.eq.s32.totalorder %v245, %v248
    %v250 = vsel %vm249, -1.0, 0.0
    %s251 = scalar_lea.vmem [#allocation2], 1
    %v252 = vld [vmem:[%s251] ss:$0 sm:$0xff]
    %v253 = vxor.u32 %v252, 2147483648
    %v254 = vlaneseq
    %v255 = vand.u32 %v254, 127
    %vm256 = vcmp.eq.s32.totalorder %v255, 1
    %v257 = vmul.f32 %v253, %v201
    %258 = vadd.xlane.f32.xlu0 %v257
    %v259 = vpop.xlane.xlu0 %258
    %v260 = vsel %vm256, %v259, %v201
    %s261 = scalar_lea.vmem [#allocation2], 2
    %v262 = vld [vmem:[%s261] ss:$0 sm:$0xff]
    %v263 = vxor.u32 %v262, 2147483648
    %v264 = vlaneseq
    %v265 = vand.u32 %v264, 127
    %vm266 = vcmp.eq.s32.totalorder %v265, 2
    %v267 = vmul.f32 %v263, %v260
    %268 = vadd.xlane.f32.xlu0 %v267
    %v269 = vpop.xlane.xlu0 %268
    %v270 = vsel %vm266, %v269, %v260
    %s271 = scalar_lea.vmem [#allocation2], 3
    %v272 = vld [vmem:[%s271] ss:$0 sm:$0xff]
    %v273 = vxor.u32 %v272, 2147483648
    %v274 = vlaneseq
    %v275 = vand.u32 %v274, 127
    %vm276 = vcmp.eq.s32.totalorder %v275, 3
    %v277 = vmul.f32 %v273, %v270
    %278 = vadd.xlane.f32.xlu0 %v277
    %v279 = vpop.xlane.xlu0 %278
    %v280 = vsel %vm276, %v279, %v270
    %s281 = scalar_lea.vmem [#allocation2], 4
    %v282 = vld [vmem:[%s281] ss:$0 sm:$0xff]
    %v283 = vxor.u32 %v282, 2147483648
    %v284 = vlaneseq
    %v285 = vand.u32 %v284, 127
    %vm286 = vcmp.eq.s32.totalorder %v285, 4
    %v287 = vmul.f32 %v283, %v280
    %288 = vadd.xlane.f32.xlu0 %v287
    %v289 = vpop.xlane.xlu0 %288
    %v290 = vsel %vm286, %v289, %v280
    %s291 = scalar_lea.vmem [#allocation2], 5
    %v292 = vld [vmem:[%s291] ss:$0 sm:$0xff]
    %v293 = vxor.u32 %v292, 2147483648
    %v294 = vlaneseq
    %v295 = vand.u32 %v294, 127
    %vm296 = vcmp.eq.s32.totalorder %v295, 5
    %v297 = vmul.f32 %v293, %v290
    %298 = vadd.xlane.f32.xlu0 %v297
    %v299 = vpop.xlane.xlu0 %298
    %v300 = vsel %vm296, %v299, %v290
    %s301 = scalar_lea.vmem [#allocation2], 6
    %v302 = vld [vmem:[%s301] ss:$0 sm:$0xff]
    %v303 = vxor.u32 %v302, 2147483648
    %v304 = vlaneseq
    %v305 = vand.u32 %v304, 127
    %vm306 = vcmp.eq.s32.totalorder %v305, 6
    %v307 = vmul.f32 %v303, %v300
    %308 = vadd.xlane.f32.xlu0 %v307
    %v309 = vpop.xlane.xlu0 %308
    %v310 = vsel %vm306, %v309, %v300
    %s311 = scalar_lea.vmem [#allocation2], 7
    %v312 = vld [vmem:[%s311] ss:$0 sm:$0xff]
    %v313 = vxor.u32 %v312, 2147483648
    %v314 = vlaneseq
    %v315 = vand.u32 %v314, 127
    %vm316 = vcmp.eq.s32.totalorder %v315, 7
    %v317 = vmul.f32 %v313, %v310
    %318 = vadd.xlane.f32.xlu0 %v317
    %v319 = vpop.xlane.xlu0 %318
    %v320 = vsel %vm316, %v319, %v310
    %s321 = scalar_lea.vmem [#allocation2], 8
    %v322 = vld [vmem:[%s321] ss:$0 sm:$0xff]
    %v323 = vxor.u32 %v322, 2147483648
    %v324 = vlaneseq
    %v325 = vand.u32 %v324, 127
    %vm326 = vcmp.eq.s32.totalorder %v325, 8
    %v327 = vmul.f32 %v323, %v320
    %328 = vadd.xlane.f32.xlu0 %v327
    %v329 = vpop.xlane.xlu0 %328
    %v330 = vsel %vm326, %v329, %v320
    %v331 = vmul.f32 %v323, %v208
    %332 = vadd.xlane.f32.xlu0 %v331
    %v333 = vpop.xlane.xlu0 %332
    %v334 = vsel %vm326, %v333, %v208
    %s335 = scalar_lea.vmem [#allocation2], 9
    %v336 = vld [vmem:[%s335] ss:$0 sm:$0xff]
    %v337 = vxor.u32 %v336, 2147483648
    %v338 = vlaneseq
    %v339 = vand.u32 %v338, 127
    %vm340 = vcmp.eq.s32.totalorder %v339, 9
    %v341 = vmul.f32 %v337, %v330
    %342 = vadd.xlane.f32.xlu0 %v341
    %v343 = vpop.xlane.xlu0 %342
    %v344 = vsel %vm340, %v343, %v330
    %v345 = vmul.f32 %v337, %v334
    %346 = vadd.xlane.f32.xlu0 %v345
    %v347 = vpop.xlane.xlu0 %346
    %v348 = vsel %vm340, %v347, %v334
    %s349 = scalar_lea.vmem [#allocation2], 10
    %v350 = vld [vmem:[%s349] ss:$0 sm:$0xff]
    %v351 = vxor.u32 %v350, 2147483648
    %v352 = vlaneseq
    %v353 = vand.u32 %v352, 127
    %vm354 = vcmp.eq.s32.totalorder %v353, 10
    %v355 = vmul.f32 %v351, %v344
    %356 = vadd.xlane.f32.xlu0 %v355
    %v357 = vpop.xlane.xlu0 %356
    %v358 = vsel %vm354, %v357, %v344
    %v359 = vmul.f32 %v351, %v348
    %360 = vadd.xlane.f32.xlu0 %v359
    %v361 = vpop.xlane.xlu0 %360
    %v362 = vsel %vm354, %v361, %v348
    %s363 = scalar_lea.vmem [#allocation2], 11
    %v364 = vld [vmem:[%s363] ss:$0 sm:$0xff]
    %v365 = vxor.u32 %v364, 2147483648
    %v366 = vlaneseq
    %v367 = vand.u32 %v366, 127
    %vm368 = vcmp.eq.s32.totalorder %v367, 11
    %v369 = vmul.f32 %v365, %v358
    %370 = vadd.xlane.f32.xlu0 %v369
    %v371 = vpop.xlane.xlu0 %370
    %v372 = vsel %vm368, %v371, %v358
    %v373 = vmul.f32 %v365, %v362
    %374 = vadd.xlane.f32.xlu0 %v373
    %v375 = vpop.xlane.xlu0 %374
    %v376 = vsel %vm368, %v375, %v362
    %s377 = scalar_lea.vmem [#allocation2], 12
    %v378 = vld [vmem:[%s377] ss:$0 sm:$0xff]
    %v379 = vxor.u32 %v378, 2147483648
    %v380 = vlaneseq
    %v381 = vand.u32 %v380, 127
    %vm382 = vcmp.eq.s32.totalorder %v381, 12
    %v383 = vmul.f32 %v379, %v372
    %384 = vadd.xlane.f32.xlu0 %v383
    %v385 = vpop.xlane.xlu0 %384
    %v386 = vsel %vm382, %v385, %v372
    %v387 = vmul.f32 %v379, %v376
    %388 = vadd.xlane.f32.xlu0 %v387
    %v389 = vpop.xlane.xlu0 %388
    %v390 = vsel %vm382, %v389, %v376
    %s391 = scalar_lea.vmem [#allocation2], 13
    %v392 = vld [vmem:[%s391] ss:$0 sm:$0xff]
    %v393 = vxor.u32 %v392, 2147483648
    %v394 = vlaneseq
    %v395 = vand.u32 %v394, 127
    %vm396 = vcmp.eq.s32.totalorder %v395, 13
    %v397 = vmul.f32 %v393, %v386
    %398 = vadd.xlane.f32.xlu0 %v397
    %v399 = vpop.xlane.xlu0 %398
    %v400 = vsel %vm396, %v399, %v386
    %v401 = vmul.f32 %v393, %v390
    %402 = vadd.xlane.f32.xlu0 %v401
    %v403 = vpop.xlane.xlu0 %402
    %v404 = vsel %vm396, %v403, %v390
    %s405 = scalar_lea.vmem [#allocation2], 14
    %v406 = vld [vmem:[%s405] ss:$0 sm:$0xff]
    %v407 = vxor.u32 %v406, 2147483648
    %v408 = vlaneseq
    %v409 = vand.u32 %v408, 127
    %vm410 = vcmp.eq.s32.totalorder %v409, 14
    %v411 = vmul.f32 %v407, %v400
    %412 = vadd.xlane.f32.xlu0 %v411
    %v413 = vpop.xlane.xlu0 %412
    %v414 = vsel %vm410, %v413, %v400
    %v415 = vmul.f32 %v407, %v404
    %416 = vadd.xlane.f32.xlu0 %v415
    %v417 = vpop.xlane.xlu0 %416
    %v418 = vsel %vm410, %v417, %v404
    %s419 = scalar_lea.vmem [#allocation2], 15
    %v420 = vld [vmem:[%s419] ss:$0 sm:$0xff]
    %v421 = vxor.u32 %v420, 2147483648
    %v422 = vlaneseq
    %v423 = vand.u32 %v422, 127
    %vm424 = vcmp.eq.s32.totalorder %v423, 15
    %v425 = vmul.f32 %v421, %v414
    %426 = vadd.xlane.f32.xlu0 %v425
    %v427 = vpop.xlane.xlu0 %426
    %v428 = vsel %vm424, %v427, %v414
    %v429 = vmul.f32 %v421, %v418
    %430 = vadd.xlane.f32.xlu0 %v429
    %v431 = vpop.xlane.xlu0 %430
    %v432 = vsel %vm424, %v431, %v418
    %s433 = scalar_lea.vmem [#allocation2], 16
    %v434 = vld [vmem:[%s433] ss:$0 sm:$0xff]
    %v435 = vxor.u32 %v434, 2147483648
    %v436 = vlaneseq
    %v437 = vand.u32 %v436, 127
    %vm438 = vcmp.eq.s32.totalorder %v437, 16
    %v439 = vmul.f32 %v435, %v428
    %440 = vadd.xlane.f32.xlu0 %v439
    %v441 = vpop.xlane.xlu0 %440
    %v442 = vsel %vm438, %v441, %v428
    %v443 = vmul.f32 %v435, %v432
    %444 = vadd.xlane.f32.xlu0 %v443
    %v445 = vpop.xlane.xlu0 %444
    %v446 = vsel %vm438, %v445, %v432
    %v447 = vmul.f32 %v435, %v215
    %448 = vadd.xlane.f32.xlu0 %v447
    %v449 = vpop.xlane.xlu0 %448
    %v450 = vsel %vm438, %v449, %v215
    %s451 = scalar_lea.vmem [#allocation2], 17
    %v452 = vld [vmem:[%s451] ss:$0 sm:$0xff]
    %v453 = vxor.u32 %v452, 2147483648
    %v454 = vlaneseq
    %v455 = vand.u32 %v454, 127
    %vm456 = vcmp.eq.s32.totalorder %v455, 17
    %v457 = vmul.f32 %v453, %v442
    %458 = vadd.xlane.f32.xlu0 %v457
    %v459 = vpop.xlane.xlu0 %458
    %v460 = vsel %vm456, %v459, %v442
    %v461 = vmul.f32 %v453, %v446
    %462 = vadd.xlane.f32.xlu0 %v461
    %v463 = vpop.xlane.xlu0 %462
    %v464 = vsel %vm456, %v463, %v446
    %v465 = vmul.f32 %v453, %v450
    %466 = vadd.xlane.f32.xlu0 %v465
    %v467 = vpop.xlane.xlu0 %466
    %v468 = vsel %vm456, %v467, %v450
    %s469 = scalar_lea.vmem [#allocation2], 18
    %v470 = vld [vmem:[%s469] ss:$0 sm:$0xff]
    %v471 = vxor.u32 %v470, 2147483648
    %v472 = vlaneseq
    %v473 = vand.u32 %v472, 127
    %vm474 = vcmp.eq.s32.totalorder %v473, 18
    %v475 = vmul.f32 %v471, %v460
    %476 = vadd.xlane.f32.xlu0 %v475
    %v477 = vpop.xlane.xlu0 %476
    %v478 = vsel %vm474, %v477, %v460
    %v479 = vmul.f32 %v471, %v464
    %480 = vadd.xlane.f32.xlu0 %v479
    %v481 = vpop.xlane.xlu0 %480
    %v482 = vsel %vm474, %v481, %v464
    %v483 = vmul.f32 %v471, %v468
    %484 = vadd.xlane.f32.xlu0 %v483
    %v485 = vpop.xlane.xlu0 %484
    %v486 = vsel %vm474, %v485, %v468
    %s487 = scalar_lea.vmem [#allocation2], 19
    %v488 = vld [vmem:[%s487] ss:$0 sm:$0xff]
    %v489 = vxor.u32 %v488, 2147483648
    %v490 = vlaneseq
    %v491 = vand.u32 %v490, 127
    %vm492 = vcmp.eq.s32.totalorder %v491, 19
    %v493 = vmul.f32 %v489, %v478
    %494 = vadd.xlane.f32.xlu0 %v493
    %v495 = vpop.xlane.xlu0 %494
    %v496 = vsel %vm492, %v495, %v478
    %v497 = vmul.f32 %v489, %v482
    %498 = vadd.xlane.f32.xlu0 %v497
    %v499 = vpop.xlane.xlu0 %498
    %v500 = vsel %vm492, %v499, %v482
    %v501 = vmul.f32 %v489, %v486
    %502 = vadd.xlane.f32.xlu0 %v501
    %v503 = vpop.xlane.xlu0 %502
    %v504 = vsel %vm492, %v503, %v486
    %s505 = scalar_lea.vmem [#allocation2], 20
    %v506 = vld [vmem:[%s505] ss:$0 sm:$0xff]
    %v507 = vxor.u32 %v506, 2147483648
    %v508 = vlaneseq
    %v509 = vand.u32 %v508, 127
    %vm510 = vcmp.eq.s32.totalorder %v509, 20
    %v511 = vmul.f32 %v507, %v496
    %512 = vadd.xlane.f32.xlu0 %v511
    %v513 = vpop.xlane.xlu0 %512
    %v514 = vsel %vm510, %v513, %v496
    %v515 = vmul.f32 %v507, %v500
    %516 = vadd.xlane.f32.xlu0 %v515
    %v517 = vpop.xlane.xlu0 %516
    %v518 = vsel %vm510, %v517, %v500
    %v519 = vmul.f32 %v507, %v504
    %520 = vadd.xlane.f32.xlu0 %v519
    %v521 = vpop.xlane.xlu0 %520
    %v522 = vsel %vm510, %v521, %v504
    %s523 = scalar_lea.vmem [#allocation2], 21
    %v524 = vld [vmem:[%s523] ss:$0 sm:$0xff]
    %v525 = vxor.u32 %v524, 2147483648
    %v526 = vlaneseq
    %v527 = vand.u32 %v526, 127
    %vm528 = vcmp.eq.s32.totalorder %v527, 21
    %v529 = vmul.f32 %v525, %v514
    %530 = vadd.xlane.f32.xlu0 %v529
    %v531 = vpop.xlane.xlu0 %530
    %v532 = vsel %vm528, %v531, %v514
    %v533 = vmul.f32 %v525, %v518
    %534 = vadd.xlane.f32.xlu0 %v533
    %v535 = vpop.xlane.xlu0 %534
    %v536 = vsel %vm528, %v535, %v518
    %v537 = vmul.f32 %v525, %v522
    %538 = vadd.xlane.f32.xlu0 %v537
    %v539 = vpop.xlane.xlu0 %538
    %v540 = vsel %vm528, %v539, %v522
    %s541 = scalar_lea.vmem [#allocation2], 22
    %v542 = vld [vmem:[%s541] ss:$0 sm:$0xff]
    %v543 = vxor.u32 %v542, 2147483648
    %v544 = vlaneseq
    %v545 = vand.u32 %v544, 127
    %vm546 = vcmp.eq.s32.totalorder %v545, 22
    %v547 = vmul.f32 %v543, %v532
    %548 = vadd.xlane.f32.xlu0 %v547
    %v549 = vpop.xlane.xlu0 %548
    %v550 = vsel %vm546, %v549, %v532
    %v551 = vmul.f32 %v543, %v536
    %552 = vadd.xlane.f32.xlu0 %v551
    %v553 = vpop.xlane.xlu0 %552
    %v554 = vsel %vm546, %v553, %v536
    %v555 = vmul.f32 %v543, %v540
    %556 = vadd.xlane.f32.xlu0 %v555
    %v557 = vpop.xlane.xlu0 %556
    %v558 = vsel %vm546, %v557, %v540
    %s559 = scalar_lea.vmem [#allocation2], 23
    %v560 = vld [vmem:[%s559] ss:$0 sm:$0xff]
    %v561 = vxor.u32 %v560, 2147483648
    %v562 = vlaneseq
    %v563 = vand.u32 %v562, 127
    %vm564 = vcmp.eq.s32.totalorder %v563, 23
    %v565 = vmul.f32 %v561, %v550
    %566 = vadd.xlane.f32.xlu0 %v565
    %v567 = vpop.xlane.xlu0 %566
    %v568 = vsel %vm564, %v567, %v550
    %v569 = vmul.f32 %v561, %v554
    %570 = vadd.xlane.f32.xlu0 %v569
    %v571 = vpop.xlane.xlu0 %570
    %v572 = vsel %vm564, %v571, %v554
    %v573 = vmul.f32 %v561, %v558
    %574 = vadd.xlane.f32.xlu0 %v573
    %v575 = vpop.xlane.xlu0 %574
    %v576 = vsel %vm564, %v575, %v558
    %s577 = scalar_lea.vmem [#allocation2], 24
    %v578 = vld [vmem:[%s577] ss:$0 sm:$0xff]
    %v579 = vxor.u32 %v578, 2147483648
    %v580 = vlaneseq
    %v581 = vand.u32 %v580, 127
    %vm582 = vcmp.eq.s32.totalorder %v581, 24
    %v583 = vmul.f32 %v579, %v568
    %584 = vadd.xlane.f32.xlu0 %v583
    %v585 = vpop.xlane.xlu0 %584
    %v586 = vsel %vm582, %v585, %v568
    %v587 = vmul.f32 %v579, %v572
    %588 = vadd.xlane.f32.xlu0 %v587
    %v589 = vpop.xlane.xlu0 %588
    %v590 = vsel %vm582, %v589, %v572
    %v591 = vmul.f32 %v579, %v576
    %592 = vadd.xlane.f32.xlu0 %v591
    %v593 = vpop.xlane.xlu0 %592
    %v594 = vsel %vm582, %v593, %v576
    %v595 = vmul.f32 %v579, %v222
    %596 = vadd.xlane.f32.xlu0 %v595
    %v597 = vpop.xlane.xlu0 %596
    %v598 = vsel %vm582, %v597, %v222
    %s599 = scalar_lea.vmem [#allocation2], 25
    %v600 = vld [vmem:[%s599] ss:$0 sm:$0xff]
    %v601 = vxor.u32 %v600, 2147483648
    %v602 = vlaneseq
    %v603 = vand.u32 %v602, 127
    %vm604 = vcmp.eq.s32.totalorder %v603, 25
    %v605 = vmul.f32 %v601, %v586
    %606 = vadd.xlane.f32.xlu0 %v605
    %v607 = vpop.xlane.xlu0 %606
    %v608 = vsel %vm604, %v607, %v586
    %v609 = vmul.f32 %v601, %v590
    %610 = vadd.xlane.f32.xlu0 %v609
    %v611 = vpop.xlane.xlu0 %610
    %v612 = vsel %vm604, %v611, %v590
    %v613 = vmul.f32 %v601, %v594
    %614 = vadd.xlane.f32.xlu0 %v613
    %v615 = vpop.xlane.xlu0 %614
    %v616 = vsel %vm604, %v615, %v594
    %v617 = vmul.f32 %v601, %v598
    %618 = vadd.xlane.f32.xlu0 %v617
    %v619 = vpop.xlane.xlu0 %618
    %v620 = vsel %vm604, %v619, %v598
    %s621 = scalar_lea.vmem [#allocation2], 26
    %v622 = vld [vmem:[%s621] ss:$0 sm:$0xff]
    %v623 = vxor.u32 %v622, 2147483648
    %v624 = vlaneseq
    %v625 = vand.u32 %v624, 127
    %vm626 = vcmp.eq.s32.totalorder %v625, 26
    %v627 = vmul.f32 %v623, %v608
    %628 = vadd.xlane.f32.xlu0 %v627
    %v629 = vpop.xlane.xlu0 %628
    %v630 = vsel %vm626, %v629, %v608
    %v631 = vmul.f32 %v623, %v612
    %632 = vadd.xlane.f32.xlu0 %v631
    %v633 = vpop.xlane.xlu0 %632
    %v634 = vsel %vm626, %v633, %v612
    %v635 = vmul.f32 %v623, %v616
    %636 = vadd.xlane.f32.xlu0 %v635
    %v637 = vpop.xlane.xlu0 %636
    %v638 = vsel %vm626, %v637, %v616
    %v639 = vmul.f32 %v623, %v620
    %640 = vadd.xlane.f32.xlu0 %v639
    %v641 = vpop.xlane.xlu0 %640
    %v642 = vsel %vm626, %v641, %v620
    %s643 = scalar_lea.vmem [#allocation2], 27
    %v644 = vld [vmem:[%s643] ss:$0 sm:$0xff]
    %v645 = vxor.u32 %v644, 2147483648
    %v646 = vlaneseq
    %v647 = vand.u32 %v646, 127
    %vm648 = vcmp.eq.s32.totalorder %v647, 27
    %v649 = vmul.f32 %v645, %v630
    %650 = vadd.xlane.f32.xlu0 %v649
    %v651 = vpop.xlane.xlu0 %650
    %v652 = vsel %vm648, %v651, %v630
    %v653 = vmul.f32 %v645, %v634
    %654 = vadd.xlane.f32.xlu0 %v653
    %v655 = vpop.xlane.xlu0 %654
    %v656 = vsel %vm648, %v655, %v634
    %v657 = vmul.f32 %v645, %v638
    %658 = vadd.xlane.f32.xlu0 %v657
    %v659 = vpop.xlane.xlu0 %658
    %v660 = vsel %vm648, %v659, %v638
    %v661 = vmul.f32 %v645, %v642
    %662 = vadd.xlane.f32.xlu0 %v661
    %v663 = vpop.xlane.xlu0 %662
    %v664 = vsel %vm648, %v663, %v642
    %s665 = scalar_lea.vmem [#allocation2], 28
    %v666 = vld [vmem:[%s665] ss:$0 sm:$0xff]
    %v667 = vxor.u32 %v666, 2147483648
    %v668 = vlaneseq
    %v669 = vand.u32 %v668, 127
    %vm670 = vcmp.eq.s32.totalorder %v669, 28
    %v671 = vmul.f32 %v667, %v652
    %672 = vadd.xlane.f32.xlu0 %v671
    %v673 = vpop.xlane.xlu0 %672
    %v674 = vsel %vm670, %v673, %v652
    %v675 = vmul.f32 %v667, %v656
    %676 = vadd.xlane.f32.xlu0 %v675
    %v677 = vpop.xlane.xlu0 %676
    %v678 = vsel %vm670, %v677, %v656
    %v679 = vmul.f32 %v667, %v660
    %680 = vadd.xlane.f32.xlu0 %v679
    %v681 = vpop.xlane.xlu0 %680
    %v682 = vsel %vm670, %v681, %v660
    %v683 = vmul.f32 %v667, %v664
    %684 = vadd.xlane.f32.xlu0 %v683
    %v685 = vpop.xlane.xlu0 %684
    %v686 = vsel %vm670, %v685, %v664
    %s687 = scalar_lea.vmem [#allocation2], 29
    %v688 = vld [vmem:[%s687] ss:$0 sm:$0xff]
    %v689 = vxor.u32 %v688, 2147483648
    %v690 = vlaneseq
    %v691 = vand.u32 %v690, 127
    %vm692 = vcmp.eq.s32.totalorder %v691, 29
    %v693 = vmul.f32 %v689, %v674
    %694 = vadd.xlane.f32.xlu0 %v693
    %v695 = vpop.xlane.xlu0 %694
    %v696 = vsel %vm692, %v695, %v674
    %v697 = vmul.f32 %v689, %v678
    %698 = vadd.xlane.f32.xlu0 %v697
    %v699 = vpop.xlane.xlu0 %698
    %v700 = vsel %vm692, %v699, %v678
    %v701 = vmul.f32 %v689, %v682
    %702 = vadd.xlane.f32.xlu0 %v701
    %v703 = vpop.xlane.xlu0 %702
    %v704 = vsel %vm692, %v703, %v682
    %v705 = vmul.f32 %v689, %v686
    %706 = vadd.xlane.f32.xlu0 %v705
    %v707 = vpop.xlane.xlu0 %706
    %v708 = vsel %vm692, %v707, %v686
    %s709 = scalar_lea.vmem [#allocation2], 30
    %v710 = vld [vmem:[%s709] ss:$0 sm:$0xff]
    %v711 = vxor.u32 %v710, 2147483648
    %v712 = vlaneseq
    %v713 = vand.u32 %v712, 127
    %vm714 = vcmp.eq.s32.totalorder %v713, 30
    %v715 = vmul.f32 %v711, %v696
    %716 = vadd.xlane.f32.xlu0 %v715
    %v717 = vpop.xlane.xlu0 %716
    %v718 = vsel %vm714, %v717, %v696
    %v719 = vmul.f32 %v711, %v700
    %720 = vadd.xlane.f32.xlu0 %v719
    %v721 = vpop.xlane.xlu0 %720
    %v722 = vsel %vm714, %v721, %v700
    %v723 = vmul.f32 %v711, %v704
    %724 = vadd.xlane.f32.xlu0 %v723
    %v725 = vpop.xlane.xlu0 %724
    %v726 = vsel %vm714, %v725, %v704
    %v727 = vmul.f32 %v711, %v708
    %728 = vadd.xlane.f32.xlu0 %v727
    %v729 = vpop.xlane.xlu0 %728
    %v730 = vsel %vm714, %v729, %v708
    %s731 = scalar_lea.vmem [#allocation2], 31
    %v732 = vld [vmem:[%s731] ss:$0 sm:$0xff]
    %v733 = vxor.u32 %v732, 2147483648
    %v734 = vlaneseq
    %v735 = vand.u32 %v734, 127
    %vm736 = vcmp.eq.s32.totalorder %v735, 31
    %v737 = vmul.f32 %v733, %v718
    %738 = vadd.xlane.f32.xlu0 %v737
    %v739 = vpop.xlane.xlu0 %738
    %v740 = vsel %vm736, %v739, %v718
    %v741 = vmul.f32 %v733, %v722
    %742 = vadd.xlane.f32.xlu0 %v741
    %v743 = vpop.xlane.xlu0 %742
    %v744 = vsel %vm736, %v743, %v722
    %v745 = vmul.f32 %v733, %v726
    %746 = vadd.xlane.f32.xlu0 %v745
    %v747 = vpop.xlane.xlu0 %746
    %v748 = vsel %vm736, %v747, %v726
    %v749 = vmul.f32 %v733, %v730
    %750 = vadd.xlane.f32.xlu0 %v749
    %v751 = vpop.xlane.xlu0 %750
    %v752 = vsel %vm736, %v751, %v730
    %s753 = scalar_lea.vmem [#allocation2], 32
    %v754 = vld [vmem:[%s753] ss:$0 sm:$0xff]
    %v755 = vxor.u32 %v754, 2147483648
    %v756 = vlaneseq
    %v757 = vand.u32 %v756, 127
    %vm758 = vcmp.eq.s32.totalorder %v757, 32
    %v759 = vmul.f32 %v755, %v740
    %760 = vadd.xlane.f32.xlu0 %v759
    %v761 = vpop.xlane.xlu0 %760
    %v762 = vsel %vm758, %v761, %v740
    %v763 = vmul.f32 %v755, %v744
    %764 = vadd.xlane.f32.xlu0 %v763
    %v765 = vpop.xlane.xlu0 %764
    %v766 = vsel %vm758, %v765, %v744
    %v767 = vmul.f32 %v755, %v748
    %768 = vadd.xlane.f32.xlu0 %v767
    %v769 = vpop.xlane.xlu0 %768
    %v770 = vsel %vm758, %v769, %v748
    %v771 = vmul.f32 %v755, %v752
    %772 = vadd.xlane.f32.xlu0 %v771
    %v773 = vpop.xlane.xlu0 %772
    %v774 = vsel %vm758, %v773, %v752
    %v775 = vmul.f32 %v755, %v229
    %776 = vadd.xlane.f32.xlu0 %v775
    %v777 = vpop.xlane.xlu0 %776
    %v778 = vsel %vm758, %v777, %v229
    %s779 = scalar_lea.vmem [#allocation2], 33
    %v780 = vld [vmem:[%s779] ss:$0 sm:$0xff]
    %v781 = vxor.u32 %v780, 2147483648
    %v782 = vlaneseq
    %v783 = vand.u32 %v782, 127
    %vm784 = vcmp.eq.s32.totalorder %v783, 33
    %v785 = vmul.f32 %v781, %v762
    %786 = vadd.xlane.f32.xlu0 %v785
    %v787 = vpop.xlane.xlu0 %786
    %v788 = vsel %vm784, %v787, %v762
    %v789 = vmul.f32 %v781, %v766
    %790 = vadd.xlane.f32.xlu0 %v789
    %v791 = vpop.xlane.xlu0 %790
    %v792 = vsel %vm784, %v791, %v766
    %v793 = vmul.f32 %v781, %v770
    %794 = vadd.xlane.f32.xlu0 %v793
    %v795 = vpop.xlane.xlu0 %794
    %v796 = vsel %vm784, %v795, %v770
    %v797 = vmul.f32 %v781, %v774
    %798 = vadd.xlane.f32.xlu0 %v797
    %v799 = vpop.xlane.xlu0 %798
    %v800 = vsel %vm784, %v799, %v774
    %v801 = vmul.f32 %v781, %v778
    %802 = vadd.xlane.f32.xlu0 %v801
    %v803 = vpop.xlane.xlu0 %802
    %v804 = vsel %vm784, %v803, %v778
    %s805 = scalar_lea.vmem [#allocation2], 34
    %v806 = vld [vmem:[%s805] ss:$0 sm:$0xff]
    %v807 = vxor.u32 %v806, 2147483648
    %v808 = vlaneseq
    %v809 = vand.u32 %v808, 127
    %vm810 = vcmp.eq.s32.totalorder %v809, 34
    %v811 = vmul.f32 %v807, %v788
    %812 = vadd.xlane.f32.xlu0 %v811
    %v813 = vpop.xlane.xlu0 %812
    %v814 = vsel %vm810, %v813, %v788
    %v815 = vmul.f32 %v807, %v792
    %816 = vadd.xlane.f32.xlu0 %v815
    %v817 = vpop.xlane.xlu0 %816
    %v818 = vsel %vm810, %v817, %v792
    %v819 = vmul.f32 %v807, %v796
    %820 = vadd.xlane.f32.xlu0 %v819
    %v821 = vpop.xlane.xlu0 %820
    %v822 = vsel %vm810, %v821, %v796
    %v823 = vmul.f32 %v807, %v800
    %824 = vadd.xlane.f32.xlu0 %v823
    %v825 = vpop.xlane.xlu0 %824
    %v826 = vsel %vm810, %v825, %v800
    %v827 = vmul.f32 %v807, %v804
    %828 = vadd.xlane.f32.xlu0 %v827
    %v829 = vpop.xlane.xlu0 %828
    %v830 = vsel %vm810, %v829, %v804
    %s831 = scalar_lea.vmem [#allocation2], 35
    %v832 = vld [vmem:[%s831] ss:$0 sm:$0xff]
    %v833 = vxor.u32 %v832, 2147483648
    %v834 = vlaneseq
    %v835 = vand.u32 %v834, 127
    %vm836 = vcmp.eq.s32.totalorder %v835, 35
    %v837 = vmul.f32 %v833, %v814
    %838 = vadd.xlane.f32.xlu0 %v837
    %v839 = vpop.xlane.xlu0 %838
    %v840 = vsel %vm836, %v839, %v814
    %v841 = vmul.f32 %v833, %v818
    %842 = vadd.xlane.f32.xlu0 %v841
    %v843 = vpop.xlane.xlu0 %842
    %v844 = vsel %vm836, %v843, %v818
    %v845 = vmul.f32 %v833, %v822
    %846 = vadd.xlane.f32.xlu0 %v845
    %v847 = vpop.xlane.xlu0 %846
    %v848 = vsel %vm836, %v847, %v822
    %v849 = vmul.f32 %v833, %v826
    %850 = vadd.xlane.f32.xlu0 %v849
    %v851 = vpop.xlane.xlu0 %850
    %v852 = vsel %vm836, %v851, %v826
    %v853 = vmul.f32 %v833, %v830
    %854 = vadd.xlane.f32.xlu0 %v853
    %v855 = vpop.xlane.xlu0 %854
    %v856 = vsel %vm836, %v855, %v830
    %s857 = scalar_lea.vmem [#allocation2], 36
    %v858 = vld [vmem:[%s857] ss:$0 sm:$0xff]
    %v859 = vxor.u32 %v858, 2147483648
    %v860 = vlaneseq
    %v861 = vand.u32 %v860, 127
    %vm862 = vcmp.eq.s32.totalorder %v861, 36
    %v863 = vmul.f32 %v859, %v840
    %864 = vadd.xlane.f32.xlu0 %v863
    %v865 = vpop.xlane.xlu0 %864
    %v866 = vsel %vm862, %v865, %v840
    %v867 = vmul.f32 %v859, %v844
    %868 = vadd.xlane.f32.xlu0 %v867
    %v869 = vpop.xlane.xlu0 %868
    %v870 = vsel %vm862, %v869, %v844
    %v871 = vmul.f32 %v859, %v848
    %872 = vadd.xlane.f32.xlu0 %v871
    %v873 = vpop.xlane.xlu0 %872
    %v874 = vsel %vm862, %v873, %v848
    %v875 = vmul.f32 %v859, %v852
    %876 = vadd.xlane.f32.xlu0 %v875
    %v877 = vpop.xlane.xlu0 %876
    %v878 = vsel %vm862, %v877, %v852
    %v879 = vmul.f32 %v859, %v856
    %880 = vadd.xlane.f32.xlu0 %v879
    %v881 = vpop.xlane.xlu0 %880
    %v882 = vsel %vm862, %v881, %v856
    %s883 = scalar_lea.vmem [#allocation2], 37
    %v884 = vld [vmem:[%s883] ss:$0 sm:$0xff]
    %v885 = vxor.u32 %v884, 2147483648
    %v886 = vlaneseq
    %v887 = vand.u32 %v886, 127
    %vm888 = vcmp.eq.s32.totalorder %v887, 37
    %v889 = vmul.f32 %v885, %v866
    %890 = vadd.xlane.f32.xlu0 %v889
    %v891 = vpop.xlane.xlu0 %890
    %v892 = vsel %vm888, %v891, %v866
    %v893 = vmul.f32 %v885, %v870
    %894 = vadd.xlane.f32.xlu0 %v893
    %v895 = vpop.xlane.xlu0 %894
    %v896 = vsel %vm888, %v895, %v870
    %v897 = vmul.f32 %v885, %v874
    %898 = vadd.xlane.f32.xlu0 %v897
    %v899 = vpop.xlane.xlu0 %898
    %v900 = vsel %vm888, %v899, %v874
    %v901 = vmul.f32 %v885, %v878
    %902 = vadd.xlane.f32.xlu0 %v901
    %v903 = vpop.xlane.xlu0 %902
    %v904 = vsel %vm888, %v903, %v878
    %v905 = vmul.f32 %v885, %v882
    %906 = vadd.xlane.f32.xlu0 %v905
    %v907 = vpop.xlane.xlu0 %906
    %v908 = vsel %vm888, %v907, %v882
    %s909 = scalar_lea.vmem [#allocation2], 38
    %v910 = vld [vmem:[%s909] ss:$0 sm:$0xff]
    %v911 = vxor.u32 %v910, 2147483648
    %v912 = vlaneseq
    %v913 = vand.u32 %v912, 127
    %vm914 = vcmp.eq.s32.totalorder %v913, 38
    %v915 = vmul.f32 %v911, %v892
    %916 = vadd.xlane.f32.xlu0 %v915
    %v917 = vpop.xlane.xlu0 %916
    %v918 = vsel %vm914, %v917, %v892
    %v919 = vmul.f32 %v911, %v896
    %920 = vadd.xlane.f32.xlu0 %v919
    %v921 = vpop.xlane.xlu0 %920
    %v922 = vsel %vm914, %v921, %v896
    %v923 = vmul.f32 %v911, %v900
    %924 = vadd.xlane.f32.xlu0 %v923
    %v925 = vpop.xlane.xlu0 %924
    %v926 = vsel %vm914, %v925, %v900
    %v927 = vmul.f32 %v911, %v904
    %928 = vadd.xlane.f32.xlu0 %v927
    %v929 = vpop.xlane.xlu0 %928
    %v930 = vsel %vm914, %v929, %v904
    %v931 = vmul.f32 %v911, %v908
    %932 = vadd.xlane.f32.xlu0 %v931
    %v933 = vpop.xlane.xlu0 %932
    %v934 = vsel %vm914, %v933, %v908
    %s935 = scalar_lea.vmem [#allocation2], 39
    %v936 = vld [vmem:[%s935] ss:$0 sm:$0xff]
    %v937 = vxor.u32 %v936, 2147483648
    %v938 = vlaneseq
    %v939 = vand.u32 %v938, 127
    %vm940 = vcmp.eq.s32.totalorder %v939, 39
    %v941 = vmul.f32 %v937, %v918
    %942 = vadd.xlane.f32.xlu0 %v941
    %v943 = vpop.xlane.xlu0 %942
    %v944 = vsel %vm940, %v943, %v918
    %v945 = vmul.f32 %v937, %v922
    %946 = vadd.xlane.f32.xlu0 %v945
    %v947 = vpop.xlane.xlu0 %946
    %v948 = vsel %vm940, %v947, %v922
    %v949 = vmul.f32 %v937, %v926
    %950 = vadd.xlane.f32.xlu0 %v949
    %v951 = vpop.xlane.xlu0 %950
    %v952 = vsel %vm940, %v951, %v926
    %v953 = vmul.f32 %v937, %v930
    %954 = vadd.xlane.f32.xlu0 %v953
    %v955 = vpop.xlane.xlu0 %954
    %v956 = vsel %vm940, %v955, %v930
    %v957 = vmul.f32 %v937, %v934
    %958 = vadd.xlane.f32.xlu0 %v957
    %v959 = vpop.xlane.xlu0 %958
    %v960 = vsel %vm940, %v959, %v934
    %s961 = scalar_lea.vmem [#allocation2], 40
    %v962 = vld [vmem:[%s961] ss:$0 sm:$0xff]
    %v963 = vxor.u32 %v962, 2147483648
    %v964 = vlaneseq
    %v965 = vand.u32 %v964, 127
    %vm966 = vcmp.eq.s32.totalorder %v965, 40
    %v967 = vmul.f32 %v963, %v944
    %968 = vadd.xlane.f32.xlu0 %v967
    %v969 = vpop.xlane.xlu0 %968
    %v970 = vsel %vm966, %v969, %v944
    %v971 = vmul.f32 %v963, %v948
    %972 = vadd.xlane.f32.xlu0 %v971
    %v973 = vpop.xlane.xlu0 %972
    %v974 = vsel %vm966, %v973, %v948
    %v975 = vmul.f32 %v963, %v952
    %976 = vadd.xlane.f32.xlu0 %v975
    %v977 = vpop.xlane.xlu0 %976
    %v978 = vsel %vm966, %v977, %v952
    %v979 = vmul.f32 %v963, %v956
    %980 = vadd.xlane.f32.xlu0 %v979
    %v981 = vpop.xlane.xlu0 %980
    %v982 = vsel %vm966, %v981, %v956
    %v983 = vmul.f32 %v963, %v960
    %984 = vadd.xlane.f32.xlu0 %v983
    %v985 = vpop.xlane.xlu0 %984
    %v986 = vsel %vm966, %v985, %v960
    %v987 = vmul.f32 %v963, %v236
    %988 = vadd.xlane.f32.xlu0 %v987
    %v989 = vpop.xlane.xlu0 %988
    %v990 = vsel %vm966, %v989, %v236
    %s991 = scalar_lea.vmem [#allocation2], 41
    %v992 = vld [vmem:[%s991] ss:$0 sm:$0xff]
    %v993 = vxor.u32 %v992, 2147483648
    %v994 = vlaneseq
    %v995 = vand.u32 %v994, 127
    %vm996 = vcmp.eq.s32.totalorder %v995, 41
    %v997 = vmul.f32 %v993, %v970
    %998 = vadd.xlane.f32.xlu0 %v997
    %v999 = vpop.xlane.xlu0 %998
    %v1000 = vsel %vm996, %v999, %v970
    %v1001 = vmul.f32 %v993, %v974
    %1002 = vadd.xlane.f32.xlu0 %v1001
    %v1003 = vpop.xlane.xlu0 %1002
    %v1004 = vsel %vm996, %v1003, %v974
    %v1005 = vmul.f32 %v993, %v978
    %1006 = vadd.xlane.f32.xlu0 %v1005
    %v1007 = vpop.xlane.xlu0 %1006
    %v1008 = vsel %vm996, %v1007, %v978
    %v1009 = vmul.f32 %v993, %v982
    %1010 = vadd.xlane.f32.xlu0 %v1009
    %v1011 = vpop.xlane.xlu0 %1010
    %v1012 = vsel %vm996, %v1011, %v982
    %v1013 = vmul.f32 %v993, %v986
    %1014 = vadd.xlane.f32.xlu0 %v1013
    %v1015 = vpop.xlane.xlu0 %1014
    %v1016 = vsel %vm996, %v1015, %v986
    %v1017 = vmul.f32 %v993, %v990
    %1018 = vadd.xlane.f32.xlu0 %v1017
    %v1019 = vpop.xlane.xlu0 %1018
    %v1020 = vsel %vm996, %v1019, %v990
    %s1021 = scalar_lea.vmem [#allocation2], 42
    %v1022 = vld [vmem:[%s1021] ss:$0 sm:$0xff]
    %v1023 = vxor.u32 %v1022, 2147483648
    %v1024 = vlaneseq
    %v1025 = vand.u32 %v1024, 127
    %vm1026 = vcmp.eq.s32.totalorder %v1025, 42
    %v1027 = vmul.f32 %v1023, %v1000
    %1028 = vadd.xlane.f32.xlu0 %v1027
    %v1029 = vpop.xlane.xlu0 %1028
    %v1030 = vsel %vm1026, %v1029, %v1000
    %v1031 = vmul.f32 %v1023, %v1004
    %1032 = vadd.xlane.f32.xlu0 %v1031
    %v1033 = vpop.xlane.xlu0 %1032
    %v1034 = vsel %vm1026, %v1033, %v1004
    %v1035 = vmul.f32 %v1023, %v1008
    %1036 = vadd.xlane.f32.xlu0 %v1035
    %v1037 = vpop.xlane.xlu0 %1036
    %v1038 = vsel %vm1026, %v1037, %v1008
    %v1039 = vmul.f32 %v1023, %v1012
    %1040 = vadd.xlane.f32.xlu0 %v1039
    %v1041 = vpop.xlane.xlu0 %1040
    %v1042 = vsel %vm1026, %v1041, %v1012
    %v1043 = vmul.f32 %v1023, %v1016
    %1044 = vadd.xlane.f32.xlu0 %v1043
    %v1045 = vpop.xlane.xlu0 %1044
    %v1046 = vsel %vm1026, %v1045, %v1016
    %v1047 = vmul.f32 %v1023, %v1020
    %1048 = vadd.xlane.f32.xlu0 %v1047
    %v1049 = vpop.xlane.xlu0 %1048
    %v1050 = vsel %vm1026, %v1049, %v1020
    %s1051 = scalar_lea.vmem [#allocation2], 43
    %v1052 = vld [vmem:[%s1051] ss:$0 sm:$0xff]
    %v1053 = vxor.u32 %v1052, 2147483648
    %v1054 = vlaneseq
    %v1055 = vand.u32 %v1054, 127
    %vm1056 = vcmp.eq.s32.totalorder %v1055, 43
    %v1057 = vmul.f32 %v1053, %v1030
    %1058 = vadd.xlane.f32.xlu0 %v1057
    %v1059 = vpop.xlane.xlu0 %1058
    %v1060 = vsel %vm1056, %v1059, %v1030
    %v1061 = vmul.f32 %v1053, %v1034
    %1062 = vadd.xlane.f32.xlu0 %v1061
    %v1063 = vpop.xlane.xlu0 %1062
    %v1064 = vsel %vm1056, %v1063, %v1034
    %v1065 = vmul.f32 %v1053, %v1038
    %1066 = vadd.xlane.f32.xlu0 %v1065
    %v1067 = vpop.xlane.xlu0 %1066
    %v1068 = vsel %vm1056, %v1067, %v1038
    %v1069 = vmul.f32 %v1053, %v1042
    %1070 = vadd.xlane.f32.xlu0 %v1069
    %v1071 = vpop.xlane.xlu0 %1070
    %v1072 = vsel %vm1056, %v1071, %v1042
    %v1073 = vmul.f32 %v1053, %v1046
    %1074 = vadd.xlane.f32.xlu0 %v1073
    %v1075 = vpop.xlane.xlu0 %1074
    %v1076 = vsel %vm1056, %v1075, %v1046
    %v1077 = vmul.f32 %v1053, %v1050
    %1078 = vadd.xlane.f32.xlu0 %v1077
    %v1079 = vpop.xlane.xlu0 %1078
    %v1080 = vsel %vm1056, %v1079, %v1050
    %s1081 = scalar_lea.vmem [#allocation2], 44
    %v1082 = vld [vmem:[%s1081] ss:$0 sm:$0xff]
    %v1083 = vxor.u32 %v1082, 2147483648
    %v1084 = vlaneseq
    %v1085 = vand.u32 %v1084, 127
    %vm1086 = vcmp.eq.s32.totalorder %v1085, 44
    %v1087 = vmul.f32 %v1083, %v1060
    %1088 = vadd.xlane.f32.xlu0 %v1087
    %v1089 = vpop.xlane.xlu0 %1088
    %v1090 = vsel %vm1086, %v1089, %v1060
    %v1091 = vmul.f32 %v1083, %v1064
    %1092 = vadd.xlane.f32.xlu0 %v1091
    %v1093 = vpop.xlane.xlu0 %1092
    %v1094 = vsel %vm1086, %v1093, %v1064
    %v1095 = vmul.f32 %v1083, %v1068
    %1096 = vadd.xlane.f32.xlu0 %v1095
    %v1097 = vpop.xlane.xlu0 %1096
    %v1098 = vsel %vm1086, %v1097, %v1068
    %v1099 = vmul.f32 %v1083, %v1072
    %1100 = vadd.xlane.f32.xlu0 %v1099
    %v1101 = vpop.xlane.xlu0 %1100
    %v1102 = vsel %vm1086, %v1101, %v1072
    %v1103 = vmul.f32 %v1083, %v1076
    %1104 = vadd.xlane.f32.xlu0 %v1103
    %v1105 = vpop.xlane.xlu0 %1104
    %v1106 = vsel %vm1086, %v1105, %v1076
    %v1107 = vmul.f32 %v1083, %v1080
    %1108 = vadd.xlane.f32.xlu0 %v1107
    %v1109 = vpop.xlane.xlu0 %1108
    %v1110 = vsel %vm1086, %v1109, %v1080
    %s1111 = scalar_lea.vmem [#allocation2], 45
    %v1112 = vld [vmem:[%s1111] ss:$0 sm:$0xff]
    %v1113 = vxor.u32 %v1112, 2147483648
    %v1114 = vlaneseq
    %v1115 = vand.u32 %v1114, 127
    %vm1116 = vcmp.eq.s32.totalorder %v1115, 45
    %v1117 = vmul.f32 %v1113, %v1090
    %1118 = vadd.xlane.f32.xlu0 %v1117
    %v1119 = vpop.xlane.xlu0 %1118
    %v1120 = vsel %vm1116, %v1119, %v1090
    %v1121 = vmul.f32 %v1113, %v1094
    %1122 = vadd.xlane.f32.xlu0 %v1121
    %v1123 = vpop.xlane.xlu0 %1122
    %v1124 = vsel %vm1116, %v1123, %v1094
    %v1125 = vmul.f32 %v1113, %v1098
    %1126 = vadd.xlane.f32.xlu0 %v1125
    %v1127 = vpop.xlane.xlu0 %1126
    %v1128 = vsel %vm1116, %v1127, %v1098
    %v1129 = vmul.f32 %v1113, %v1102
    %1130 = vadd.xlane.f32.xlu0 %v1129
    %v1131 = vpop.xlane.xlu0 %1130
    %v1132 = vsel %vm1116, %v1131, %v1102
    %v1133 = vmul.f32 %v1113, %v1106
    %1134 = vadd.xlane.f32.xlu0 %v1133
    %v1135 = vpop.xlane.xlu0 %1134
    %v1136 = vsel %vm1116, %v1135, %v1106
    %v1137 = vmul.f32 %v1113, %v1110
    %1138 = vadd.xlane.f32.xlu0 %v1137
    %v1139 = vpop.xlane.xlu0 %1138
    %v1140 = vsel %vm1116, %v1139, %v1110
    %s1141 = scalar_lea.vmem [#allocation2], 46
    %v1142 = vld [vmem:[%s1141] ss:$0 sm:$0xff]
    %v1143 = vxor.u32 %v1142, 2147483648
    %v1144 = vlaneseq
    %v1145 = vand.u32 %v1144, 127
    %vm1146 = vcmp.eq.s32.totalorder %v1145, 46
    %v1147 = vmul.f32 %v1143, %v1120
    %1148 = vadd.xlane.f32.xlu0 %v1147
    %v1149 = vpop.xlane.xlu0 %1148
    %v1150 = vsel %vm1146, %v1149, %v1120
    %v1151 = vmul.f32 %v1143, %v1124
    %1152 = vadd.xlane.f32.xlu0 %v1151
    %v1153 = vpop.xlane.xlu0 %1152
    %v1154 = vsel %vm1146, %v1153, %v1124
    %v1155 = vmul.f32 %v1143, %v1128
    %1156 = vadd.xlane.f32.xlu0 %v1155
    %v1157 = vpop.xlane.xlu0 %1156
    %v1158 = vsel %vm1146, %v1157, %v1128
    %v1159 = vmul.f32 %v1143, %v1132
    %1160 = vadd.xlane.f32.xlu0 %v1159
    %v1161 = vpop.xlane.xlu0 %1160
    %v1162 = vsel %vm1146, %v1161, %v1132
    %v1163 = vmul.f32 %v1143, %v1136
    %1164 = vadd.xlane.f32.xlu0 %v1163
    %v1165 = vpop.xlane.xlu0 %1164
    %v1166 = vsel %vm1146, %v1165, %v1136
    %v1167 = vmul.f32 %v1143, %v1140
    %1168 = vadd.xlane.f32.xlu0 %v1167
    %v1169 = vpop.xlane.xlu0 %1168
    %v1170 = vsel %vm1146, %v1169, %v1140
    %s1171 = scalar_lea.vmem [#allocation2], 47
    %v1172 = vld [vmem:[%s1171] ss:$0 sm:$0xff]
    %v1173 = vxor.u32 %v1172, 2147483648
    %v1174 = vlaneseq
    %v1175 = vand.u32 %v1174, 127
    %vm1176 = vcmp.eq.s32.totalorder %v1175, 47
    %v1177 = vmul.f32 %v1173, %v1150
    %1178 = vadd.xlane.f32.xlu0 %v1177
    %v1179 = vpop.xlane.xlu0 %1178
    %v1180 = vsel %vm1176, %v1179, %v1150
    %v1181 = vmul.f32 %v1173, %v1154
    %1182 = vadd.xlane.f32.xlu0 %v1181
    %v1183 = vpop.xlane.xlu0 %1182
    %v1184 = vsel %vm1176, %v1183, %v1154
    %v1185 = vmul.f32 %v1173, %v1158
    %1186 = vadd.xlane.f32.xlu0 %v1185
    %v1187 = vpop.xlane.xlu0 %1186
    %v1188 = vsel %vm1176, %v1187, %v1158
    %v1189 = vmul.f32 %v1173, %v1162
    %1190 = vadd.xlane.f32.xlu0 %v1189
    %v1191 = vpop.xlane.xlu0 %1190
    %v1192 = vsel %vm1176, %v1191, %v1162
    %v1193 = vmul.f32 %v1173, %v1166
    %1194 = vadd.xlane.f32.xlu0 %v1193
    %v1195 = vpop.xlane.xlu0 %1194
    %v1196 = vsel %vm1176, %v1195, %v1166
    %v1197 = vmul.f32 %v1173, %v1170
    %1198 = vadd.xlane.f32.xlu0 %v1197
    %v1199 = vpop.xlane.xlu0 %1198
    %v1200 = vsel %vm1176, %v1199, %v1170
    %s1201 = scalar_lea.vmem [#allocation2], 48
    %v1202 = vld [vmem:[%s1201] ss:$0 sm:$0xff]
    %v1203 = vxor.u32 %v1202, 2147483648
    %v1204 = vlaneseq
    %v1205 = vand.u32 %v1204, 127
    %vm1206 = vcmp.eq.s32.totalorder %v1205, 48
    %v1207 = vmul.f32 %v1203, %v1180
    %1208 = vadd.xlane.f32.xlu0 %v1207
    %v1209 = vpop.xlane.xlu0 %1208
    %v1210 = vsel %vm1206, %v1209, %v1180
    %v1211 = vmul.f32 %v1203, %v1184
    %1212 = vadd.xlane.f32.xlu0 %v1211
    %v1213 = vpop.xlane.xlu0 %1212
    %v1214 = vsel %vm1206, %v1213, %v1184
    %v1215 = vmul.f32 %v1203, %v1188
    %1216 = vadd.xlane.f32.xlu0 %v1215
    %v1217 = vpop.xlane.xlu0 %1216
    %v1218 = vsel %vm1206, %v1217, %v1188
    %v1219 = vmul.f32 %v1203, %v1192
    %1220 = vadd.xlane.f32.xlu0 %v1219
    %v1221 = vpop.xlane.xlu0 %1220
    %v1222 = vsel %vm1206, %v1221, %v1192
    %v1223 = vmul.f32 %v1203, %v1196
    %1224 = vadd.xlane.f32.xlu0 %v1223
    %v1225 = vpop.xlane.xlu0 %1224
    %v1226 = vsel %vm1206, %v1225, %v1196
    %v1227 = vmul.f32 %v1203, %v1200
    %1228 = vadd.xlane.f32.xlu0 %v1227
    %v1229 = vpop.xlane.xlu0 %1228
    %v1230 = vsel %vm1206, %v1229, %v1200
    %v1231 = vmul.f32 %v1203, %v243
    %1232 = vadd.xlane.f32.xlu0 %v1231
    %v1233 = vpop.xlane.xlu0 %1232
    %v1234 = vsel %vm1206, %v1233, %v243
    %s1235 = scalar_lea.vmem [#allocation2], 49
    %v1236 = vld [vmem:[%s1235] ss:$0 sm:$0xff]
    %v1237 = vxor.u32 %v1236, 2147483648
    %v1238 = vlaneseq
    %v1239 = vand.u32 %v1238, 127
    %vm1240 = vcmp.eq.s32.totalorder %v1239, 49
    %v1241 = vmul.f32 %v1237, %v1210
    %1242 = vadd.xlane.f32.xlu0 %v1241
    %v1243 = vpop.xlane.xlu0 %1242
    %v1244 = vsel %vm1240, %v1243, %v1210
    %v1245 = vmul.f32 %v1237, %v1214
    %1246 = vadd.xlane.f32.xlu0 %v1245
    %v1247 = vpop.xlane.xlu0 %1246
    %v1248 = vsel %vm1240, %v1247, %v1214
    %v1249 = vmul.f32 %v1237, %v1218
    %1250 = vadd.xlane.f32.xlu0 %v1249
    %v1251 = vpop.xlane.xlu0 %1250
    %v1252 = vsel %vm1240, %v1251, %v1218
    %v1253 = vmul.f32 %v1237, %v1222
    %1254 = vadd.xlane.f32.xlu0 %v1253
    %v1255 = vpop.xlane.xlu0 %1254
    %v1256 = vsel %vm1240, %v1255, %v1222
    %v1257 = vmul.f32 %v1237, %v1226
    %1258 = vadd.xlane.f32.xlu0 %v1257
    %v1259 = vpop.xlane.xlu0 %1258
    %v1260 = vsel %vm1240, %v1259, %v1226
    %v1261 = vmul.f32 %v1237, %v1230
    %1262 = vadd.xlane.f32.xlu0 %v1261
    %v1263 = vpop.xlane.xlu0 %1262
    %v1264 = vsel %vm1240, %v1263, %v1230
    %v1265 = vmul.f32 %v1237, %v1234
    %1266 = vadd.xlane.f32.xlu0 %v1265
    %v1267 = vpop.xlane.xlu0 %1266
    %v1268 = vsel %vm1240, %v1267, %v1234
    %s1269 = scalar_lea.vmem [#allocation2], 50
    %v1270 = vld [vmem:[%s1269] ss:$0 sm:$0xff]
    %v1271 = vxor.u32 %v1270, 2147483648
    %v1272 = vlaneseq
    %v1273 = vand.u32 %v1272, 127
    %vm1274 = vcmp.eq.s32.totalorder %v1273, 50
    %v1275 = vmul.f32 %v1271, %v1244
    %1276 = vadd.xlane.f32.xlu0 %v1275
    %v1277 = vpop.xlane.xlu0 %1276
    %v1278 = vsel %vm1274, %v1277, %v1244
    %v1279 = vmul.f32 %v1271, %v1248
    %1280 = vadd.xlane.f32.xlu0 %v1279
    %v1281 = vpop.xlane.xlu0 %1280
    %v1282 = vsel %vm1274, %v1281, %v1248
    %v1283 = vmul.f32 %v1271, %v1252
    %1284 = vadd.xlane.f32.xlu0 %v1283
    %v1285 = vpop.xlane.xlu0 %1284
    %v1286 = vsel %vm1274, %v1285, %v1252
    %v1287 = vmul.f32 %v1271, %v1256
    %1288 = vadd.xlane.f32.xlu0 %v1287
    %v1289 = vpop.xlane.xlu0 %1288
    %v1290 = vsel %vm1274, %v1289, %v1256
    %v1291 = vmul.f32 %v1271, %v1260
    %1292 = vadd.xlane.f32.xlu0 %v1291
    %v1293 = vpop.xlane.xlu0 %1292
    %v1294 = vsel %vm1274, %v1293, %v1260
    %v1295 = vmul.f32 %v1271, %v1264
    %1296 = vadd.xlane.f32.xlu0 %v1295
    %v1297 = vpop.xlane.xlu0 %1296
    %v1298 = vsel %vm1274, %v1297, %v1264
    %v1299 = vmul.f32 %v1271, %v1268
    %1300 = vadd.xlane.f32.xlu0 %v1299
    %v1301 = vpop.xlane.xlu0 %1300
    %v1302 = vsel %vm1274, %v1301, %v1268
    %s1303 = scalar_lea.vmem [#allocation2], 51
    %v1304 = vld [vmem:[%s1303] ss:$0 sm:$0xff]
    %v1305 = vxor.u32 %v1304, 2147483648
    %v1306 = vlaneseq
    %v1307 = vand.u32 %v1306, 127
    %vm1308 = vcmp.eq.s32.totalorder %v1307, 51
    %v1309 = vmul.f32 %v1305, %v1278
    %1310 = vadd.xlane.f32.xlu0 %v1309
    %v1311 = vpop.xlane.xlu0 %1310
    %v1312 = vsel %vm1308, %v1311, %v1278
    %v1313 = vmul.f32 %v1305, %v1282
    %1314 = vadd.xlane.f32.xlu0 %v1313
    %v1315 = vpop.xlane.xlu0 %1314
    %v1316 = vsel %vm1308, %v1315, %v1282
    %v1317 = vmul.f32 %v1305, %v1286
    %1318 = vadd.xlane.f32.xlu0 %v1317
    %v1319 = vpop.xlane.xlu0 %1318
    %v1320 = vsel %vm1308, %v1319, %v1286
    %v1321 = vmul.f32 %v1305, %v1290
    %1322 = vadd.xlane.f32.xlu0 %v1321
    %v1323 = vpop.xlane.xlu0 %1322
    %v1324 = vsel %vm1308, %v1323, %v1290
    %v1325 = vmul.f32 %v1305, %v1294
    %1326 = vadd.xlane.f32.xlu0 %v1325
    %v1327 = vpop.xlane.xlu0 %1326
    %v1328 = vsel %vm1308, %v1327, %v1294
    %v1329 = vmul.f32 %v1305, %v1298
    %1330 = vadd.xlane.f32.xlu0 %v1329
    %v1331 = vpop.xlane.xlu0 %1330
    %v1332 = vsel %vm1308, %v1331, %v1298
    %v1333 = vmul.f32 %v1305, %v1302
    %1334 = vadd.xlane.f32.xlu0 %v1333
    %v1335 = vpop.xlane.xlu0 %1334
    %v1336 = vsel %vm1308, %v1335, %v1302
    %s1337 = scalar_lea.vmem [#allocation2], 52
    %v1338 = vld [vmem:[%s1337] ss:$0 sm:$0xff]
    %v1339 = vxor.u32 %v1338, 2147483648
    %v1340 = vlaneseq
    %v1341 = vand.u32 %v1340, 127
    %vm1342 = vcmp.eq.s32.totalorder %v1341, 52
    %v1343 = vmul.f32 %v1339, %v1312
    %1344 = vadd.xlane.f32.xlu0 %v1343
    %v1345 = vpop.xlane.xlu0 %1344
    %v1346 = vsel %vm1342, %v1345, %v1312
    %v1347 = vmul.f32 %v1339, %v1316
    %1348 = vadd.xlane.f32.xlu0 %v1347
    %v1349 = vpop.xlane.xlu0 %1348
    %v1350 = vsel %vm1342, %v1349, %v1316
    %v1351 = vmul.f32 %v1339, %v1320
    %1352 = vadd.xlane.f32.xlu0 %v1351
    %v1353 = vpop.xlane.xlu0 %1352
    %v1354 = vsel %vm1342, %v1353, %v1320
    %v1355 = vmul.f32 %v1339, %v1324
    %1356 = vadd.xlane.f32.xlu0 %v1355
    %v1357 = vpop.xlane.xlu0 %1356
    %v1358 = vsel %vm1342, %v1357, %v1324
    %v1359 = vmul.f32 %v1339, %v1328
    %1360 = vadd.xlane.f32.xlu0 %v1359
    %v1361 = vpop.xlane.xlu0 %1360
    %v1362 = vsel %vm1342, %v1361, %v1328
    %v1363 = vmul.f32 %v1339, %v1332
    %1364 = vadd.xlane.f32.xlu0 %v1363
    %v1365 = vpop.xlane.xlu0 %1364
    %v1366 = vsel %vm1342, %v1365, %v1332
    %v1367 = vmul.f32 %v1339, %v1336
    %1368 = vadd.xlane.f32.xlu0 %v1367
    %v1369 = vpop.xlane.xlu0 %1368
    %v1370 = vsel %vm1342, %v1369, %v1336
    %s1371 = scalar_lea.vmem [#allocation2], 53
    %v1372 = vld [vmem:[%s1371] ss:$0 sm:$0xff]
    %v1373 = vxor.u32 %v1372, 2147483648
    %v1374 = vlaneseq
    %v1375 = vand.u32 %v1374, 127
    %vm1376 = vcmp.eq.s32.totalorder %v1375, 53
    %v1377 = vmul.f32 %v1373, %v1346
    %1378 = vadd.xlane.f32.xlu0 %v1377
    %v1379 = vpop.xlane.xlu0 %1378
    %v1380 = vsel %vm1376, %v1379, %v1346
    %v1381 = vmul.f32 %v1373, %v1350
    %1382 = vadd.xlane.f32.xlu0 %v1381
    %v1383 = vpop.xlane.xlu0 %1382
    %v1384 = vsel %vm1376, %v1383, %v1350
    %v1385 = vmul.f32 %v1373, %v1354
    %1386 = vadd.xlane.f32.xlu0 %v1385
    %v1387 = vpop.xlane.xlu0 %1386
    %v1388 = vsel %vm1376, %v1387, %v1354
    %v1389 = vmul.f32 %v1373, %v1358
    %1390 = vadd.xlane.f32.xlu0 %v1389
    %v1391 = vpop.xlane.xlu0 %1390
    %v1392 = vsel %vm1376, %v1391, %v1358
    %v1393 = vmul.f32 %v1373, %v1362
    %1394 = vadd.xlane.f32.xlu0 %v1393
    %v1395 = vpop.xlane.xlu0 %1394
    %v1396 = vsel %vm1376, %v1395, %v1362
    %v1397 = vmul.f32 %v1373, %v1366
    %1398 = vadd.xlane.f32.xlu0 %v1397
    %v1399 = vpop.xlane.xlu0 %1398
    %v1400 = vsel %vm1376, %v1399, %v1366
    %v1401 = vmul.f32 %v1373, %v1370
    %1402 = vadd.xlane.f32.xlu0 %v1401
    %v1403 = vpop.xlane.xlu0 %1402
    %v1404 = vsel %vm1376, %v1403, %v1370
    %s1405 = scalar_lea.vmem [#allocation2], 54
    %v1406 = vld [vmem:[%s1405] ss:$0 sm:$0xff]
    %v1407 = vxor.u32 %v1406, 2147483648
    %v1408 = vlaneseq
    %v1409 = vand.u32 %v1408, 127
    %vm1410 = vcmp.eq.s32.totalorder %v1409, 54
    %v1411 = vmul.f32 %v1407, %v1380
    %1412 = vadd.xlane.f32.xlu0 %v1411
    %v1413 = vpop.xlane.xlu0 %1412
    %v1414 = vsel %vm1410, %v1413, %v1380
    %v1415 = vmul.f32 %v1407, %v1384
    %1416 = vadd.xlane.f32.xlu0 %v1415
    %v1417 = vpop.xlane.xlu0 %1416
    %v1418 = vsel %vm1410, %v1417, %v1384
    %v1419 = vmul.f32 %v1407, %v1388
    %1420 = vadd.xlane.f32.xlu0 %v1419
    %v1421 = vpop.xlane.xlu0 %1420
    %v1422 = vsel %vm1410, %v1421, %v1388
    %v1423 = vmul.f32 %v1407, %v1392
    %1424 = vadd.xlane.f32.xlu0 %v1423
    %v1425 = vpop.xlane.xlu0 %1424
    %v1426 = vsel %vm1410, %v1425, %v1392
    %v1427 = vmul.f32 %v1407, %v1396
    %1428 = vadd.xlane.f32.xlu0 %v1427
    %v1429 = vpop.xlane.xlu0 %1428
    %v1430 = vsel %vm1410, %v1429, %v1396
    %v1431 = vmul.f32 %v1407, %v1400
    %1432 = vadd.xlane.f32.xlu0 %v1431
    %v1433 = vpop.xlane.xlu0 %1432
    %v1434 = vsel %vm1410, %v1433, %v1400
    %v1435 = vmul.f32 %v1407, %v1404
    %1436 = vadd.xlane.f32.xlu0 %v1435
    %v1437 = vpop.xlane.xlu0 %1436
    %v1438 = vsel %vm1410, %v1437, %v1404
    %s1439 = scalar_lea.vmem [#allocation2], 55
    %v1440 = vld [vmem:[%s1439] ss:$0 sm:$0xff]
    %v1441 = vxor.u32 %v1440, 2147483648
    %v1442 = vlaneseq
    %v1443 = vand.u32 %v1442, 127
    %vm1444 = vcmp.eq.s32.totalorder %v1443, 55
    %v1445 = vmul.f32 %v1441, %v1414
    %1446 = vadd.xlane.f32.xlu0 %v1445
    %v1447 = vpop.xlane.xlu0 %1446
    %v1448 = vsel %vm1444, %v1447, %v1414
    %v1449 = vmul.f32 %v1441, %v1418
    %1450 = vadd.xlane.f32.xlu0 %v1449
    %v1451 = vpop.xlane.xlu0 %1450
    %v1452 = vsel %vm1444, %v1451, %v1418
    %v1453 = vmul.f32 %v1441, %v1422
    %1454 = vadd.xlane.f32.xlu0 %v1453
    %v1455 = vpop.xlane.xlu0 %1454
    %v1456 = vsel %vm1444, %v1455, %v1422
    %v1457 = vmul.f32 %v1441, %v1426
    %1458 = vadd.xlane.f32.xlu0 %v1457
    %v1459 = vpop.xlane.xlu0 %1458
    %v1460 = vsel %vm1444, %v1459, %v1426
    %v1461 = vmul.f32 %v1441, %v1430
    %1462 = vadd.xlane.f32.xlu0 %v1461
    %v1463 = vpop.xlane.xlu0 %1462
    %v1464 = vsel %vm1444, %v1463, %v1430
    %v1465 = vmul.f32 %v1441, %v1434
    %1466 = vadd.xlane.f32.xlu0 %v1465
    %v1467 = vpop.xlane.xlu0 %1466
    %v1468 = vsel %vm1444, %v1467, %v1434
    %v1469 = vmul.f32 %v1441, %v1438
    %1470 = vadd.xlane.f32.xlu0 %v1469
    %v1471 = vpop.xlane.xlu0 %1470
    %v1472 = vsel %vm1444, %v1471, %v1438
    %s1473 = scalar_lea.vmem [#allocation2], 56
    %v1474 = vld [vmem:[%s1473] ss:$0 sm:$0xff]
    %v1475 = vxor.u32 %v1474, 2147483648
    %v1476 = vlaneseq
    %v1477 = vand.u32 %v1476, 127
    %vm1478 = vcmp.eq.s32.totalorder %v1477, 56
    %v1479 = vmul.f32 %v1475, %v1448
    %1480 = vadd.xlane.f32.xlu0 %v1479
    %v1481 = vpop.xlane.xlu0 %1480
    %v1482 = vsel %vm1478, %v1481, %v1448
    %v1483 = vmul.f32 %v1475, %v1452
    %1484 = vadd.xlane.f32.xlu0 %v1483
    %v1485 = vpop.xlane.xlu0 %1484
    %v1486 = vsel %vm1478, %v1485, %v1452
    %v1487 = vmul.f32 %v1475, %v1456
    %1488 = vadd.xlane.f32.xlu0 %v1487
    %v1489 = vpop.xlane.xlu0 %1488
    %v1490 = vsel %vm1478, %v1489, %v1456
    %v1491 = vmul.f32 %v1475, %v1460
    %1492 = vadd.xlane.f32.xlu0 %v1491
    %v1493 = vpop.xlane.xlu0 %1492
    %v1494 = vsel %vm1478, %v1493, %v1460
    %v1495 = vmul.f32 %v1475, %v1464
    %1496 = vadd.xlane.f32.xlu0 %v1495
    %v1497 = vpop.xlane.xlu0 %1496
    %v1498 = vsel %vm1478, %v1497, %v1464
    %v1499 = vmul.f32 %v1475, %v1468
    %1500 = vadd.xlane.f32.xlu0 %v1499
    %v1501 = vpop.xlane.xlu0 %1500
    %v1502 = vsel %vm1478, %v1501, %v1468
    %v1503 = vmul.f32 %v1475, %v1472
    %1504 = vadd.xlane.f32.xlu0 %v1503
    %v1505 = vpop.xlane.xlu0 %1504
    %v1506 = vsel %vm1478, %v1505, %v1472
    %v1507 = vmul.f32 %v1475, %v250
    %1508 = vadd.xlane.f32.xlu0 %v1507
    %v1509 = vpop.xlane.xlu0 %1508
    %v1510 = vsel %vm1478, %v1509, %v250
    %s1511 = scalar_lea.vmem [#allocation2], 57
    %v1512 = vld [vmem:[%s1511] ss:$0 sm:$0xff]
    %v1513 = vxor.u32 %v1512, 2147483648
    %v1514 = vlaneseq
    %v1515 = vand.u32 %v1514, 127
    %vm1516 = vcmp.eq.s32.totalorder %v1515, 57
    %v1517 = vmul.f32 %v1513, %v1482
    %1518 = vadd.xlane.f32.xlu0 %v1517
    %v1519 = vpop.xlane.xlu0 %1518
    %v1520 = vsel %vm1516, %v1519, %v1482
    %v1521 = vmul.f32 %v1513, %v1486
    %1522 = vadd.xlane.f32.xlu0 %v1521
    %v1523 = vpop.xlane.xlu0 %1522
    %v1524 = vsel %vm1516, %v1523, %v1486
    %v1525 = vmul.f32 %v1513, %v1490
    %1526 = vadd.xlane.f32.xlu0 %v1525
    %v1527 = vpop.xlane.xlu0 %1526
    %v1528 = vsel %vm1516, %v1527, %v1490
    %v1529 = vmul.f32 %v1513, %v1494
    %1530 = vadd.xlane.f32.xlu0 %v1529
    %v1531 = vpop.xlane.xlu0 %1530
    %v1532 = vsel %vm1516, %v1531, %v1494
    %v1533 = vmul.f32 %v1513, %v1498
    %1534 = vadd.xlane.f32.xlu0 %v1533
    %v1535 = vpop.xlane.xlu0 %1534
    %v1536 = vsel %vm1516, %v1535, %v1498
    %v1537 = vmul.f32 %v1513, %v1502
    %1538 = vadd.xlane.f32.xlu0 %v1537
    %v1539 = vpop.xlane.xlu0 %1538
    %v1540 = vsel %vm1516, %v1539, %v1502
    %v1541 = vmul.f32 %v1513, %v1506
    %1542 = vadd.xlane.f32.xlu0 %v1541
    %v1543 = vpop.xlane.xlu0 %1542
    %v1544 = vsel %vm1516, %v1543, %v1506
    %v1545 = vmul.f32 %v1513, %v1510
    %1546 = vadd.xlane.f32.xlu0 %v1545
    %v1547 = vpop.xlane.xlu0 %1546
    %v1548 = vsel %vm1516, %v1547, %v1510
    %s1549 = scalar_lea.vmem [#allocation2], 58
    %v1550 = vld [vmem:[%s1549] ss:$0 sm:$0xff]
    %v1551 = vxor.u32 %v1550, 2147483648
    %v1552 = vlaneseq
    %v1553 = vand.u32 %v1552, 127
    %vm1554 = vcmp.eq.s32.totalorder %v1553, 58
    %v1555 = vmul.f32 %v1551, %v1520
    %1556 = vadd.xlane.f32.xlu0 %v1555
    %v1557 = vpop.xlane.xlu0 %1556
    %v1558 = vsel %vm1554, %v1557, %v1520
    %v1559 = vmul.f32 %v1551, %v1524
    %1560 = vadd.xlane.f32.xlu0 %v1559
    %v1561 = vpop.xlane.xlu0 %1560
    %v1562 = vsel %vm1554, %v1561, %v1524
    %v1563 = vmul.f32 %v1551, %v1528
    %1564 = vadd.xlane.f32.xlu0 %v1563
    %v1565 = vpop.xlane.xlu0 %1564
    %v1566 = vsel %vm1554, %v1565, %v1528
    %v1567 = vmul.f32 %v1551, %v1532
    %1568 = vadd.xlane.f32.xlu0 %v1567
    %v1569 = vpop.xlane.xlu0 %1568
    %v1570 = vsel %vm1554, %v1569, %v1532
    %v1571 = vmul.f32 %v1551, %v1536
    %1572 = vadd.xlane.f32.xlu0 %v1571
    %v1573 = vpop.xlane.xlu0 %1572
    %v1574 = vsel %vm1554, %v1573, %v1536
    %v1575 = vmul.f32 %v1551, %v1540
    %1576 = vadd.xlane.f32.xlu0 %v1575
    %v1577 = vpop.xlane.xlu0 %1576
    %v1578 = vsel %vm1554, %v1577, %v1540
    %v1579 = vmul.f32 %v1551, %v1544
    %1580 = vadd.xlane.f32.xlu0 %v1579
    %v1581 = vpop.xlane.xlu0 %1580
    %v1582 = vsel %vm1554, %v1581, %v1544
    %v1583 = vmul.f32 %v1551, %v1548
    %1584 = vadd.xlane.f32.xlu0 %v1583
    %v1585 = vpop.xlane.xlu0 %1584
    %v1586 = vsel %vm1554, %v1585, %v1548
    %s1587 = scalar_lea.vmem [#allocation2], 59
    %v1588 = vld [vmem:[%s1587] ss:$0 sm:$0xff]
    %v1589 = vxor.u32 %v1588, 2147483648
    %v1590 = vlaneseq
    %v1591 = vand.u32 %v1590, 127
    %vm1592 = vcmp.eq.s32.totalorder %v1591, 59
    %v1593 = vmul.f32 %v1589, %v1558
    %1594 = vadd.xlane.f32.xlu0 %v1593
    %v1595 = vpop.xlane.xlu0 %1594
    %v1596 = vsel %vm1592, %v1595, %v1558
    %v1597 = vmul.f32 %v1589, %v1562
    %1598 = vadd.xlane.f32.xlu0 %v1597
    %v1599 = vpop.xlane.xlu0 %1598
    %v1600 = vsel %vm1592, %v1599, %v1562
    %v1601 = vmul.f32 %v1589, %v1566
    %1602 = vadd.xlane.f32.xlu0 %v1601
    %v1603 = vpop.xlane.xlu0 %1602
    %v1604 = vsel %vm1592, %v1603, %v1566
    %v1605 = vmul.f32 %v1589, %v1570
    %1606 = vadd.xlane.f32.xlu0 %v1605
    %v1607 = vpop.xlane.xlu0 %1606
    %v1608 = vsel %vm1592, %v1607, %v1570
    %v1609 = vmul.f32 %v1589, %v1574
    %1610 = vadd.xlane.f32.xlu0 %v1609
    %v1611 = vpop.xlane.xlu0 %1610
    %v1612 = vsel %vm1592, %v1611, %v1574
    %v1613 = vmul.f32 %v1589, %v1578
    %1614 = vadd.xlane.f32.xlu0 %v1613
    %v1615 = vpop.xlane.xlu0 %1614
    %v1616 = vsel %vm1592, %v1615, %v1578
    %v1617 = vmul.f32 %v1589, %v1582
    %1618 = vadd.xlane.f32.xlu0 %v1617
    %v1619 = vpop.xlane.xlu0 %1618
    %v1620 = vsel %vm1592, %v1619, %v1582
    %v1621 = vmul.f32 %v1589, %v1586
    %1622 = vadd.xlane.f32.xlu0 %v1621
    %v1623 = vpop.xlane.xlu0 %1622
    %v1624 = vsel %vm1592, %v1623, %v1586
    %s1625 = scalar_lea.vmem [#allocation2], 60
    %v1626 = vld [vmem:[%s1625] ss:$0 sm:$0xff]
    %v1627 = vxor.u32 %v1626, 2147483648
    %v1628 = vlaneseq
    %v1629 = vand.u32 %v1628, 127
    %vm1630 = vcmp.eq.s32.totalorder %v1629, 60
    %v1631 = vmul.f32 %v1627, %v1596
    %1632 = vadd.xlane.f32.xlu0 %v1631
    %v1633 = vpop.xlane.xlu0 %1632
    %v1634 = vsel %vm1630, %v1633, %v1596
    %v1635 = vmul.f32 %v1627, %v1600
    %1636 = vadd.xlane.f32.xlu0 %v1635
    %v1637 = vpop.xlane.xlu0 %1636
    %v1638 = vsel %vm1630, %v1637, %v1600
    %v1639 = vmul.f32 %v1627, %v1604
    %1640 = vadd.xlane.f32.xlu0 %v1639
    %v1641 = vpop.xlane.xlu0 %1640
    %v1642 = vsel %vm1630, %v1641, %v1604
    %v1643 = vmul.f32 %v1627, %v1608
    %1644 = vadd.xlane.f32.xlu0 %v1643
    %v1645 = vpop.xlane.xlu0 %1644
    %v1646 = vsel %vm1630, %v1645, %v1608
    %v1647 = vmul.f32 %v1627, %v1612
    %1648 = vadd.xlane.f32.xlu0 %v1647
    %v1649 = vpop.xlane.xlu0 %1648
    %v1650 = vsel %vm1630, %v1649, %v1612
    %v1651 = vmul.f32 %v1627, %v1616
    %1652 = vadd.xlane.f32.xlu0 %v1651
    %v1653 = vpop.xlane.xlu0 %1652
    %v1654 = vsel %vm1630, %v1653, %v1616
    %v1655 = vmul.f32 %v1627, %v1620
    %1656 = vadd.xlane.f32.xlu0 %v1655
    %v1657 = vpop.xlane.xlu0 %1656
    %v1658 = vsel %vm1630, %v1657, %v1620
    %v1659 = vmul.f32 %v1627, %v1624
    %1660 = vadd.xlane.f32.xlu0 %v1659
    %v1661 = vpop.xlane.xlu0 %1660
    %v1662 = vsel %vm1630, %v1661, %v1624
    %s1663 = scalar_lea.vmem [#allocation2], 61
    %v1664 = vld [vmem:[%s1663] ss:$0 sm:$0xff]
    %v1665 = vxor.u32 %v1664, 2147483648
    %v1666 = vlaneseq
    %v1667 = vand.u32 %v1666, 127
    %vm1668 = vcmp.eq.s32.totalorder %v1667, 61
    %v1669 = vmul.f32 %v1665, %v1634
    %1670 = vadd.xlane.f32.xlu0 %v1669
    %v1671 = vpop.xlane.xlu0 %1670
    %v1672 = vsel %vm1668, %v1671, %v1634
    %v1673 = vmul.f32 %v1665, %v1638
    %1674 = vadd.xlane.f32.xlu0 %v1673
    %v1675 = vpop.xlane.xlu0 %1674
    %v1676 = vsel %vm1668, %v1675, %v1638
    %v1677 = vmul.f32 %v1665, %v1642
    %1678 = vadd.xlane.f32.xlu0 %v1677
    %v1679 = vpop.xlane.xlu0 %1678
    %v1680 = vsel %vm1668, %v1679, %v1642
    %v1681 = vmul.f32 %v1665, %v1646
    %1682 = vadd.xlane.f32.xlu0 %v1681
    %v1683 = vpop.xlane.xlu0 %1682
    %v1684 = vsel %vm1668, %v1683, %v1646
    %v1685 = vmul.f32 %v1665, %v1650
    %1686 = vadd.xlane.f32.xlu0 %v1685
    %v1687 = vpop.xlane.xlu0 %1686
    %v1688 = vsel %vm1668, %v1687, %v1650
    %v1689 = vmul.f32 %v1665, %v1654
    %1690 = vadd.xlane.f32.xlu0 %v1689
    %v1691 = vpop.xlane.xlu0 %1690
    %v1692 = vsel %vm1668, %v1691, %v1654
    %v1693 = vmul.f32 %v1665, %v1658
    %1694 = vadd.xlane.f32.xlu0 %v1693
    %v1695 = vpop.xlane.xlu0 %1694
    %v1696 = vsel %vm1668, %v1695, %v1658
    %v1697 = vmul.f32 %v1665, %v1662
    %1698 = vadd.xlane.f32.xlu0 %v1697
    %v1699 = vpop.xlane.xlu0 %1698
    %v1700 = vsel %vm1668, %v1699, %v1662
    %s1701 = scalar_lea.vmem [#allocation2], 62
    %v1702 = vld [vmem:[%s1701] ss:$0 sm:$0xff]
    %v1703 = vxor.u32 %v1702, 2147483648
    %v1704 = vlaneseq
    %v1705 = vand.u32 %v1704, 127
    %vm1706 = vcmp.eq.s32.totalorder %v1705, 62
    %v1707 = vmul.f32 %v1703, %v1672
    %1708 = vadd.xlane.f32.xlu0 %v1707
    %v1709 = vpop.xlane.xlu0 %1708
    %v1710 = vsel %vm1706, %v1709, %v1672
    %v1711 = vmul.f32 %v1703, %v1676
    %1712 = vadd.xlane.f32.xlu0 %v1711
    %v1713 = vpop.xlane.xlu0 %1712
    %v1714 = vsel %vm1706, %v1713, %v1676
    %v1715 = vmul.f32 %v1703, %v1680
    %1716 = vadd.xlane.f32.xlu0 %v1715
    %v1717 = vpop.xlane.xlu0 %1716
    %v1718 = vsel %vm1706, %v1717, %v1680
    %v1719 = vmul.f32 %v1703, %v1684
    %1720 = vadd.xlane.f32.xlu0 %v1719
    %v1721 = vpop.xlane.xlu0 %1720
    %v1722 = vsel %vm1706, %v1721, %v1684
    %v1723 = vmul.f32 %v1703, %v1688
    %1724 = vadd.xlane.f32.xlu0 %v1723
    %v1725 = vpop.xlane.xlu0 %1724
    %v1726 = vsel %vm1706, %v1725, %v1688
    %v1727 = vmul.f32 %v1703, %v1692
    %1728 = vadd.xlane.f32.xlu0 %v1727
    %v1729 = vpop.xlane.xlu0 %1728
    %v1730 = vsel %vm1706, %v1729, %v1692
    %v1731 = vmul.f32 %v1703, %v1696
    %1732 = vadd.xlane.f32.xlu0 %v1731
    %v1733 = vpop.xlane.xlu0 %1732
    %v1734 = vsel %vm1706, %v1733, %v1696
    %v1735 = vmul.f32 %v1703, %v1700
    %1736 = vadd.xlane.f32.xlu0 %v1735
    %v1737 = vpop.xlane.xlu0 %1736
    %v1738 = vsel %vm1706, %v1737, %v1700
    %s1739 = scalar_lea.vmem [#allocation2], 63
    %v1740 = vld [vmem:[%s1739] ss:$0 sm:$0xff]
    %v1741 = vxor.u32 %v1740, 2147483648
    %v1742 = vlaneseq
    %v1743 = vand.u32 %v1742, 127
    %vm1744 = vcmp.eq.s32.totalorder %v1743, 63
    %v1745 = vmul.f32 %v1741, %v1710
    %1746 = vadd.xlane.f32.xlu0 %v1745
    %v1747 = vpop.xlane.xlu0 %1746
    %v1748 = vsel %vm1744, %v1747, %v1710
    %v1749 = vmul.f32 %v1741, %v1714
    %1750 = vadd.xlane.f32.xlu0 %v1749
    %v1751 = vpop.xlane.xlu0 %1750
    %v1752 = vsel %vm1744, %v1751, %v1714
    %v1753 = vmul.f32 %v1741, %v1718
    %1754 = vadd.xlane.f32.xlu0 %v1753
    %v1755 = vpop.xlane.xlu0 %1754
    %v1756 = vsel %vm1744, %v1755, %v1718
    %v1757 = vmul.f32 %v1741, %v1722
    %1758 = vadd.xlane.f32.xlu0 %v1757
    %v1759 = vpop.xlane.xlu0 %1758
    %v1760 = vsel %vm1744, %v1759, %v1722
    %v1761 = vmul.f32 %v1741, %v1726
    %1762 = vadd.xlane.f32.xlu0 %v1761
    %v1763 = vpop.xlane.xlu0 %1762
    %v1764 = vsel %vm1744, %v1763, %v1726
    %v1765 = vmul.f32 %v1741, %v1730
    %1766 = vadd.xlane.f32.xlu0 %v1765
    %v1767 = vpop.xlane.xlu0 %1766
    %v1768 = vsel %vm1744, %v1767, %v1730
    %v1769 = vmul.f32 %v1741, %v1734
    %1770 = vadd.xlane.f32.xlu0 %v1769
    %v1771 = vpop.xlane.xlu0 %1770
    %v1772 = vsel %vm1744, %v1771, %v1734
    %v1773 = vmul.f32 %v1741, %v1738
    %1774 = vadd.xlane.f32.xlu0 %v1773
    %v1775 = vpop.xlane.xlu0 %1774
    %v1776 = vsel %vm1744, %v1775, %v1738
    %v1777 = vrcp.pop %v72
    %v1778 = vmul.f32 %v1748, %v1777
    %vm1779 = vweird.f32 %v72
    %v1780 = vsel %vm1779, %v1748, %v1778
    %1781 = vst [vmem:[#allocation1] sm:$0xff] %v1780
    %v1782 = vrcp.pop %v88
    %v1783 = vmul.f32 %v1752, %v1782
    %vm1784 = vweird.f32 %v88
    %v1785 = vsel %vm1784, %v1752, %v1783
    %s1786 = scalar_lea.vmem [#allocation1], 8
    %1787 = vst [vmem:[%s1786] sm:$0xff] %v1785
    %v1788 = vrcp.pop %v104
    %v1789 = vmul.f32 %v1756, %v1788
    %vm1790 = vweird.f32 %v104
    %v1791 = vsel %vm1790, %v1756, %v1789
    %s1792 = scalar_lea.vmem [#allocation1], 16
    %1793 = vst [vmem:[%s1792] sm:$0xff] %v1791
    %v1794 = vrcp.pop %v120
    %v1795 = vmul.f32 %v1760, %v1794
    %vm1796 = vweird.f32 %v120
    %v1797 = vsel %vm1796, %v1760, %v1795
    %s1798 = scalar_lea.vmem [#allocation1], 24
    %1799 = vst [vmem:[%s1798] sm:$0xff] %v1797
    %v1800 = vrcp.pop %v136
    %v1801 = vmul.f32 %v1764, %v1800
    %vm1802 = vweird.f32 %v136
    %v1803 = vsel %vm1802, %v1764, %v1801
    %s1804 = scalar_lea.vmem [#allocation1], 32
    %1805 = vst [vmem:[%s1804] sm:$0xff] %v1803
    %v1806 = vrcp.pop %v152
    %v1807 = vmul.f32 %v1768, %v1806
    %vm1808 = vweird.f32 %v152
    %v1809 = vsel %vm1808, %v1768, %v1807
    %s1810 = scalar_lea.vmem [#allocation1], 40
    %1811 = vst [vmem:[%s1810] sm:$0xff] %v1809
    %v1812 = vrcp.pop %v168
    %v1813 = vmul.f32 %v1772, %v1812
    %vm1814 = vweird.f32 %v168
    %v1815 = vsel %vm1814, %v1772, %v1813
    %s1816 = scalar_lea.vmem [#allocation1], 48
    %1817 = vst [vmem:[%s1816] sm:$0xff] %v1815
    %v1818 = vrcp.pop %v184
    %v1819 = vmul.f32 %v1776, %v1818
    %vm1820 = vweird.f32 %v184
    %v1821 = vsel %vm1820, %v1776, %v1819
    %s1822 = scalar_lea.vmem [#allocation1], 56
    %1823 = vst [vmem:[%s1822] sm:$0xff] %v1821
    // Predicated region
    $region36: #{custom-call.13} parent=1 // pred_check
      _
    $region37: #{custom-call.13} parent=1 // pred_check_branch
      %1825 = sbr.rel (0) target = $region39
    $region38: #{custom-call.13} parent=1 // pred_region
      // Predicated region
      $region40: #{custom-call.13} parent=38 // pred_check
        _
      $region41: #{custom-call.13} parent=38 // pred_check_branch
        %1827 = sbr.rel (0) target = $region43
      $region42: #{custom-call.13} parent=38 // pred_region
        // Predicated region
        $region55: #{custom-call.13} parent=42 // pred_check
          _
        $region56: #{custom-call.13} parent=42 // pred_check_branch
          %1856 = sbr.rel (0) target = $region58
        $region57: #{custom-call.13} parent=42 // pred_region
          loop: start=0, step=1, limit=1
          $region59: #{custom-call.13} parent=57 // loop_pre_header
            _
          $region60: #{custom-call.13} parent=57 // loop_header
            %s1858 = sphi 0, %s1862
            %p1859 = scmp.ge.s32.totalorder %s1858, 1
            %s1863 = sphi [#allocation1], [#allocation1]
            %s1864 = sphi %s1, %s1
          $region61: #{custom-call.13} parent=57 // loop_header_branch
            %1861 = sbr.rel (%p1859) target = $region65
          $region62: #{custom-call.13} parent=57 // loop_body
            %v1865 = vld [vmem:[%s1863] sm:$0xff]
            %1866 = vst [vmem:[%s1864] sm:$0xff] %v1865
            %v1867 = vld [vmem:[%s1863 + $0x8] sm:$0xff]
            %1868 = vst [vmem:[%s1864 + $0x8] sm:$0xff] %v1867
            %v1869 = vld [vmem:[%s1863 + $0x10] sm:$0xff]
            %1870 = vst [vmem:[%s1864 + $0x10] sm:$0xff] %v1869
            %v1871 = vld [vmem:[%s1863 + $0x18] sm:$0xff]
            %1872 = vst [vmem:[%s1864 + $0x18] sm:$0xff] %v1871
            %v1873 = vld [vmem:[%s1863 + $0x20] sm:$0xff]
            %1874 = vst [vmem:[%s1864 + $0x20] sm:$0xff] %v1873
            %v1875 = vld [vmem:[%s1863 + $0x28] sm:$0xff]
            %1876 = vst [vmem:[%s1864 + $0x28] sm:$0xff] %v1875
            %v1877 = vld [vmem:[%s1863 + $0x30] sm:$0xff]
            %1878 = vst [vmem:[%s1864 + $0x30] sm:$0xff] %v1877
            %v1879 = vld [vmem:[%s1863 + $0x38] sm:$0xff]
            %1880 = vst [vmem:[%s1864 + $0x38] sm:$0xff] %v1879
          $region63: #{custom-call.13} parent=57 // loop_footer
            %s1862 = sadd.s32 1, %s1858
          $region64: #{custom-call.13} parent=57 // loop_footer_branch
            %1857 = sbr.rel target = $region60
          $region65: #{custom-call.13} parent=57 // loop_exit
            _
        $region58: #{custom-call.13} parent=42 // pred_fallthru
          _
        // Predicated region
        $region66: #{custom-call.13} parent=42 // pred_check
          _
        $region67: #{custom-call.13} parent=42 // pred_check_branch
          %1882 = sbr.rel target = $region69
        $region68: #{custom-call.13} parent=42 // pred_region
          _
        $region69: #{custom-call.13} parent=42 // pred_fallthru
          _
      $region43: #{custom-call.13} parent=38 // pred_fallthru
        _
      // Predicated region
      $region44: #{custom-call.13} parent=38 // pred_check
        _
      $region45: #{custom-call.13} parent=38 // pred_check_branch
        %1829 = sbr.rel target = $region47
      $region46: #{custom-call.13} parent=38 // pred_region
        loop: start=0, step=1, limit=1
        $region48: #{custom-call.13} parent=46 // loop_pre_header
          _
        $region49: #{custom-call.13} parent=46 // loop_header
          %s1832 = sphi 0, %s1836
          %p1833 = scmp.ge.s32.totalorder %s1832, 1
          %s1837 = sphi [#allocation1], [#allocation1]
          %s1838 = sphi %s1, %s1
        $region50: #{custom-call.13} parent=46 // loop_header_branch
          %1835 = sbr.rel (%p1833) target = $region54
        $region51: #{custom-call.13} parent=46 // loop_body
          %v1839 = vld [vmem:[%s1837] sm:$0xff]
          %1840 = vst [vmem:[%s1838] sm:$0xff] %v1839
          %v1841 = vld [vmem:[%s1837 + $0x8] sm:$0xff]
          %1842 = vst [vmem:[%s1838 + $0x8] sm:$0xff] %v1841
          %v1843 = vld [vmem:[%s1837 + $0x10] sm:$0xff]
          %1844 = vst [vmem:[%s1838 + $0x10] sm:$0xff] %v1843
          %v1845 = vld [vmem:[%s1837 + $0x18] sm:$0xff]
          %1846 = vst [vmem:[%s1838 + $0x18] sm:$0xff] %v1845
          %v1847 = vld [vmem:[%s1837 + $0x20] sm:$0xff]
          %1848 = vst [vmem:[%s1838 + $0x20] sm:$0xff] %v1847
          %v1849 = vld [vmem:[%s1837 + $0x28] sm:$0xff]
          %1850 = vst [vmem:[%s1838 + $0x28] sm:$0xff] %v1849
          %v1851 = vld [vmem:[%s1837 + $0x30] sm:$0xff]
          %1852 = vst [vmem:[%s1838 + $0x30] sm:$0xff] %v1851
          %v1853 = vld [vmem:[%s1837 + $0x38] sm:$0xff]
          %1854 = vst [vmem:[%s1838 + $0x38] sm:$0xff] %v1853
        $region52: #{custom-call.13} parent=46 // loop_footer
          %s1836 = sadd.s32 1, %s1832
        $region53: #{custom-call.13} parent=46 // loop_footer_branch
          %1831 = sbr.rel target = $region49
        $region54: #{custom-call.13} parent=46 // loop_exit
          _
      $region47: #{custom-call.13} parent=38 // pred_fallthru
        _
    $region39: #{custom-call.13} parent=1 // pred_fallthru
      _
    %1883 = vnop

// kernel: custom-call.12
$region0: #{custom-call.12}
  %s0 = inlined_call_operand.vmem [shape: f32[1,64,64], index: 0, kind: input, shape index: {}]
  %s1 = inlined_call_operand.vmem [shape: f32[1,64,64], index: 1, kind: output, shape index: {}]
  $region1: #{custom-call.12} parent=0
    #allocation0 [shape = 'u8[32768]{0}', space=vmem, size = 0x8000, scoped, tag = 'operand span for operand 0']
    #allocation1 [shape = 'u8[32768]{0}', space=vmem, size = 0x8000, scoped, tag = 'operand span for operand 1']
    #allocation2 [shape = 'f32[64,64]{1,0}', space=vmem, size = 0x8000, scoped, tag = 'rescaled input a']
    // Predicated region
    $region2: #{custom-call.12} parent=1 // pred_check
      _
    $region3: #{custom-call.12} parent=1 // pred_check_branch
      %3 = sbr.rel (0) target = $region5
    $region4: #{custom-call.12} parent=1 // pred_region
      // Predicated region
      $region6: #{custom-call.12} parent=4 // pred_check
        _
      $region7: #{custom-call.12} parent=4 // pred_check_branch
        %5 = sbr.rel (0) target = $region9
      $region8: #{custom-call.12} parent=4 // pred_region
        // Predicated region
        $region21: #{custom-call.12} parent=8 // pred_check
          _
        $region22: #{custom-call.12} parent=8 // pred_check_branch
          %34 = sbr.rel (0) target = $region24
        $region23: #{custom-call.12} parent=8 // pred_region
          loop: start=0, step=1, limit=1
          $region25: #{custom-call.12} parent=23 // loop_pre_header
            _
          $region26: #{custom-call.12} parent=23 // loop_header
            %s36 = sphi 0, %s40
            %p37 = scmp.ge.s32.totalorder %s36, 1
            %s41 = sphi %s0, %s0
            %s42 = sphi [#allocation0], [#allocation0]
          $region27: #{custom-call.12} parent=23 // loop_header_branch
            %39 = sbr.rel (%p37) target = $region31
          $region28: #{custom-call.12} parent=23 // loop_body
            %v43 = vld [vmem:[%s41] sm:$0xff]
            %44 = vst [vmem:[%s42] sm:$0xff] %v43
            %v45 = vld [vmem:[%s41 + $0x8] sm:$0xff]
            %46 = vst [vmem:[%s42 + $0x8] sm:$0xff] %v45
            %v47 = vld [vmem:[%s41 + $0x10] sm:$0xff]
            %48 = vst [vmem:[%s42 + $0x10] sm:$0xff] %v47
            %v49 = vld [vmem:[%s41 + $0x18] sm:$0xff]
            %50 = vst [vmem:[%s42 + $0x18] sm:$0xff] %v49
            %v51 = vld [vmem:[%s41 + $0x20] sm:$0xff]
            %52 = vst [vmem:[%s42 + $0x20] sm:$0xff] %v51
            %v53 = vld [vmem:[%s41 + $0x28] sm:$0xff]
            %54 = vst [vmem:[%s42 + $0x28] sm:$0xff] %v53
            %v55 = vld [vmem:[%s41 + $0x30] sm:$0xff]
            %56 = vst [vmem:[%s42 + $0x30] sm:$0xff] %v55
            %v57 = vld [vmem:[%s41 + $0x38] sm:$0xff]
            %58 = vst [vmem:[%s42 + $0x38] sm:$0xff] %v57
          $region29: #{custom-call.12} parent=23 // loop_footer
            %s40 = sadd.s32 1, %s36
          $region30: #{custom-call.12} parent=23 // loop_footer_branch
            %35 = sbr.rel target = $region26
          $region31: #{custom-call.12} parent=23 // loop_exit
            _
        $region24: #{custom-call.12} parent=8 // pred_fallthru
          _
        // Predicated region
        $region32: #{custom-call.12} parent=8 // pred_check
          _
        $region33: #{custom-call.12} parent=8 // pred_check_branch
          %60 = sbr.rel target = $region35
        $region34: #{custom-call.12} parent=8 // pred_region
          _
        $region35: #{custom-call.12} parent=8 // pred_fallthru
          _
      $region9: #{custom-call.12} parent=4 // pred_fallthru
        _
      // Predicated region
      $region10: #{custom-call.12} parent=4 // pred_check
        _
      $region11: #{custom-call.12} parent=4 // pred_check_branch
        %7 = sbr.rel target = $region13
      $region12: #{custom-call.12} parent=4 // pred_region
        loop: start=0, step=1, limit=1
        $region14: #{custom-call.12} parent=12 // loop_pre_header
          _
        $region15: #{custom-call.12} parent=12 // loop_header
          %s10 = sphi 0, %s14
          %p11 = scmp.ge.s32.totalorder %s10, 1
          %s15 = sphi %s0, %s0
          %s16 = sphi [#allocation0], [#allocation0]
        $region16: #{custom-call.12} parent=12 // loop_header_branch
          %13 = sbr.rel (%p11) target = $region20
        $region17: #{custom-call.12} parent=12 // loop_body
          %v17 = vld [vmem:[%s15] sm:$0xff]
          %18 = vst [vmem:[%s16] sm:$0xff] %v17
          %v19 = vld [vmem:[%s15 + $0x8] sm:$0xff]
          %20 = vst [vmem:[%s16 + $0x8] sm:$0xff] %v19
          %v21 = vld [vmem:[%s15 + $0x10] sm:$0xff]
          %22 = vst [vmem:[%s16 + $0x10] sm:$0xff] %v21
          %v23 = vld [vmem:[%s15 + $0x18] sm:$0xff]
          %24 = vst [vmem:[%s16 + $0x18] sm:$0xff] %v23
          %v25 = vld [vmem:[%s15 + $0x20] sm:$0xff]
          %26 = vst [vmem:[%s16 + $0x20] sm:$0xff] %v25
          %v27 = vld [vmem:[%s15 + $0x28] sm:$0xff]
          %28 = vst [vmem:[%s16 + $0x28] sm:$0xff] %v27
          %v29 = vld [vmem:[%s15 + $0x30] sm:$0xff]
          %30 = vst [vmem:[%s16 + $0x30] sm:$0xff] %v29
          %v31 = vld [vmem:[%s15 + $0x38] sm:$0xff]
          %32 = vst [vmem:[%s16 + $0x38] sm:$0xff] %v31
        $region18: #{custom-call.12} parent=12 // loop_footer
          %s14 = sadd.s32 1, %s10
        $region19: #{custom-call.12} parent=12 // loop_footer_branch
          %9 = sbr.rel target = $region15
        $region20: #{custom-call.12} parent=12 // loop_exit
          _
      $region13: #{custom-call.12} parent=4 // pred_fallthru
        _
    $region5: #{custom-call.12} parent=1 // pred_fallthru
      _
    %61 = vnop
    %v62 = vlaneseq
    %v63 = vand.u32 %v62, 127
    %vm64 = vcmp.lt.s32.totalorder %v63, 64
    %v65 = vlaneseq
    %v66 = vshrl.u32 %v65, 7
    %vm68 = vcmp.eq.s32.totalorder %v66, %v63
    %v69 = vld [vmem:[#allocation0] sm:$0xff]
    %v70 = vsel %vm68, %v69, 0.0
    %71 = vadd.xlane.f32.xlu0 %v70
    %v72 = vpop.xlane.xlu0 %71
    %vm73 = vcmp.le.s32.totalorder %v66, %v63
    %vm74 = vmand %vm73, %vm64
    %v75 = vsel %vm74, %v69, 0.0
    %v76 = vrcp.pop %v72
    %v77 = vmul.f32 %v75, %v76
    %78 = vst [vmem:[#allocation2] sm:$0xff] %v77
    %s79 = scalar_lea.vmem [#allocation0], 8
    %s80 = scalar_lea.vmem [#allocation2], 8
    %v81 = vlaneseq
    %v82 = vshrl.u32 %v81, 7
    %v83 = vadd.s32 %v82, 8
    %vm84 = vcmp.eq.s32.totalorder %v83, %v63
    %v85 = vld [vmem:[%s79] sm:$0xff]
    %v86 = vsel %vm84, %v85, 0.0
    %87 = vadd.xlane.f32.xlu0 %v86
    %v88 = vpop.xlane.xlu0 %87
    %vm89 = vcmp.le.s32.totalorder %v83, %v63
    %vm90 = vmand %vm89, %vm64
    %v91 = vsel %vm90, %v85, 0.0
    %v92 = vrcp.pop %v88
    %v93 = vmul.f32 %v91, %v92
    %94 = vst [vmem:[%s80] sm:$0xff] %v93
    %s95 = scalar_lea.vmem [#allocation0], 16
    %s96 = scalar_lea.vmem [#allocation2], 16
    %v97 = vlaneseq
    %v98 = vshrl.u32 %v97, 7
    %v99 = vadd.s32 %v98, 16
    %vm100 = vcmp.eq.s32.totalorder %v99, %v63
    %v101 = vld [vmem:[%s95] sm:$0xff]
    %v102 = vsel %vm100, %v101, 0.0
    %103 = vadd.xlane.f32.xlu0 %v102
    %v104 = vpop.xlane.xlu0 %103
    %vm105 = vcmp.le.s32.totalorder %v99, %v63
    %vm106 = vmand %vm105, %vm64
    %v107 = vsel %vm106, %v101, 0.0
    %v108 = vrcp.pop %v104
    %v109 = vmul.f32 %v107, %v108
    %110 = vst [vmem:[%s96] sm:$0xff] %v109
    %s111 = scalar_lea.vmem [#allocation0], 24
    %s112 = scalar_lea.vmem [#allocation2], 24
    %v113 = vlaneseq
    %v114 = vshrl.u32 %v113, 7
    %v115 = vadd.s32 %v114, 24
    %vm116 = vcmp.eq.s32.totalorder %v115, %v63
    %v117 = vld [vmem:[%s111] sm:$0xff]
    %v118 = vsel %vm116, %v117, 0.0
    %119 = vadd.xlane.f32.xlu0 %v118
    %v120 = vpop.xlane.xlu0 %119
    %vm121 = vcmp.le.s32.totalorder %v115, %v63
    %vm122 = vmand %vm121, %vm64
    %v123 = vsel %vm122, %v117, 0.0
    %v124 = vrcp.pop %v120
    %v125 = vmul.f32 %v123, %v124
    %126 = vst [vmem:[%s112] sm:$0xff] %v125
    %s127 = scalar_lea.vmem [#allocation0], 32
    %s128 = scalar_lea.vmem [#allocation2], 32
    %v129 = vlaneseq
    %v130 = vshrl.u32 %v129, 7
    %v131 = vadd.s32 %v130, 32
    %vm132 = vcmp.eq.s32.totalorder %v131, %v63
    %v133 = vld [vmem:[%s127] sm:$0xff]
    %v134 = vsel %vm132, %v133, 0.0
    %135 = vadd.xlane.f32.xlu0 %v134
    %v136 = vpop.xlane.xlu0 %135
    %vm137 = vcmp.le.s32.totalorder %v131, %v63
    %vm138 = vmand %vm137, %vm64
    %v139 = vsel %vm138, %v133, 0.0
    %v140 = vrcp.pop %v136
    %v141 = vmul.f32 %v139, %v140
    %142 = vst [vmem:[%s128] sm:$0xff] %v141
    %s143 = scalar_lea.vmem [#allocation0], 40
    %s144 = scalar_lea.vmem [#allocation2], 40
    %v145 = vlaneseq
    %v146 = vshrl.u32 %v145, 7
    %v147 = vadd.s32 %v146, 40
    %vm148 = vcmp.eq.s32.totalorder %v147, %v63
    %v149 = vld [vmem:[%s143] sm:$0xff]
    %v150 = vsel %vm148, %v149, 0.0
    %151 = vadd.xlane.f32.xlu0 %v150
    %v152 = vpop.xlane.xlu0 %151
    %vm153 = vcmp.le.s32.totalorder %v147, %v63
    %vm154 = vmand %vm153, %vm64
    %v155 = vsel %vm154, %v149, 0.0
    %v156 = vrcp.pop %v152
    %v157 = vmul.f32 %v155, %v156
    %158 = vst [vmem:[%s144] sm:$0xff] %v157
    %s159 = scalar_lea.vmem [#allocation0], 48
    %s160 = scalar_lea.vmem [#allocation2], 48
    %v161 = vlaneseq
    %v162 = vshrl.u32 %v161, 7
    %v163 = vadd.s32 %v162, 48
    %vm164 = vcmp.eq.s32.totalorder %v163, %v63
    %v165 = vld [vmem:[%s159] sm:$0xff]
    %v166 = vsel %vm164, %v165, 0.0
    %167 = vadd.xlane.f32.xlu0 %v166
    %v168 = vpop.xlane.xlu0 %167
    %vm169 = vcmp.le.s32.totalorder %v163, %v63
    %vm170 = vmand %vm169, %vm64
    %v171 = vsel %vm170, %v165, 0.0
    %v172 = vrcp.pop %v168
    %v173 = vmul.f32 %v171, %v172
    %174 = vst [vmem:[%s160] sm:$0xff] %v173
    %s175 = scalar_lea.vmem [#allocation0], 56
    %s176 = scalar_lea.vmem [#allocation2], 56
    %v177 = vlaneseq
    %v178 = vshrl.u32 %v177, 7
    %v179 = vadd.s32 %v178, 56
    %vm180 = vcmp.eq.s32.totalorder %v179, %v63
    %v181 = vld [vmem:[%s175] sm:$0xff]
    %v182 = vsel %vm180, %v181, 0.0
    %183 = vadd.xlane.f32.xlu0 %v182
    %v184 = vpop.xlane.xlu0 %183
    %vm185 = vcmp.le.s32.totalorder %v179, %v63
    %vm186 = vmand %vm185, %vm64
    %v187 = vsel %vm186, %v181, 0.0
    %v188 = vrcp.pop %v184
    %v189 = vmul.f32 %v187, %v188
    %190 = vst [vmem:[%s176] sm:$0xff] %v189
    %v191 = vlaneseq
    %v192 = vand.u32 %v191, 127
    %v193 = vlaneseq
    %v194 = vshrl.u32 %v193, 7
    %vm196 = vcmp.eq.s32.totalorder %v192, %v194
    %v197 = vsel %vm196, -1.0, 0.0
    %v198 = vlaneseq
    %v199 = vand.u32 %v198, 127
    %v200 = vlaneseq
    %v201 = vshrl.u32 %v200, 7
    %v202 = vadd.s32 %v201, 8
    %vm203 = vcmp.eq.s32.totalorder %v199, %v202
    %v204 = vsel %vm203, -1.0, 0.0
    %v205 = vlaneseq
    %v206 = vand.u32 %v205, 127
    %v207 = vlaneseq
    %v208 = vshrl.u32 %v207, 7
    %v209 = vadd.s32 %v208, 16
    %vm210 = vcmp.eq.s32.totalorder %v206, %v209
    %v211 = vsel %vm210, -1.0, 0.0
    %v212 = vlaneseq
    %v213 = vand.u32 %v212, 127
    %v214 = vlaneseq
    %v215 = vshrl.u32 %v214, 7
    %v216 = vadd.s32 %v215, 24
    %vm217 = vcmp.eq.s32.totalorder %v213, %v216
    %v218 = vsel %vm217, -1.0, 0.0
    %v219 = vlaneseq
    %v220 = vand.u32 %v219, 127
    %v221 = vlaneseq
    %v222 = vshrl.u32 %v221, 7
    %v223 = vadd.s32 %v222, 32
    %vm224 = vcmp.eq.s32.totalorder %v220, %v223
    %v225 = vsel %vm224, -1.0, 0.0
    %v226 = vlaneseq
    %v227 = vand.u32 %v226, 127
    %v228 = vlaneseq
    %v229 = vshrl.u32 %v228, 7
    %v230 = vadd.s32 %v229, 40
    %vm231 = vcmp.eq.s32.totalorder %v227, %v230
    %v232 = vsel %vm231, -1.0, 0.0
    %v233 = vlaneseq
    %v234 = vand.u32 %v233, 127
    %v235 = vlaneseq
    %v236 = vshrl.u32 %v235, 7
    %v237 = vadd.s32 %v236, 48
    %vm238 = vcmp.eq.s32.totalorder %v234, %v237
    %v239 = vsel %vm238, -1.0, 0.0
    %v240 = vlaneseq
    %v241 = vand.u32 %v240, 127
    %v242 = vlaneseq
    %v243 = vshrl.u32 %v242, 7
    %v244 = vadd.s32 %v243, 56
    %vm245 = vcmp.eq.s32.totalorder %v241, %v244
    %v246 = vlaneseq
    %v247 = vand.u32 %v246, 127
    %vm248 = vcmp.eq.s32.totalorder %v247, 63
    %v249 = vsel %vm248, 1.0, -1.0
    %v250 = vsel %vm245, %v249, 0.0
    %s251 = scalar_lea.vmem [#allocation2], 62
    %v252 = vld [vmem:[%s251] ss:$0 sm:$0xff]
    %v253 = vxor.u32 %v252, 2147483648
    %v254 = vlaneseq
    %v255 = vand.u32 %v254, 127
    %vm256 = vcmp.eq.s32.totalorder %v255, 62
    %v257 = vmul.f32 %v253, %v250
    %258 = vadd.xlane.f32.xlu0 %v257
    %v259 = vpop.xlane.xlu0 %258
    %v260 = vsel %vm256, %v259, %v250
    %s261 = scalar_lea.vmem [#allocation2], 61
    %v262 = vld [vmem:[%s261] ss:$0 sm:$0xff]
    %v263 = vxor.u32 %v262, 2147483648
    %v264 = vlaneseq
    %v265 = vand.u32 %v264, 127
    %vm266 = vcmp.eq.s32.totalorder %v265, 61
    %v267 = vmul.f32 %v263, %v260
    %268 = vadd.xlane.f32.xlu0 %v267
    %v269 = vpop.xlane.xlu0 %268
    %v270 = vsel %vm266, %v269, %v260
    %s271 = scalar_lea.vmem [#allocation2], 60
    %v272 = vld [vmem:[%s271] ss:$0 sm:$0xff]
    %v273 = vxor.u32 %v272, 2147483648
    %v274 = vlaneseq
    %v275 = vand.u32 %v274, 127
    %vm276 = vcmp.eq.s32.totalorder %v275, 60
    %v277 = vmul.f32 %v273, %v270
    %278 = vadd.xlane.f32.xlu0 %v277
    %v279 = vpop.xlane.xlu0 %278
    %v280 = vsel %vm276, %v279, %v270
    %s281 = scalar_lea.vmem [#allocation2], 59
    %v282 = vld [vmem:[%s281] ss:$0 sm:$0xff]
    %v283 = vxor.u32 %v282, 2147483648
    %v284 = vlaneseq
    %v285 = vand.u32 %v284, 127
    %vm286 = vcmp.eq.s32.totalorder %v285, 59
    %v287 = vmul.f32 %v283, %v280
    %288 = vadd.xlane.f32.xlu0 %v287
    %v289 = vpop.xlane.xlu0 %288
    %v290 = vsel %vm286, %v289, %v280
    %s291 = scalar_lea.vmem [#allocation2], 58
    %v292 = vld [vmem:[%s291] ss:$0 sm:$0xff]
    %v293 = vxor.u32 %v292, 2147483648
    %v294 = vlaneseq
    %v295 = vand.u32 %v294, 127
    %vm296 = vcmp.eq.s32.totalorder %v295, 58
    %v297 = vmul.f32 %v293, %v290
    %298 = vadd.xlane.f32.xlu0 %v297
    %v299 = vpop.xlane.xlu0 %298
    %v300 = vsel %vm296, %v299, %v290
    %s301 = scalar_lea.vmem [#allocation2], 57
    %v302 = vld [vmem:[%s301] ss:$0 sm:$0xff]
    %v303 = vxor.u32 %v302, 2147483648
    %v304 = vlaneseq
    %v305 = vand.u32 %v304, 127
    %vm306 = vcmp.eq.s32.totalorder %v305, 57
    %v307 = vmul.f32 %v303, %v300
    %308 = vadd.xlane.f32.xlu0 %v307
    %v309 = vpop.xlane.xlu0 %308
    %v310 = vsel %vm306, %v309, %v300
    %s311 = scalar_lea.vmem [#allocation2], 56
    %v312 = vld [vmem:[%s311] ss:$0 sm:$0xff]
    %v313 = vxor.u32 %v312, 2147483648
    %v314 = vlaneseq
    %v315 = vand.u32 %v314, 127
    %vm316 = vcmp.eq.s32.totalorder %v315, 56
    %v317 = vmul.f32 %v313, %v310
    %318 = vadd.xlane.f32.xlu0 %v317
    %v319 = vpop.xlane.xlu0 %318
    %v320 = vsel %vm316, %v319, %v310
    %s321 = scalar_lea.vmem [#allocation2], 55
    %v322 = vld [vmem:[%s321] ss:$0 sm:$0xff]
    %v323 = vxor.u32 %v322, 2147483648
    %v324 = vlaneseq
    %v325 = vand.u32 %v324, 127
    %vm326 = vcmp.eq.s32.totalorder %v325, 55
    %v327 = vmul.f32 %v323, %v239
    %328 = vadd.xlane.f32.xlu0 %v327
    %v329 = vpop.xlane.xlu0 %328
    %v330 = vsel %vm326, %v329, %v239
    %v331 = vmul.f32 %v323, %v320
    %332 = vadd.xlane.f32.xlu0 %v331
    %v333 = vpop.xlane.xlu0 %332
    %v334 = vsel %vm326, %v333, %v320
    %s335 = scalar_lea.vmem [#allocation2], 54
    %v336 = vld [vmem:[%s335] ss:$0 sm:$0xff]
    %v337 = vxor.u32 %v336, 2147483648
    %v338 = vlaneseq
    %v339 = vand.u32 %v338, 127
    %vm340 = vcmp.eq.s32.totalorder %v339, 54
    %v341 = vmul.f32 %v337, %v330
    %342 = vadd.xlane.f32.xlu0 %v341
    %v343 = vpop.xlane.xlu0 %342
    %v344 = vsel %vm340, %v343, %v330
    %v345 = vmul.f32 %v337, %v334
    %346 = vadd.xlane.f32.xlu0 %v345
    %v347 = vpop.xlane.xlu0 %346
    %v348 = vsel %vm340, %v347, %v334
    %s349 = scalar_lea.vmem [#allocation2], 53
    %v350 = vld [vmem:[%s349] ss:$0 sm:$0xff]
    %v351 = vxor.u32 %v350, 2147483648
    %v352 = vlaneseq
    %v353 = vand.u32 %v352, 127
    %vm354 = vcmp.eq.s32.totalorder %v353, 53
    %v355 = vmul.f32 %v351, %v344
    %356 = vadd.xlane.f32.xlu0 %v355
    %v357 = vpop.xlane.xlu0 %356
    %v358 = vsel %vm354, %v357, %v344
    %v359 = vmul.f32 %v351, %v348
    %360 = vadd.xlane.f32.xlu0 %v359
    %v361 = vpop.xlane.xlu0 %360
    %v362 = vsel %vm354, %v361, %v348
    %s363 = scalar_lea.vmem [#allocation2], 52
    %v364 = vld [vmem:[%s363] ss:$0 sm:$0xff]
    %v365 = vxor.u32 %v364, 2147483648
    %v366 = vlaneseq
    %v367 = vand.u32 %v366, 127
    %vm368 = vcmp.eq.s32.totalorder %v367, 52
    %v369 = vmul.f32 %v365, %v358
    %370 = vadd.xlane.f32.xlu0 %v369
    %v371 = vpop.xlane.xlu0 %370
    %v372 = vsel %vm368, %v371, %v358
    %v373 = vmul.f32 %v365, %v362
    %374 = vadd.xlane.f32.xlu0 %v373
    %v375 = vpop.xlane.xlu0 %374
    %v376 = vsel %vm368, %v375, %v362
    %s377 = scalar_lea.vmem [#allocation2], 51
    %v378 = vld [vmem:[%s377] ss:$0 sm:$0xff]
    %v379 = vxor.u32 %v378, 2147483648
    %v380 = vlaneseq
    %v381 = vand.u32 %v380, 127
    %vm382 = vcmp.eq.s32.totalorder %v381, 51
    %v383 = vmul.f32 %v379, %v372
    %384 = vadd.xlane.f32.xlu0 %v383
    %v385 = vpop.xlane.xlu0 %384
    %v386 = vsel %vm382, %v385, %v372
    %v387 = vmul.f32 %v379, %v376
    %388 = vadd.xlane.f32.xlu0 %v387
    %v389 = vpop.xlane.xlu0 %388
    %v390 = vsel %vm382, %v389, %v376
    %s391 = scalar_lea.vmem [#allocation2], 50
    %v392 = vld [vmem:[%s391] ss:$0 sm:$0xff]
    %v393 = vxor.u32 %v392, 2147483648
    %v394 = vlaneseq
    %v395 = vand.u32 %v394, 127
    %vm396 = vcmp.eq.s32.totalorder %v395, 50
    %v397 = vmul.f32 %v393, %v386
    %398 = vadd.xlane.f32.xlu0 %v397
    %v399 = vpop.xlane.xlu0 %398
    %v400 = vsel %vm396, %v399, %v386
    %v401 = vmul.f32 %v393, %v390
    %402 = vadd.xlane.f32.xlu0 %v401
    %v403 = vpop.xlane.xlu0 %402
    %v404 = vsel %vm396, %v403, %v390
    %s405 = scalar_lea.vmem [#allocation2], 49
    %v406 = vld [vmem:[%s405] ss:$0 sm:$0xff]
    %v407 = vxor.u32 %v406, 2147483648
    %v408 = vlaneseq
    %v409 = vand.u32 %v408, 127
    %vm410 = vcmp.eq.s32.totalorder %v409, 49
    %v411 = vmul.f32 %v407, %v400
    %412 = vadd.xlane.f32.xlu0 %v411
    %v413 = vpop.xlane.xlu0 %412
    %v414 = vsel %vm410, %v413, %v400
    %v415 = vmul.f32 %v407, %v404
    %416 = vadd.xlane.f32.xlu0 %v415
    %v417 = vpop.xlane.xlu0 %416
    %v418 = vsel %vm410, %v417, %v404
    %s419 = scalar_lea.vmem [#allocation2], 48
    %v420 = vld [vmem:[%s419] ss:$0 sm:$0xff]
    %v421 = vxor.u32 %v420, 2147483648
    %v422 = vlaneseq
    %v423 = vand.u32 %v422, 127
    %vm424 = vcmp.eq.s32.totalorder %v423, 48
    %v425 = vmul.f32 %v421, %v414
    %426 = vadd.xlane.f32.xlu0 %v425
    %v427 = vpop.xlane.xlu0 %426
    %v428 = vsel %vm424, %v427, %v414
    %v429 = vmul.f32 %v421, %v418
    %430 = vadd.xlane.f32.xlu0 %v429
    %v431 = vpop.xlane.xlu0 %430
    %v432 = vsel %vm424, %v431, %v418
    %s433 = scalar_lea.vmem [#allocation2], 47
    %v434 = vld [vmem:[%s433] ss:$0 sm:$0xff]
    %v435 = vxor.u32 %v434, 2147483648
    %v436 = vlaneseq
    %v437 = vand.u32 %v436, 127
    %vm438 = vcmp.eq.s32.totalorder %v437, 47
    %v439 = vmul.f32 %v435, %v232
    %440 = vadd.xlane.f32.xlu0 %v439
    %v441 = vpop.xlane.xlu0 %440
    %v442 = vsel %vm438, %v441, %v232
    %v443 = vmul.f32 %v435, %v428
    %444 = vadd.xlane.f32.xlu0 %v443
    %v445 = vpop.xlane.xlu0 %444
    %v446 = vsel %vm438, %v445, %v428
    %v447 = vmul.f32 %v435, %v432
    %448 = vadd.xlane.f32.xlu0 %v447
    %v449 = vpop.xlane.xlu0 %448
    %v450 = vsel %vm438, %v449, %v432
    %s451 = scalar_lea.vmem [#allocation2], 46
    %v452 = vld [vmem:[%s451] ss:$0 sm:$0xff]
    %v453 = vxor.u32 %v452, 2147483648
    %v454 = vlaneseq
    %v455 = vand.u32 %v454, 127
    %vm456 = vcmp.eq.s32.totalorder %v455, 46
    %v457 = vmul.f32 %v453, %v442
    %458 = vadd.xlane.f32.xlu0 %v457
    %v459 = vpop.xlane.xlu0 %458
    %v460 = vsel %vm456, %v459, %v442
    %v461 = vmul.f32 %v453, %v446
    %462 = vadd.xlane.f32.xlu0 %v461
    %v463 = vpop.xlane.xlu0 %462
    %v464 = vsel %vm456, %v463, %v446
    %v465 = vmul.f32 %v453, %v450
    %466 = vadd.xlane.f32.xlu0 %v465
    %v467 = vpop.xlane.xlu0 %466
    %v468 = vsel %vm456, %v467, %v450
    %s469 = scalar_lea.vmem [#allocation2], 45
    %v470 = vld [vmem:[%s469] ss:$0 sm:$0xff]
    %v471 = vxor.u32 %v470, 2147483648
    %v472 = vlaneseq
    %v473 = vand.u32 %v472, 127
    %vm474 = vcmp.eq.s32.totalorder %v473, 45
    %v475 = vmul.f32 %v471, %v460
    %476 = vadd.xlane.f32.xlu0 %v475
    %v477 = vpop.xlane.xlu0 %476
    %v478 = vsel %vm474, %v477, %v460
    %v479 = vmul.f32 %v471, %v464
    %480 = vadd.xlane.f32.xlu0 %v479
    %v481 = vpop.xlane.xlu0 %480
    %v482 = vsel %vm474, %v481, %v464
    %v483 = vmul.f32 %v471, %v468
    %484 = vadd.xlane.f32.xlu0 %v483
    %v485 = vpop.xlane.xlu0 %484
    %v486 = vsel %vm474, %v485, %v468
    %s487 = scalar_lea.vmem [#allocation2], 44
    %v488 = vld [vmem:[%s487] ss:$0 sm:$0xff]
    %v489 = vxor.u32 %v488, 2147483648
    %v490 = vlaneseq
    %v491 = vand.u32 %v490, 127
    %vm492 = vcmp.eq.s32.totalorder %v491, 44
    %v493 = vmul.f32 %v489, %v478
    %494 = vadd.xlane.f32.xlu0 %v493
    %v495 = vpop.xlane.xlu0 %494
    %v496 = vsel %vm492, %v495, %v478
    %v497 = vmul.f32 %v489, %v482
    %498 = vadd.xlane.f32.xlu0 %v497
    %v499 = vpop.xlane.xlu0 %498
    %v500 = vsel %vm492, %v499, %v482
    %v501 = vmul.f32 %v489, %v486
    %502 = vadd.xlane.f32.xlu0 %v501
    %v503 = vpop.xlane.xlu0 %502
    %v504 = vsel %vm492, %v503, %v486
    %s505 = scalar_lea.vmem [#allocation2], 43
    %v506 = vld [vmem:[%s505] ss:$0 sm:$0xff]
    %v507 = vxor.u32 %v506, 2147483648
    %v508 = vlaneseq
    %v509 = vand.u32 %v508, 127
    %vm510 = vcmp.eq.s32.totalorder %v509, 43
    %v511 = vmul.f32 %v507, %v496
    %512 = vadd.xlane.f32.xlu0 %v511
    %v513 = vpop.xlane.xlu0 %512
    %v514 = vsel %vm510, %v513, %v496
    %v515 = vmul.f32 %v507, %v500
    %516 = vadd.xlane.f32.xlu0 %v515
    %v517 = vpop.xlane.xlu0 %516
    %v518 = vsel %vm510, %v517, %v500
    %v519 = vmul.f32 %v507, %v504
    %520 = vadd.xlane.f32.xlu0 %v519
    %v521 = vpop.xlane.xlu0 %520
    %v522 = vsel %vm510, %v521, %v504
    %s523 = scalar_lea.vmem [#allocation2], 42
    %v524 = vld [vmem:[%s523] ss:$0 sm:$0xff]
    %v525 = vxor.u32 %v524, 2147483648
    %v526 = vlaneseq
    %v527 = vand.u32 %v526, 127
    %vm528 = vcmp.eq.s32.totalorder %v527, 42
    %v529 = vmul.f32 %v525, %v514
    %530 = vadd.xlane.f32.xlu0 %v529
    %v531 = vpop.xlane.xlu0 %530
    %v532 = vsel %vm528, %v531, %v514
    %v533 = vmul.f32 %v525, %v518
    %534 = vadd.xlane.f32.xlu0 %v533
    %v535 = vpop.xlane.xlu0 %534
    %v536 = vsel %vm528, %v535, %v518
    %v537 = vmul.f32 %v525, %v522
    %538 = vadd.xlane.f32.xlu0 %v537
    %v539 = vpop.xlane.xlu0 %538
    %v540 = vsel %vm528, %v539, %v522
    %s541 = scalar_lea.vmem [#allocation2], 41
    %v542 = vld [vmem:[%s541] ss:$0 sm:$0xff]
    %v543 = vxor.u32 %v542, 2147483648
    %v544 = vlaneseq
    %v545 = vand.u32 %v544, 127
    %vm546 = vcmp.eq.s32.totalorder %v545, 41
    %v547 = vmul.f32 %v543, %v532
    %548 = vadd.xlane.f32.xlu0 %v547
    %v549 = vpop.xlane.xlu0 %548
    %v550 = vsel %vm546, %v549, %v532
    %v551 = vmul.f32 %v543, %v536
    %552 = vadd.xlane.f32.xlu0 %v551
    %v553 = vpop.xlane.xlu0 %552
    %v554 = vsel %vm546, %v553, %v536
    %v555 = vmul.f32 %v543, %v540
    %556 = vadd.xlane.f32.xlu0 %v555
    %v557 = vpop.xlane.xlu0 %556
    %v558 = vsel %vm546, %v557, %v540
    %s559 = scalar_lea.vmem [#allocation2], 40
    %v560 = vld [vmem:[%s559] ss:$0 sm:$0xff]
    %v561 = vxor.u32 %v560, 2147483648
    %v562 = vlaneseq
    %v563 = vand.u32 %v562, 127
    %vm564 = vcmp.eq.s32.totalorder %v563, 40
    %v565 = vmul.f32 %v561, %v550
    %566 = vadd.xlane.f32.xlu0 %v565
    %v567 = vpop.xlane.xlu0 %566
    %v568 = vsel %vm564, %v567, %v550
    %v569 = vmul.f32 %v561, %v554
    %570 = vadd.xlane.f32.xlu0 %v569
    %v571 = vpop.xlane.xlu0 %570
    %v572 = vsel %vm564, %v571, %v554
    %v573 = vmul.f32 %v561, %v558
    %574 = vadd.xlane.f32.xlu0 %v573
    %v575 = vpop.xlane.xlu0 %574
    %v576 = vsel %vm564, %v575, %v558
    %s577 = scalar_lea.vmem [#allocation2], 39
    %v578 = vld [vmem:[%s577] ss:$0 sm:$0xff]
    %v579 = vxor.u32 %v578, 2147483648
    %v580 = vlaneseq
    %v581 = vand.u32 %v580, 127
    %vm582 = vcmp.eq.s32.totalorder %v581, 39
    %v583 = vmul.f32 %v579, %v225
    %584 = vadd.xlane.f32.xlu0 %v583
    %v585 = vpop.xlane.xlu0 %584
    %v586 = vsel %vm582, %v585, %v225
    %v587 = vmul.f32 %v579, %v568
    %588 = vadd.xlane.f32.xlu0 %v587
    %v589 = vpop.xlane.xlu0 %588
    %v590 = vsel %vm582, %v589, %v568
    %v591 = vmul.f32 %v579, %v572
    %592 = vadd.xlane.f32.xlu0 %v591
    %v593 = vpop.xlane.xlu0 %592
    %v594 = vsel %vm582, %v593, %v572
    %v595 = vmul.f32 %v579, %v576
    %596 = vadd.xlane.f32.xlu0 %v595
    %v597 = vpop.xlane.xlu0 %596
    %v598 = vsel %vm582, %v597, %v576
    %s599 = scalar_lea.vmem [#allocation2], 38
    %v600 = vld [vmem:[%s599] ss:$0 sm:$0xff]
    %v601 = vxor.u32 %v600, 2147483648
    %v602 = vlaneseq
    %v603 = vand.u32 %v602, 127
    %vm604 = vcmp.eq.s32.totalorder %v603, 38
    %v605 = vmul.f32 %v601, %v586
    %606 = vadd.xlane.f32.xlu0 %v605
    %v607 = vpop.xlane.xlu0 %606
    %v608 = vsel %vm604, %v607, %v586
    %v609 = vmul.f32 %v601, %v590
    %610 = vadd.xlane.f32.xlu0 %v609
    %v611 = vpop.xlane.xlu0 %610
    %v612 = vsel %vm604, %v611, %v590
    %v613 = vmul.f32 %v601, %v594
    %614 = vadd.xlane.f32.xlu0 %v613
    %v615 = vpop.xlane.xlu0 %614
    %v616 = vsel %vm604, %v615, %v594
    %v617 = vmul.f32 %v601, %v598
    %618 = vadd.xlane.f32.xlu0 %v617
    %v619 = vpop.xlane.xlu0 %618
    %v620 = vsel %vm604, %v619, %v598
    %s621 = scalar_lea.vmem [#allocation2], 37
    %v622 = vld [vmem:[%s621] ss:$0 sm:$0xff]
    %v623 = vxor.u32 %v622, 2147483648
    %v624 = vlaneseq
    %v625 = vand.u32 %v624, 127
    %vm626 = vcmp.eq.s32.totalorder %v625, 37
    %v627 = vmul.f32 %v623, %v608
    %628 = vadd.xlane.f32.xlu0 %v627
    %v629 = vpop.xlane.xlu0 %628
    %v630 = vsel %vm626, %v629, %v608
    %v631 = vmul.f32 %v623, %v612
    %632 = vadd.xlane.f32.xlu0 %v631
    %v633 = vpop.xlane.xlu0 %632
    %v634 = vsel %vm626, %v633, %v612
    %v635 = vmul.f32 %v623, %v616
    %636 = vadd.xlane.f32.xlu0 %v635
    %v637 = vpop.xlane.xlu0 %636
    %v638 = vsel %vm626, %v637, %v616
    %v639 = vmul.f32 %v623, %v620
    %640 = vadd.xlane.f32.xlu0 %v639
    %v641 = vpop.xlane.xlu0 %640
    %v642 = vsel %vm626, %v641, %v620
    %s643 = scalar_lea.vmem [#allocation2], 36
    %v644 = vld [vmem:[%s643] ss:$0 sm:$0xff]
    %v645 = vxor.u32 %v644, 2147483648
    %v646 = vlaneseq
    %v647 = vand.u32 %v646, 127
    %vm648 = vcmp.eq.s32.totalorder %v647, 36
    %v649 = vmul.f32 %v645, %v630
    %650 = vadd.xlane.f32.xlu0 %v649
    %v651 = vpop.xlane.xlu0 %650
    %v652 = vsel %vm648, %v651, %v630
    %v653 = vmul.f32 %v645, %v634
    %654 = vadd.xlane.f32.xlu0 %v653
    %v655 = vpop.xlane.xlu0 %654
    %v656 = vsel %vm648, %v655, %v634
    %v657 = vmul.f32 %v645, %v638
    %658 = vadd.xlane.f32.xlu0 %v657
    %v659 = vpop.xlane.xlu0 %658
    %v660 = vsel %vm648, %v659, %v638
    %v661 = vmul.f32 %v645, %v642
    %662 = vadd.xlane.f32.xlu0 %v661
    %v663 = vpop.xlane.xlu0 %662
    %v664 = vsel %vm648, %v663, %v642
    %s665 = scalar_lea.vmem [#allocation2], 35
    %v666 = vld [vmem:[%s665] ss:$0 sm:$0xff]
    %v667 = vxor.u32 %v666, 2147483648
    %v668 = vlaneseq
    %v669 = vand.u32 %v668, 127
    %vm670 = vcmp.eq.s32.totalorder %v669, 35
    %v671 = vmul.f32 %v667, %v652
    %672 = vadd.xlane.f32.xlu0 %v671
    %v673 = vpop.xlane.xlu0 %672
    %v674 = vsel %vm670, %v673, %v652
    %v675 = vmul.f32 %v667, %v656
    %676 = vadd.xlane.f32.xlu0 %v675
    %v677 = vpop.xlane.xlu0 %676
    %v678 = vsel %vm670, %v677, %v656
    %v679 = vmul.f32 %v667, %v660
    %680 = vadd.xlane.f32.xlu0 %v679
    %v681 = vpop.xlane.xlu0 %680
    %v682 = vsel %vm670, %v681, %v660
    %v683 = vmul.f32 %v667, %v664
    %684 = vadd.xlane.f32.xlu0 %v683
    %v685 = vpop.xlane.xlu0 %684
    %v686 = vsel %vm670, %v685, %v664
    %s687 = scalar_lea.vmem [#allocation2], 34
    %v688 = vld [vmem:[%s687] ss:$0 sm:$0xff]
    %v689 = vxor.u32 %v688, 2147483648
    %v690 = vlaneseq
    %v691 = vand.u32 %v690, 127
    %vm692 = vcmp.eq.s32.totalorder %v691, 34
    %v693 = vmul.f32 %v689, %v674
    %694 = vadd.xlane.f32.xlu0 %v693
    %v695 = vpop.xlane.xlu0 %694
    %v696 = vsel %vm692, %v695, %v674
    %v697 = vmul.f32 %v689, %v678
    %698 = vadd.xlane.f32.xlu0 %v697
    %v699 = vpop.xlane.xlu0 %698
    %v700 = vsel %vm692, %v699, %v678
    %v701 = vmul.f32 %v689, %v682
    %702 = vadd.xlane.f32.xlu0 %v701
    %v703 = vpop.xlane.xlu0 %702
    %v704 = vsel %vm692, %v703, %v682
    %v705 = vmul.f32 %v689, %v686
    %706 = vadd.xlane.f32.xlu0 %v705
    %v707 = vpop.xlane.xlu0 %706
    %v708 = vsel %vm692, %v707, %v686
    %s709 = scalar_lea.vmem [#allocation2], 33
    %v710 = vld [vmem:[%s709] ss:$0 sm:$0xff]
    %v711 = vxor.u32 %v710, 2147483648
    %v712 = vlaneseq
    %v713 = vand.u32 %v712, 127
    %vm714 = vcmp.eq.s32.totalorder %v713, 33
    %v715 = vmul.f32 %v711, %v696
    %716 = vadd.xlane.f32.xlu0 %v715
    %v717 = vpop.xlane.xlu0 %716
    %v718 = vsel %vm714, %v717, %v696
    %v719 = vmul.f32 %v711, %v700
    %720 = vadd.xlane.f32.xlu0 %v719
    %v721 = vpop.xlane.xlu0 %720
    %v722 = vsel %vm714, %v721, %v700
    %v723 = vmul.f32 %v711, %v704
    %724 = vadd.xlane.f32.xlu0 %v723
    %v725 = vpop.xlane.xlu0 %724
    %v726 = vsel %vm714, %v725, %v704
    %v727 = vmul.f32 %v711, %v708
    %728 = vadd.xlane.f32.xlu0 %v727
    %v729 = vpop.xlane.xlu0 %728
    %v730 = vsel %vm714, %v729, %v708
    %s731 = scalar_lea.vmem [#allocation2], 32
    %v732 = vld [vmem:[%s731] ss:$0 sm:$0xff]
    %v733 = vxor.u32 %v732, 2147483648
    %v734 = vlaneseq
    %v735 = vand.u32 %v734, 127
    %vm736 = vcmp.eq.s32.totalorder %v735, 32
    %v737 = vmul.f32 %v733, %v718
    %738 = vadd.xlane.f32.xlu0 %v737
    %v739 = vpop.xlane.xlu0 %738
    %v740 = vsel %vm736, %v739, %v718
    %v741 = vmul.f32 %v733, %v722
    %742 = vadd.xlane.f32.xlu0 %v741
    %v743 = vpop.xlane.xlu0 %742
    %v744 = vsel %vm736, %v743, %v722
    %v745 = vmul.f32 %v733, %v726
    %746 = vadd.xlane.f32.xlu0 %v745
    %v747 = vpop.xlane.xlu0 %746
    %v748 = vsel %vm736, %v747, %v726
    %v749 = vmul.f32 %v733, %v730
    %750 = vadd.xlane.f32.xlu0 %v749
    %v751 = vpop.xlane.xlu0 %750
    %v752 = vsel %vm736, %v751, %v730
    %s753 = scalar_lea.vmem [#allocation2], 31
    %v754 = vld [vmem:[%s753] ss:$0 sm:$0xff]
    %v755 = vxor.u32 %v754, 2147483648
    %v756 = vlaneseq
    %v757 = vand.u32 %v756, 127
    %vm758 = vcmp.eq.s32.totalorder %v757, 31
    %v759 = vmul.f32 %v755, %v218
    %760 = vadd.xlane.f32.xlu0 %v759
    %v761 = vpop.xlane.xlu0 %760
    %v762 = vsel %vm758, %v761, %v218
    %v763 = vmul.f32 %v755, %v740
    %764 = vadd.xlane.f32.xlu0 %v763
    %v765 = vpop.xlane.xlu0 %764
    %v766 = vsel %vm758, %v765, %v740
    %v767 = vmul.f32 %v755, %v744
    %768 = vadd.xlane.f32.xlu0 %v767
    %v769 = vpop.xlane.xlu0 %768
    %v770 = vsel %vm758, %v769, %v744
    %v771 = vmul.f32 %v755, %v748
    %772 = vadd.xlane.f32.xlu0 %v771
    %v773 = vpop.xlane.xlu0 %772
    %v774 = vsel %vm758, %v773, %v748
    %v775 = vmul.f32 %v755, %v752
    %776 = vadd.xlane.f32.xlu0 %v775
    %v777 = vpop.xlane.xlu0 %776
    %v778 = vsel %vm758, %v777, %v752
    %s779 = scalar_lea.vmem [#allocation2], 30
    %v780 = vld [vmem:[%s779] ss:$0 sm:$0xff]
    %v781 = vxor.u32 %v780, 2147483648
    %v782 = vlaneseq
    %v783 = vand.u32 %v782, 127
    %vm784 = vcmp.eq.s32.totalorder %v783, 30
    %v785 = vmul.f32 %v781, %v762
    %786 = vadd.xlane.f32.xlu0 %v785
    %v787 = vpop.xlane.xlu0 %786
    %v788 = vsel %vm784, %v787, %v762
    %v789 = vmul.f32 %v781, %v766
    %790 = vadd.xlane.f32.xlu0 %v789
    %v791 = vpop.xlane.xlu0 %790
    %v792 = vsel %vm784, %v791, %v766
    %v793 = vmul.f32 %v781, %v770
    %794 = vadd.xlane.f32.xlu0 %v793
    %v795 = vpop.xlane.xlu0 %794
    %v796 = vsel %vm784, %v795, %v770
    %v797 = vmul.f32 %v781, %v774
    %798 = vadd.xlane.f32.xlu0 %v797
    %v799 = vpop.xlane.xlu0 %798
    %v800 = vsel %vm784, %v799, %v774
    %v801 = vmul.f32 %v781, %v778
    %802 = vadd.xlane.f32.xlu0 %v801
    %v803 = vpop.xlane.xlu0 %802
    %v804 = vsel %vm784, %v803, %v778
    %s805 = scalar_lea.vmem [#allocation2], 29
    %v806 = vld [vmem:[%s805] ss:$0 sm:$0xff]
    %v807 = vxor.u32 %v806, 2147483648
    %v808 = vlaneseq
    %v809 = vand.u32 %v808, 127
    %vm810 = vcmp.eq.s32.totalorder %v809, 29
    %v811 = vmul.f32 %v807, %v788
    %812 = vadd.xlane.f32.xlu0 %v811
    %v813 = vpop.xlane.xlu0 %812
    %v814 = vsel %vm810, %v813, %v788
    %v815 = vmul.f32 %v807, %v792
    %816 = vadd.xlane.f32.xlu0 %v815
    %v817 = vpop.xlane.xlu0 %816
    %v818 = vsel %vm810, %v817, %v792
    %v819 = vmul.f32 %v807, %v796
    %820 = vadd.xlane.f32.xlu0 %v819
    %v821 = vpop.xlane.xlu0 %820
    %v822 = vsel %vm810, %v821, %v796
    %v823 = vmul.f32 %v807, %v800
    %824 = vadd.xlane.f32.xlu0 %v823
    %v825 = vpop.xlane.xlu0 %824
    %v826 = vsel %vm810, %v825, %v800
    %v827 = vmul.f32 %v807, %v804
    %828 = vadd.xlane.f32.xlu0 %v827
    %v829 = vpop.xlane.xlu0 %828
    %v830 = vsel %vm810, %v829, %v804
    %s831 = scalar_lea.vmem [#allocation2], 28
    %v832 = vld [vmem:[%s831] ss:$0 sm:$0xff]
    %v833 = vxor.u32 %v832, 2147483648
    %v834 = vlaneseq
    %v835 = vand.u32 %v834, 127
    %vm836 = vcmp.eq.s32.totalorder %v835, 28
    %v837 = vmul.f32 %v833, %v814
    %838 = vadd.xlane.f32.xlu0 %v837
    %v839 = vpop.xlane.xlu0 %838
    %v840 = vsel %vm836, %v839, %v814
    %v841 = vmul.f32 %v833, %v818
    %842 = vadd.xlane.f32.xlu0 %v841
    %v843 = vpop.xlane.xlu0 %842
    %v844 = vsel %vm836, %v843, %v818
    %v845 = vmul.f32 %v833, %v822
    %846 = vadd.xlane.f32.xlu0 %v845
    %v847 = vpop.xlane.xlu0 %846
    %v848 = vsel %vm836, %v847, %v822
    %v849 = vmul.f32 %v833, %v826
    %850 = vadd.xlane.f32.xlu0 %v849
    %v851 = vpop.xlane.xlu0 %850
    %v852 = vsel %vm836, %v851, %v826
    %v853 = vmul.f32 %v833, %v830
    %854 = vadd.xlane.f32.xlu0 %v853
    %v855 = vpop.xlane.xlu0 %854
    %v856 = vsel %vm836, %v855, %v830
    %s857 = scalar_lea.vmem [#allocation2], 27
    %v858 = vld [vmem:[%s857] ss:$0 sm:$0xff]
    %v859 = vxor.u32 %v858, 2147483648
    %v860 = vlaneseq
    %v861 = vand.u32 %v860, 127
    %vm862 = vcmp.eq.s32.totalorder %v861, 27
    %v863 = vmul.f32 %v859, %v840
    %864 = vadd.xlane.f32.xlu0 %v863
    %v865 = vpop.xlane.xlu0 %864
    %v866 = vsel %vm862, %v865, %v840
    %v867 = vmul.f32 %v859, %v844
    %868 = vadd.xlane.f32.xlu0 %v867
    %v869 = vpop.xlane.xlu0 %868
    %v870 = vsel %vm862, %v869, %v844
    %v871 = vmul.f32 %v859, %v848
    %872 = vadd.xlane.f32.xlu0 %v871
    %v873 = vpop.xlane.xlu0 %872
    %v874 = vsel %vm862, %v873, %v848
    %v875 = vmul.f32 %v859, %v852
    %876 = vadd.xlane.f32.xlu0 %v875
    %v877 = vpop.xlane.xlu0 %876
    %v878 = vsel %vm862, %v877, %v852
    %v879 = vmul.f32 %v859, %v856
    %880 = vadd.xlane.f32.xlu0 %v879
    %v881 = vpop.xlane.xlu0 %880
    %v882 = vsel %vm862, %v881, %v856
    %s883 = scalar_lea.vmem [#allocation2], 26
    %v884 = vld [vmem:[%s883] ss:$0 sm:$0xff]
    %v885 = vxor.u32 %v884, 2147483648
    %v886 = vlaneseq
    %v887 = vand.u32 %v886, 127
    %vm888 = vcmp.eq.s32.totalorder %v887, 26
    %v889 = vmul.f32 %v885, %v866
    %890 = vadd.xlane.f32.xlu0 %v889
    %v891 = vpop.xlane.xlu0 %890
    %v892 = vsel %vm888, %v891, %v866
    %v893 = vmul.f32 %v885, %v870
    %894 = vadd.xlane.f32.xlu0 %v893
    %v895 = vpop.xlane.xlu0 %894
    %v896 = vsel %vm888, %v895, %v870
    %v897 = vmul.f32 %v885, %v874
    %898 = vadd.xlane.f32.xlu0 %v897
    %v899 = vpop.xlane.xlu0 %898
    %v900 = vsel %vm888, %v899, %v874
    %v901 = vmul.f32 %v885, %v878
    %902 = vadd.xlane.f32.xlu0 %v901
    %v903 = vpop.xlane.xlu0 %902
    %v904 = vsel %vm888, %v903, %v878
    %v905 = vmul.f32 %v885, %v882
    %906 = vadd.xlane.f32.xlu0 %v905
    %v907 = vpop.xlane.xlu0 %906
    %v908 = vsel %vm888, %v907, %v882
    %s909 = scalar_lea.vmem [#allocation2], 25
    %v910 = vld [vmem:[%s909] ss:$0 sm:$0xff]
    %v911 = vxor.u32 %v910, 2147483648
    %v912 = vlaneseq
    %v913 = vand.u32 %v912, 127
    %vm914 = vcmp.eq.s32.totalorder %v913, 25
    %v915 = vmul.f32 %v911, %v892
    %916 = vadd.xlane.f32.xlu0 %v915
    %v917 = vpop.xlane.xlu0 %916
    %v918 = vsel %vm914, %v917, %v892
    %v919 = vmul.f32 %v911, %v896
    %920 = vadd.xlane.f32.xlu0 %v919
    %v921 = vpop.xlane.xlu0 %920
    %v922 = vsel %vm914, %v921, %v896
    %v923 = vmul.f32 %v911, %v900
    %924 = vadd.xlane.f32.xlu0 %v923
    %v925 = vpop.xlane.xlu0 %924
    %v926 = vsel %vm914, %v925, %v900
    %v927 = vmul.f32 %v911, %v904
    %928 = vadd.xlane.f32.xlu0 %v927
    %v929 = vpop.xlane.xlu0 %928
    %v930 = vsel %vm914, %v929, %v904
    %v931 = vmul.f32 %v911, %v908
    %932 = vadd.xlane.f32.xlu0 %v931
    %v933 = vpop.xlane.xlu0 %932
    %v934 = vsel %vm914, %v933, %v908
    %s935 = scalar_lea.vmem [#allocation2], 24
    %v936 = vld [vmem:[%s935] ss:$0 sm:$0xff]
    %v937 = vxor.u32 %v936, 2147483648
    %v938 = vlaneseq
    %v939 = vand.u32 %v938, 127
    %vm940 = vcmp.eq.s32.totalorder %v939, 24
    %v941 = vmul.f32 %v937, %v918
    %942 = vadd.xlane.f32.xlu0 %v941
    %v943 = vpop.xlane.xlu0 %942
    %v944 = vsel %vm940, %v943, %v918
    %v945 = vmul.f32 %v937, %v922
    %946 = vadd.xlane.f32.xlu0 %v945
    %v947 = vpop.xlane.xlu0 %946
    %v948 = vsel %vm940, %v947, %v922
    %v949 = vmul.f32 %v937, %v926
    %950 = vadd.xlane.f32.xlu0 %v949
    %v951 = vpop.xlane.xlu0 %950
    %v952 = vsel %vm940, %v951, %v926
    %v953 = vmul.f32 %v937, %v930
    %954 = vadd.xlane.f32.xlu0 %v953
    %v955 = vpop.xlane.xlu0 %954
    %v956 = vsel %vm940, %v955, %v930
    %v957 = vmul.f32 %v937, %v934
    %958 = vadd.xlane.f32.xlu0 %v957
    %v959 = vpop.xlane.xlu0 %958
    %v960 = vsel %vm940, %v959, %v934
    %s961 = scalar_lea.vmem [#allocation2], 23
    %v962 = vld [vmem:[%s961] ss:$0 sm:$0xff]
    %v963 = vxor.u32 %v962, 2147483648
    %v964 = vlaneseq
    %v965 = vand.u32 %v964, 127
    %vm966 = vcmp.eq.s32.totalorder %v965, 23
    %v967 = vmul.f32 %v963, %v211
    %968 = vadd.xlane.f32.xlu0 %v967
    %v969 = vpop.xlane.xlu0 %968
    %v970 = vsel %vm966, %v969, %v211
    %v971 = vmul.f32 %v963, %v944
    %972 = vadd.xlane.f32.xlu0 %v971
    %v973 = vpop.xlane.xlu0 %972
    %v974 = vsel %vm966, %v973, %v944
    %v975 = vmul.f32 %v963, %v948
    %976 = vadd.xlane.f32.xlu0 %v975
    %v977 = vpop.xlane.xlu0 %976
    %v978 = vsel %vm966, %v977, %v948
    %v979 = vmul.f32 %v963, %v952
    %980 = vadd.xlane.f32.xlu0 %v979
    %v981 = vpop.xlane.xlu0 %980
    %v982 = vsel %vm966, %v981, %v952
    %v983 = vmul.f32 %v963, %v956
    %984 = vadd.xlane.f32.xlu0 %v983
    %v985 = vpop.xlane.xlu0 %984
    %v986 = vsel %vm966, %v985, %v956
    %v987 = vmul.f32 %v963, %v960
    %988 = vadd.xlane.f32.xlu0 %v987
    %v989 = vpop.xlane.xlu0 %988
    %v990 = vsel %vm966, %v989, %v960
    %s991 = scalar_lea.vmem [#allocation2], 22
    %v992 = vld [vmem:[%s991] ss:$0 sm:$0xff]
    %v993 = vxor.u32 %v992, 2147483648
    %v994 = vlaneseq
    %v995 = vand.u32 %v994, 127
    %vm996 = vcmp.eq.s32.totalorder %v995, 22
    %v997 = vmul.f32 %v993, %v970
    %998 = vadd.xlane.f32.xlu0 %v997
    %v999 = vpop.xlane.xlu0 %998
    %v1000 = vsel %vm996, %v999, %v970
    %v1001 = vmul.f32 %v993, %v974
    %1002 = vadd.xlane.f32.xlu0 %v1001
    %v1003 = vpop.xlane.xlu0 %1002
    %v1004 = vsel %vm996, %v1003, %v974
    %v1005 = vmul.f32 %v993, %v978
    %1006 = vadd.xlane.f32.xlu0 %v1005
    %v1007 = vpop.xlane.xlu0 %1006
    %v1008 = vsel %vm996, %v1007, %v978
    %v1009 = vmul.f32 %v993, %v982
    %1010 = vadd.xlane.f32.xlu0 %v1009
    %v1011 = vpop.xlane.xlu0 %1010
    %v1012 = vsel %vm996, %v1011, %v982
    %v1013 = vmul.f32 %v993, %v986
    %1014 = vadd.xlane.f32.xlu0 %v1013
    %v1015 = vpop.xlane.xlu0 %1014
    %v1016 = vsel %vm996, %v1015, %v986
    %v1017 = vmul.f32 %v993, %v990
    %1018 = vadd.xlane.f32.xlu0 %v1017
    %v1019 = vpop.xlane.xlu0 %1018
    %v1020 = vsel %vm996, %v1019, %v990
    %s1021 = scalar_lea.vmem [#allocation2], 21
    %v1022 = vld [vmem:[%s1021] ss:$0 sm:$0xff]
    %v1023 = vxor.u32 %v1022, 2147483648
    %v1024 = vlaneseq
    %v1025 = vand.u32 %v1024, 127
    %vm1026 = vcmp.eq.s32.totalorder %v1025, 21
    %v1027 = vmul.f32 %v1023, %v1000
    %1028 = vadd.xlane.f32.xlu0 %v1027
    %v1029 = vpop.xlane.xlu0 %1028
    %v1030 = vsel %vm1026, %v1029, %v1000
    %v1031 = vmul.f32 %v1023, %v1004
    %1032 = vadd.xlane.f32.xlu0 %v1031
    %v1033 = vpop.xlane.xlu0 %1032
    %v1034 = vsel %vm1026, %v1033, %v1004
    %v1035 = vmul.f32 %v1023, %v1008
    %1036 = vadd.xlane.f32.xlu0 %v1035
    %v1037 = vpop.xlane.xlu0 %1036
    %v1038 = vsel %vm1026, %v1037, %v1008
    %v1039 = vmul.f32 %v1023, %v1012
    %1040 = vadd.xlane.f32.xlu0 %v1039
    %v1041 = vpop.xlane.xlu0 %1040
    %v1042 = vsel %vm1026, %v1041, %v1012
    %v1043 = vmul.f32 %v1023, %v1016
    %1044 = vadd.xlane.f32.xlu0 %v1043
    %v1045 = vpop.xlane.xlu0 %1044
    %v1046 = vsel %vm1026, %v1045, %v1016
    %v1047 = vmul.f32 %v1023, %v1020
    %1048 = vadd.xlane.f32.xlu0 %v1047
    %v1049 = vpop.xlane.xlu0 %1048
    %v1050 = vsel %vm1026, %v1049, %v1020
    %s1051 = scalar_lea.vmem [#allocation2], 20
    %v1052 = vld [vmem:[%s1051] ss:$0 sm:$0xff]
    %v1053 = vxor.u32 %v1052, 2147483648
    %v1054 = vlaneseq
    %v1055 = vand.u32 %v1054, 127
    %vm1056 = vcmp.eq.s32.totalorder %v1055, 20
    %v1057 = vmul.f32 %v1053, %v1030
    %1058 = vadd.xlane.f32.xlu0 %v1057
    %v1059 = vpop.xlane.xlu0 %1058
    %v1060 = vsel %vm1056, %v1059, %v1030
    %v1061 = vmul.f32 %v1053, %v1034
    %1062 = vadd.xlane.f32.xlu0 %v1061
    %v1063 = vpop.xlane.xlu0 %1062
    %v1064 = vsel %vm1056, %v1063, %v1034
    %v1065 = vmul.f32 %v1053, %v1038
    %1066 = vadd.xlane.f32.xlu0 %v1065
    %v1067 = vpop.xlane.xlu0 %1066
    %v1068 = vsel %vm1056, %v1067, %v1038
    %v1069 = vmul.f32 %v1053, %v1042
    %1070 = vadd.xlane.f32.xlu0 %v1069
    %v1071 = vpop.xlane.xlu0 %1070
    %v1072 = vsel %vm1056, %v1071, %v1042
    %v1073 = vmul.f32 %v1053, %v1046
    %1074 = vadd.xlane.f32.xlu0 %v1073
    %v1075 = vpop.xlane.xlu0 %1074
    %v1076 = vsel %vm1056, %v1075, %v1046
    %v1077 = vmul.f32 %v1053, %v1050
    %1078 = vadd.xlane.f32.xlu0 %v1077
    %v1079 = vpop.xlane.xlu0 %1078
    %v1080 = vsel %vm1056, %v1079, %v1050
    %s1081 = scalar_lea.vmem [#allocation2], 19
    %v1082 = vld [vmem:[%s1081] ss:$0 sm:$0xff]
    %v1083 = vxor.u32 %v1082, 2147483648
    %v1084 = vlaneseq
    %v1085 = vand.u32 %v1084, 127
    %vm1086 = vcmp.eq.s32.totalorder %v1085, 19
    %v1087 = vmul.f32 %v1083, %v1060
    %1088 = vadd.xlane.f32.xlu0 %v1087
    %v1089 = vpop.xlane.xlu0 %1088
    %v1090 = vsel %vm1086, %v1089, %v1060
    %v1091 = vmul.f32 %v1083, %v1064
    %1092 = vadd.xlane.f32.xlu0 %v1091
    %v1093 = vpop.xlane.xlu0 %1092
    %v1094 = vsel %vm1086, %v1093, %v1064
    %v1095 = vmul.f32 %v1083, %v1068
    %1096 = vadd.xlane.f32.xlu0 %v1095
    %v1097 = vpop.xlane.xlu0 %1096
    %v1098 = vsel %vm1086, %v1097, %v1068
    %v1099 = vmul.f32 %v1083, %v1072
    %1100 = vadd.xlane.f32.xlu0 %v1099
    %v1101 = vpop.xlane.xlu0 %1100
    %v1102 = vsel %vm1086, %v1101, %v1072
    %v1103 = vmul.f32 %v1083, %v1076
    %1104 = vadd.xlane.f32.xlu0 %v1103
    %v1105 = vpop.xlane.xlu0 %1104
    %v1106 = vsel %vm1086, %v1105, %v1076
    %v1107 = vmul.f32 %v1083, %v1080
    %1108 = vadd.xlane.f32.xlu0 %v1107
    %v1109 = vpop.xlane.xlu0 %1108
    %v1110 = vsel %vm1086, %v1109, %v1080
    %s1111 = scalar_lea.vmem [#allocation2], 18
    %v1112 = vld [vmem:[%s1111] ss:$0 sm:$0xff]
    %v1113 = vxor.u32 %v1112, 2147483648
    %v1114 = vlaneseq
    %v1115 = vand.u32 %v1114, 127
    %vm1116 = vcmp.eq.s32.totalorder %v1115, 18
    %v1117 = vmul.f32 %v1113, %v1090
    %1118 = vadd.xlane.f32.xlu0 %v1117
    %v1119 = vpop.xlane.xlu0 %1118
    %v1120 = vsel %vm1116, %v1119, %v1090
    %v1121 = vmul.f32 %v1113, %v1094
    %1122 = vadd.xlane.f32.xlu0 %v1121
    %v1123 = vpop.xlane.xlu0 %1122
    %v1124 = vsel %vm1116, %v1123, %v1094
    %v1125 = vmul.f32 %v1113, %v1098
    %1126 = vadd.xlane.f32.xlu0 %v1125
    %v1127 = vpop.xlane.xlu0 %1126
    %v1128 = vsel %vm1116, %v1127, %v1098
    %v1129 = vmul.f32 %v1113, %v1102
    %1130 = vadd.xlane.f32.xlu0 %v1129
    %v1131 = vpop.xlane.xlu0 %1130
    %v1132 = vsel %vm1116, %v1131, %v1102
    %v1133 = vmul.f32 %v1113, %v1106
    %1134 = vadd.xlane.f32.xlu0 %v1133
    %v1135 = vpop.xlane.xlu0 %1134
    %v1136 = vsel %vm1116, %v1135, %v1106
    %v1137 = vmul.f32 %v1113, %v1110
    %1138 = vadd.xlane.f32.xlu0 %v1137
    %v1139 = vpop.xlane.xlu0 %1138
    %v1140 = vsel %vm1116, %v1139, %v1110
    %s1141 = scalar_lea.vmem [#allocation2], 17
    %v1142 = vld [vmem:[%s1141] ss:$0 sm:$0xff]
    %v1143 = vxor.u32 %v1142, 2147483648
    %v1144 = vlaneseq
    %v1145 = vand.u32 %v1144, 127
    %vm1146 = vcmp.eq.s32.totalorder %v1145, 17
    %v1147 = vmul.f32 %v1143, %v1120
    %1148 = vadd.xlane.f32.xlu0 %v1147
    %v1149 = vpop.xlane.xlu0 %1148
    %v1150 = vsel %vm1146, %v1149, %v1120
    %v1151 = vmul.f32 %v1143, %v1124
    %1152 = vadd.xlane.f32.xlu0 %v1151
    %v1153 = vpop.xlane.xlu0 %1152
    %v1154 = vsel %vm1146, %v1153, %v1124
    %v1155 = vmul.f32 %v1143, %v1128
    %1156 = vadd.xlane.f32.xlu0 %v1155
    %v1157 = vpop.xlane.xlu0 %1156
    %v1158 = vsel %vm1146, %v1157, %v1128
    %v1159 = vmul.f32 %v1143, %v1132
    %1160 = vadd.xlane.f32.xlu0 %v1159
    %v1161 = vpop.xlane.xlu0 %1160
    %v1162 = vsel %vm1146, %v1161, %v1132
    %v1163 = vmul.f32 %v1143, %v1136
    %1164 = vadd.xlane.f32.xlu0 %v1163
    %v1165 = vpop.xlane.xlu0 %1164
    %v1166 = vsel %vm1146, %v1165, %v1136
    %v1167 = vmul.f32 %v1143, %v1140
    %1168 = vadd.xlane.f32.xlu0 %v1167
    %v1169 = vpop.xlane.xlu0 %1168
    %v1170 = vsel %vm1146, %v1169, %v1140
    %s1171 = scalar_lea.vmem [#allocation2], 16
    %v1172 = vld [vmem:[%s1171] ss:$0 sm:$0xff]
    %v1173 = vxor.u32 %v1172, 2147483648
    %v1174 = vlaneseq
    %v1175 = vand.u32 %v1174, 127
    %vm1176 = vcmp.eq.s32.totalorder %v1175, 16
    %v1177 = vmul.f32 %v1173, %v1150
    %1178 = vadd.xlane.f32.xlu0 %v1177
    %v1179 = vpop.xlane.xlu0 %1178
    %v1180 = vsel %vm1176, %v1179, %v1150
    %v1181 = vmul.f32 %v1173, %v1154
    %1182 = vadd.xlane.f32.xlu0 %v1181
    %v1183 = vpop.xlane.xlu0 %1182
    %v1184 = vsel %vm1176, %v1183, %v1154
    %v1185 = vmul.f32 %v1173, %v1158
    %1186 = vadd.xlane.f32.xlu0 %v1185
    %v1187 = vpop.xlane.xlu0 %1186
    %v1188 = vsel %vm1176, %v1187, %v1158
    %v1189 = vmul.f32 %v1173, %v1162
    %1190 = vadd.xlane.f32.xlu0 %v1189
    %v1191 = vpop.xlane.xlu0 %1190
    %v1192 = vsel %vm1176, %v1191, %v1162
    %v1193 = vmul.f32 %v1173, %v1166
    %1194 = vadd.xlane.f32.xlu0 %v1193
    %v1195 = vpop.xlane.xlu0 %1194
    %v1196 = vsel %vm1176, %v1195, %v1166
    %v1197 = vmul.f32 %v1173, %v1170
    %1198 = vadd.xlane.f32.xlu0 %v1197
    %v1199 = vpop.xlane.xlu0 %1198
    %v1200 = vsel %vm1176, %v1199, %v1170
    %s1201 = scalar_lea.vmem [#allocation2], 15
    %v1202 = vld [vmem:[%s1201] ss:$0 sm:$0xff]
    %v1203 = vxor.u32 %v1202, 2147483648
    %v1204 = vlaneseq
    %v1205 = vand.u32 %v1204, 127
    %vm1206 = vcmp.eq.s32.totalorder %v1205, 15
    %v1207 = vmul.f32 %v1203, %v204
    %1208 = vadd.xlane.f32.xlu0 %v1207
    %v1209 = vpop.xlane.xlu0 %1208
    %v1210 = vsel %vm1206, %v1209, %v204
    %v1211 = vmul.f32 %v1203, %v1180
    %1212 = vadd.xlane.f32.xlu0 %v1211
    %v1213 = vpop.xlane.xlu0 %1212
    %v1214 = vsel %vm1206, %v1213, %v1180
    %v1215 = vmul.f32 %v1203, %v1184
    %1216 = vadd.xlane.f32.xlu0 %v1215
    %v1217 = vpop.xlane.xlu0 %1216
    %v1218 = vsel %vm1206, %v1217, %v1184
    %v1219 = vmul.f32 %v1203, %v1188
    %1220 = vadd.xlane.f32.xlu0 %v1219
    %v1221 = vpop.xlane.xlu0 %1220
    %v1222 = vsel %vm1206, %v1221, %v1188
    %v1223 = vmul.f32 %v1203, %v1192
    %1224 = vadd.xlane.f32.xlu0 %v1223
    %v1225 = vpop.xlane.xlu0 %1224
    %v1226 = vsel %vm1206, %v1225, %v1192
    %v1227 = vmul.f32 %v1203, %v1196
    %1228 = vadd.xlane.f32.xlu0 %v1227
    %v1229 = vpop.xlane.xlu0 %1228
    %v1230 = vsel %vm1206, %v1229, %v1196
    %v1231 = vmul.f32 %v1203, %v1200
    %1232 = vadd.xlane.f32.xlu0 %v1231
    %v1233 = vpop.xlane.xlu0 %1232
    %v1234 = vsel %vm1206, %v1233, %v1200
    %s1235 = scalar_lea.vmem [#allocation2], 14
    %v1236 = vld [vmem:[%s1235] ss:$0 sm:$0xff]
    %v1237 = vxor.u32 %v1236, 2147483648
    %v1238 = vlaneseq
    %v1239 = vand.u32 %v1238, 127
    %vm1240 = vcmp.eq.s32.totalorder %v1239, 14
    %v1241 = vmul.f32 %v1237, %v1210
    %1242 = vadd.xlane.f32.xlu0 %v1241
    %v1243 = vpop.xlane.xlu0 %1242
    %v1244 = vsel %vm1240, %v1243, %v1210
    %v1245 = vmul.f32 %v1237, %v1214
    %1246 = vadd.xlane.f32.xlu0 %v1245
    %v1247 = vpop.xlane.xlu0 %1246
    %v1248 = vsel %vm1240, %v1247, %v1214
    %v1249 = vmul.f32 %v1237, %v1218
    %1250 = vadd.xlane.f32.xlu0 %v1249
    %v1251 = vpop.xlane.xlu0 %1250
    %v1252 = vsel %vm1240, %v1251, %v1218
    %v1253 = vmul.f32 %v1237, %v1222
    %1254 = vadd.xlane.f32.xlu0 %v1253
    %v1255 = vpop.xlane.xlu0 %1254
    %v1256 = vsel %vm1240, %v1255, %v1222
    %v1257 = vmul.f32 %v1237, %v1226
    %1258 = vadd.xlane.f32.xlu0 %v1257
    %v1259 = vpop.xlane.xlu0 %1258
    %v1260 = vsel %vm1240, %v1259, %v1226
    %v1261 = vmul.f32 %v1237, %v1230
    %1262 = vadd.xlane.f32.xlu0 %v1261
    %v1263 = vpop.xlane.xlu0 %1262
    %v1264 = vsel %vm1240, %v1263, %v1230
    %v1265 = vmul.f32 %v1237, %v1234
    %1266 = vadd.xlane.f32.xlu0 %v1265
    %v1267 = vpop.xlane.xlu0 %1266
    %v1268 = vsel %vm1240, %v1267, %v1234
    %s1269 = scalar_lea.vmem [#allocation2], 13
    %v1270 = vld [vmem:[%s1269] ss:$0 sm:$0xff]
    %v1271 = vxor.u32 %v1270, 2147483648
    %v1272 = vlaneseq
    %v1273 = vand.u32 %v1272, 127
    %vm1274 = vcmp.eq.s32.totalorder %v1273, 13
    %v1275 = vmul.f32 %v1271, %v1244
    %1276 = vadd.xlane.f32.xlu0 %v1275
    %v1277 = vpop.xlane.xlu0 %1276
    %v1278 = vsel %vm1274, %v1277, %v1244
    %v1279 = vmul.f32 %v1271, %v1248
    %1280 = vadd.xlane.f32.xlu0 %v1279
    %v1281 = vpop.xlane.xlu0 %1280
    %v1282 = vsel %vm1274, %v1281, %v1248
    %v1283 = vmul.f32 %v1271, %v1252
    %1284 = vadd.xlane.f32.xlu0 %v1283
    %v1285 = vpop.xlane.xlu0 %1284
    %v1286 = vsel %vm1274, %v1285, %v1252
    %v1287 = vmul.f32 %v1271, %v1256
    %1288 = vadd.xlane.f32.xlu0 %v1287
    %v1289 = vpop.xlane.xlu0 %1288
    %v1290 = vsel %vm1274, %v1289, %v1256
    %v1291 = vmul.f32 %v1271, %v1260
    %1292 = vadd.xlane.f32.xlu0 %v1291
    %v1293 = vpop.xlane.xlu0 %1292
    %v1294 = vsel %vm1274, %v1293, %v1260
    %v1295 = vmul.f32 %v1271, %v1264
    %1296 = vadd.xlane.f32.xlu0 %v1295
    %v1297 = vpop.xlane.xlu0 %1296
    %v1298 = vsel %vm1274, %v1297, %v1264
    %v1299 = vmul.f32 %v1271, %v1268
    %1300 = vadd.xlane.f32.xlu0 %v1299
    %v1301 = vpop.xlane.xlu0 %1300
    %v1302 = vsel %vm1274, %v1301, %v1268
    %s1303 = scalar_lea.vmem [#allocation2], 12
    %v1304 = vld [vmem:[%s1303] ss:$0 sm:$0xff]
    %v1305 = vxor.u32 %v1304, 2147483648
    %v1306 = vlaneseq
    %v1307 = vand.u32 %v1306, 127
    %vm1308 = vcmp.eq.s32.totalorder %v1307, 12
    %v1309 = vmul.f32 %v1305, %v1278
    %1310 = vadd.xlane.f32.xlu0 %v1309
    %v1311 = vpop.xlane.xlu0 %1310
    %v1312 = vsel %vm1308, %v1311, %v1278
    %v1313 = vmul.f32 %v1305, %v1282
    %1314 = vadd.xlane.f32.xlu0 %v1313
    %v1315 = vpop.xlane.xlu0 %1314
    %v1316 = vsel %vm1308, %v1315, %v1282
    %v1317 = vmul.f32 %v1305, %v1286
    %1318 = vadd.xlane.f32.xlu0 %v1317
    %v1319 = vpop.xlane.xlu0 %1318
    %v1320 = vsel %vm1308, %v1319, %v1286
    %v1321 = vmul.f32 %v1305, %v1290
    %1322 = vadd.xlane.f32.xlu0 %v1321
    %v1323 = vpop.xlane.xlu0 %1322
    %v1324 = vsel %vm1308, %v1323, %v1290
    %v1325 = vmul.f32 %v1305, %v1294
    %1326 = vadd.xlane.f32.xlu0 %v1325
    %v1327 = vpop.xlane.xlu0 %1326
    %v1328 = vsel %vm1308, %v1327, %v1294
    %v1329 = vmul.f32 %v1305, %v1298
    %1330 = vadd.xlane.f32.xlu0 %v1329
    %v1331 = vpop.xlane.xlu0 %1330
    %v1332 = vsel %vm1308, %v1331, %v1298
    %v1333 = vmul.f32 %v1305, %v1302
    %1334 = vadd.xlane.f32.xlu0 %v1333
    %v1335 = vpop.xlane.xlu0 %1334
    %v1336 = vsel %vm1308, %v1335, %v1302
    %s1337 = scalar_lea.vmem [#allocation2], 11
    %v1338 = vld [vmem:[%s1337] ss:$0 sm:$0xff]
    %v1339 = vxor.u32 %v1338, 2147483648
    %v1340 = vlaneseq
    %v1341 = vand.u32 %v1340, 127
    %vm1342 = vcmp.eq.s32.totalorder %v1341, 11
    %v1343 = vmul.f32 %v1339, %v1312
    %1344 = vadd.xlane.f32.xlu0 %v1343
    %v1345 = vpop.xlane.xlu0 %1344
    %v1346 = vsel %vm1342, %v1345, %v1312
    %v1347 = vmul.f32 %v1339, %v1316
    %1348 = vadd.xlane.f32.xlu0 %v1347
    %v1349 = vpop.xlane.xlu0 %1348
    %v1350 = vsel %vm1342, %v1349, %v1316
    %v1351 = vmul.f32 %v1339, %v1320
    %1352 = vadd.xlane.f32.xlu0 %v1351
    %v1353 = vpop.xlane.xlu0 %1352
    %v1354 = vsel %vm1342, %v1353, %v1320
    %v1355 = vmul.f32 %v1339, %v1324
    %1356 = vadd.xlane.f32.xlu0 %v1355
    %v1357 = vpop.xlane.xlu0 %1356
    %v1358 = vsel %vm1342, %v1357, %v1324
    %v1359 = vmul.f32 %v1339, %v1328
    %1360 = vadd.xlane.f32.xlu0 %v1359
    %v1361 = vpop.xlane.xlu0 %1360
    %v1362 = vsel %vm1342, %v1361, %v1328
    %v1363 = vmul.f32 %v1339, %v1332
    %1364 = vadd.xlane.f32.xlu0 %v1363
    %v1365 = vpop.xlane.xlu0 %1364
    %v1366 = vsel %vm1342, %v1365, %v1332
    %v1367 = vmul.f32 %v1339, %v1336
    %1368 = vadd.xlane.f32.xlu0 %v1367
    %v1369 = vpop.xlane.xlu0 %1368
    %v1370 = vsel %vm1342, %v1369, %v1336
    %s1371 = scalar_lea.vmem [#allocation2], 10
    %v1372 = vld [vmem:[%s1371] ss:$0 sm:$0xff]
    %v1373 = vxor.u32 %v1372, 2147483648
    %v1374 = vlaneseq
    %v1375 = vand.u32 %v1374, 127
    %vm1376 = vcmp.eq.s32.totalorder %v1375, 10
    %v1377 = vmul.f32 %v1373, %v1346
    %1378 = vadd.xlane.f32.xlu0 %v1377
    %v1379 = vpop.xlane.xlu0 %1378
    %v1380 = vsel %vm1376, %v1379, %v1346
    %v1381 = vmul.f32 %v1373, %v1350
    %1382 = vadd.xlane.f32.xlu0 %v1381
    %v1383 = vpop.xlane.xlu0 %1382
    %v1384 = vsel %vm1376, %v1383, %v1350
    %v1385 = vmul.f32 %v1373, %v1354
    %1386 = vadd.xlane.f32.xlu0 %v1385
    %v1387 = vpop.xlane.xlu0 %1386
    %v1388 = vsel %vm1376, %v1387, %v1354
    %v1389 = vmul.f32 %v1373, %v1358
    %1390 = vadd.xlane.f32.xlu0 %v1389
    %v1391 = vpop.xlane.xlu0 %1390
    %v1392 = vsel %vm1376, %v1391, %v1358
    %v1393 = vmul.f32 %v1373, %v1362
    %1394 = vadd.xlane.f32.xlu0 %v1393
    %v1395 = vpop.xlane.xlu0 %1394
    %v1396 = vsel %vm1376, %v1395, %v1362
    %v1397 = vmul.f32 %v1373, %v1366
    %1398 = vadd.xlane.f32.xlu0 %v1397
    %v1399 = vpop.xlane.xlu0 %1398
    %v1400 = vsel %vm1376, %v1399, %v1366
    %v1401 = vmul.f32 %v1373, %v1370
    %1402 = vadd.xlane.f32.xlu0 %v1401
    %v1403 = vpop.xlane.xlu0 %1402
    %v1404 = vsel %vm1376, %v1403, %v1370
    %s1405 = scalar_lea.vmem [#allocation2], 9
    %v1406 = vld [vmem:[%s1405] ss:$0 sm:$0xff]
    %v1407 = vxor.u32 %v1406, 2147483648
    %v1408 = vlaneseq
    %v1409 = vand.u32 %v1408, 127
    %vm1410 = vcmp.eq.s32.totalorder %v1409, 9
    %v1411 = vmul.f32 %v1407, %v1380
    %1412 = vadd.xlane.f32.xlu0 %v1411
    %v1413 = vpop.xlane.xlu0 %1412
    %v1414 = vsel %vm1410, %v1413, %v1380
    %v1415 = vmul.f32 %v1407, %v1384
    %1416 = vadd.xlane.f32.xlu0 %v1415
    %v1417 = vpop.xlane.xlu0 %1416
    %v1418 = vsel %vm1410, %v1417, %v1384
    %v1419 = vmul.f32 %v1407, %v1388
    %1420 = vadd.xlane.f32.xlu0 %v1419
    %v1421 = vpop.xlane.xlu0 %1420
    %v1422 = vsel %vm1410, %v1421, %v1388
    %v1423 = vmul.f32 %v1407, %v1392
    %1424 = vadd.xlane.f32.xlu0 %v1423
    %v1425 = vpop.xlane.xlu0 %1424
    %v1426 = vsel %vm1410, %v1425, %v1392
    %v1427 = vmul.f32 %v1407, %v1396
    %1428 = vadd.xlane.f32.xlu0 %v1427
    %v1429 = vpop.xlane.xlu0 %1428
    %v1430 = vsel %vm1410, %v1429, %v1396
    %v1431 = vmul.f32 %v1407, %v1400
    %1432 = vadd.xlane.f32.xlu0 %v1431
    %v1433 = vpop.xlane.xlu0 %1432
    %v1434 = vsel %vm1410, %v1433, %v1400
    %v1435 = vmul.f32 %v1407, %v1404
    %1436 = vadd.xlane.f32.xlu0 %v1435
    %v1437 = vpop.xlane.xlu0 %1436
    %v1438 = vsel %vm1410, %v1437, %v1404
    %s1439 = scalar_lea.vmem [#allocation2], 8
    %v1440 = vld [vmem:[%s1439] ss:$0 sm:$0xff]
    %v1441 = vxor.u32 %v1440, 2147483648
    %v1442 = vlaneseq
    %v1443 = vand.u32 %v1442, 127
    %vm1444 = vcmp.eq.s32.totalorder %v1443, 8
    %v1445 = vmul.f32 %v1441, %v1414
    %1446 = vadd.xlane.f32.xlu0 %v1445
    %v1447 = vpop.xlane.xlu0 %1446
    %v1448 = vsel %vm1444, %v1447, %v1414
    %v1449 = vmul.f32 %v1441, %v1418
    %1450 = vadd.xlane.f32.xlu0 %v1449
    %v1451 = vpop.xlane.xlu0 %1450
    %v1452 = vsel %vm1444, %v1451, %v1418
    %v1453 = vmul.f32 %v1441, %v1422
    %1454 = vadd.xlane.f32.xlu0 %v1453
    %v1455 = vpop.xlane.xlu0 %1454
    %v1456 = vsel %vm1444, %v1455, %v1422
    %v1457 = vmul.f32 %v1441, %v1426
    %1458 = vadd.xlane.f32.xlu0 %v1457
    %v1459 = vpop.xlane.xlu0 %1458
    %v1460 = vsel %vm1444, %v1459, %v1426
    %v1461 = vmul.f32 %v1441, %v1430
    %1462 = vadd.xlane.f32.xlu0 %v1461
    %v1463 = vpop.xlane.xlu0 %1462
    %v1464 = vsel %vm1444, %v1463, %v1430
    %v1465 = vmul.f32 %v1441, %v1434
    %1466 = vadd.xlane.f32.xlu0 %v1465
    %v1467 = vpop.xlane.xlu0 %1466
    %v1468 = vsel %vm1444, %v1467, %v1434
    %v1469 = vmul.f32 %v1441, %v1438
    %1470 = vadd.xlane.f32.xlu0 %v1469
    %v1471 = vpop.xlane.xlu0 %1470
    %v1472 = vsel %vm1444, %v1471, %v1438
    %s1473 = scalar_lea.vmem [#allocation2], 7
    %v1474 = vld [vmem:[%s1473] ss:$0 sm:$0xff]
    %v1475 = vxor.u32 %v1474, 2147483648
    %v1476 = vlaneseq
    %v1477 = vand.u32 %v1476, 127
    %vm1478 = vcmp.eq.s32.totalorder %v1477, 7
    %v1479 = vmul.f32 %v1475, %v197
    %1480 = vadd.xlane.f32.xlu0 %v1479
    %v1481 = vpop.xlane.xlu0 %1480
    %v1482 = vsel %vm1478, %v1481, %v197
    %v1483 = vmul.f32 %v1475, %v1448
    %1484 = vadd.xlane.f32.xlu0 %v1483
    %v1485 = vpop.xlane.xlu0 %1484
    %v1486 = vsel %vm1478, %v1485, %v1448
    %v1487 = vmul.f32 %v1475, %v1452
    %1488 = vadd.xlane.f32.xlu0 %v1487
    %v1489 = vpop.xlane.xlu0 %1488
    %v1490 = vsel %vm1478, %v1489, %v1452
    %v1491 = vmul.f32 %v1475, %v1456
    %1492 = vadd.xlane.f32.xlu0 %v1491
    %v1493 = vpop.xlane.xlu0 %1492
    %v1494 = vsel %vm1478, %v1493, %v1456
    %v1495 = vmul.f32 %v1475, %v1460
    %1496 = vadd.xlane.f32.xlu0 %v1495
    %v1497 = vpop.xlane.xlu0 %1496
    %v1498 = vsel %vm1478, %v1497, %v1460
    %v1499 = vmul.f32 %v1475, %v1464
    %1500 = vadd.xlane.f32.xlu0 %v1499
    %v1501 = vpop.xlane.xlu0 %1500
    %v1502 = vsel %vm1478, %v1501, %v1464
    %v1503 = vmul.f32 %v1475, %v1468
    %1504 = vadd.xlane.f32.xlu0 %v1503
    %v1505 = vpop.xlane.xlu0 %1504
    %v1506 = vsel %vm1478, %v1505, %v1468
    %v1507 = vmul.f32 %v1475, %v1472
    %1508 = vadd.xlane.f32.xlu0 %v1507
    %v1509 = vpop.xlane.xlu0 %1508
    %v1510 = vsel %vm1478, %v1509, %v1472
    %s1511 = scalar_lea.vmem [#allocation2], 6
    %v1512 = vld [vmem:[%s1511] ss:$0 sm:$0xff]
    %v1513 = vxor.u32 %v1512, 2147483648
    %v1514 = vlaneseq
    %v1515 = vand.u32 %v1514, 127
    %vm1516 = vcmp.eq.s32.totalorder %v1515, 6
    %v1517 = vmul.f32 %v1513, %v1482
    %1518 = vadd.xlane.f32.xlu0 %v1517
    %v1519 = vpop.xlane.xlu0 %1518
    %v1520 = vsel %vm1516, %v1519, %v1482
    %v1521 = vmul.f32 %v1513, %v1486
    %1522 = vadd.xlane.f32.xlu0 %v1521
    %v1523 = vpop.xlane.xlu0 %1522
    %v1524 = vsel %vm1516, %v1523, %v1486
    %v1525 = vmul.f32 %v1513, %v1490
    %1526 = vadd.xlane.f32.xlu0 %v1525
    %v1527 = vpop.xlane.xlu0 %1526
    %v1528 = vsel %vm1516, %v1527, %v1490
    %v1529 = vmul.f32 %v1513, %v1494
    %1530 = vadd.xlane.f32.xlu0 %v1529
    %v1531 = vpop.xlane.xlu0 %1530
    %v1532 = vsel %vm1516, %v1531, %v1494
    %v1533 = vmul.f32 %v1513, %v1498
    %1534 = vadd.xlane.f32.xlu0 %v1533
    %v1535 = vpop.xlane.xlu0 %1534
    %v1536 = vsel %vm1516, %v1535, %v1498
    %v1537 = vmul.f32 %v1513, %v1502
    %1538 = vadd.xlane.f32.xlu0 %v1537
    %v1539 = vpop.xlane.xlu0 %1538
    %v1540 = vsel %vm1516, %v1539, %v1502
    %v1541 = vmul.f32 %v1513, %v1506
    %1542 = vadd.xlane.f32.xlu0 %v1541
    %v1543 = vpop.xlane.xlu0 %1542
    %v1544 = vsel %vm1516, %v1543, %v1506
    %v1545 = vmul.f32 %v1513, %v1510
    %1546 = vadd.xlane.f32.xlu0 %v1545
    %v1547 = vpop.xlane.xlu0 %1546
    %v1548 = vsel %vm1516, %v1547, %v1510
    %s1549 = scalar_lea.vmem [#allocation2], 5
    %v1550 = vld [vmem:[%s1549] ss:$0 sm:$0xff]
    %v1551 = vxor.u32 %v1550, 2147483648
    %v1552 = vlaneseq
    %v1553 = vand.u32 %v1552, 127
    %vm1554 = vcmp.eq.s32.totalorder %v1553, 5
    %v1555 = vmul.f32 %v1551, %v1520
    %1556 = vadd.xlane.f32.xlu0 %v1555
    %v1557 = vpop.xlane.xlu0 %1556
    %v1558 = vsel %vm1554, %v1557, %v1520
    %v1559 = vmul.f32 %v1551, %v1524
    %1560 = vadd.xlane.f32.xlu0 %v1559
    %v1561 = vpop.xlane.xlu0 %1560
    %v1562 = vsel %vm1554, %v1561, %v1524
    %v1563 = vmul.f32 %v1551, %v1528
    %1564 = vadd.xlane.f32.xlu0 %v1563
    %v1565 = vpop.xlane.xlu0 %1564
    %v1566 = vsel %vm1554, %v1565, %v1528
    %v1567 = vmul.f32 %v1551, %v1532
    %1568 = vadd.xlane.f32.xlu0 %v1567
    %v1569 = vpop.xlane.xlu0 %1568
    %v1570 = vsel %vm1554, %v1569, %v1532
    %v1571 = vmul.f32 %v1551, %v1536
    %1572 = vadd.xlane.f32.xlu0 %v1571
    %v1573 = vpop.xlane.xlu0 %1572
    %v1574 = vsel %vm1554, %v1573, %v1536
    %v1575 = vmul.f32 %v1551, %v1540
    %1576 = vadd.xlane.f32.xlu0 %v1575
    %v1577 = vpop.xlane.xlu0 %1576
    %v1578 = vsel %vm1554, %v1577, %v1540
    %v1579 = vmul.f32 %v1551, %v1544
    %1580 = vadd.xlane.f32.xlu0 %v1579
    %v1581 = vpop.xlane.xlu0 %1580
    %v1582 = vsel %vm1554, %v1581, %v1544
    %v1583 = vmul.f32 %v1551, %v1548
    %1584 = vadd.xlane.f32.xlu0 %v1583
    %v1585 = vpop.xlane.xlu0 %1584
    %v1586 = vsel %vm1554, %v1585, %v1548
    %s1587 = scalar_lea.vmem [#allocation2], 4
    %v1588 = vld [vmem:[%s1587] ss:$0 sm:$0xff]
    %v1589 = vxor.u32 %v1588, 2147483648
    %v1590 = vlaneseq
    %v1591 = vand.u32 %v1590, 127
    %vm1592 = vcmp.eq.s32.totalorder %v1591, 4
    %v1593 = vmul.f32 %v1589, %v1558
    %1594 = vadd.xlane.f32.xlu0 %v1593
    %v1595 = vpop.xlane.xlu0 %1594
    %v1596 = vsel %vm1592, %v1595, %v1558
    %v1597 = vmul.f32 %v1589, %v1562
    %1598 = vadd.xlane.f32.xlu0 %v1597
    %v1599 = vpop.xlane.xlu0 %1598
    %v1600 = vsel %vm1592, %v1599, %v1562
    %v1601 = vmul.f32 %v1589, %v1566
    %1602 = vadd.xlane.f32.xlu0 %v1601
    %v1603 = vpop.xlane.xlu0 %1602
    %v1604 = vsel %vm1592, %v1603, %v1566
    %v1605 = vmul.f32 %v1589, %v1570
    %1606 = vadd.xlane.f32.xlu0 %v1605
    %v1607 = vpop.xlane.xlu0 %1606
    %v1608 = vsel %vm1592, %v1607, %v1570
    %v1609 = vmul.f32 %v1589, %v1574
    %1610 = vadd.xlane.f32.xlu0 %v1609
    %v1611 = vpop.xlane.xlu0 %1610
    %v1612 = vsel %vm1592, %v1611, %v1574
    %v1613 = vmul.f32 %v1589, %v1578
    %1614 = vadd.xlane.f32.xlu0 %v1613
    %v1615 = vpop.xlane.xlu0 %1614
    %v1616 = vsel %vm1592, %v1615, %v1578
    %v1617 = vmul.f32 %v1589, %v1582
    %1618 = vadd.xlane.f32.xlu0 %v1617
    %v1619 = vpop.xlane.xlu0 %1618
    %v1620 = vsel %vm1592, %v1619, %v1582
    %v1621 = vmul.f32 %v1589, %v1586
    %1622 = vadd.xlane.f32.xlu0 %v1621
    %v1623 = vpop.xlane.xlu0 %1622
    %v1624 = vsel %vm1592, %v1623, %v1586
    %s1625 = scalar_lea.vmem [#allocation2], 3
    %v1626 = vld [vmem:[%s1625] ss:$0 sm:$0xff]
    %v1627 = vxor.u32 %v1626, 2147483648
    %v1628 = vlaneseq
    %v1629 = vand.u32 %v1628, 127
    %vm1630 = vcmp.eq.s32.totalorder %v1629, 3
    %v1631 = vmul.f32 %v1627, %v1596
    %1632 = vadd.xlane.f32.xlu0 %v1631
    %v1633 = vpop.xlane.xlu0 %1632
    %v1634 = vsel %vm1630, %v1633, %v1596
    %v1635 = vmul.f32 %v1627, %v1600
    %1636 = vadd.xlane.f32.xlu0 %v1635
    %v1637 = vpop.xlane.xlu0 %1636
    %v1638 = vsel %vm1630, %v1637, %v1600
    %v1639 = vmul.f32 %v1627, %v1604
    %1640 = vadd.xlane.f32.xlu0 %v1639
    %v1641 = vpop.xlane.xlu0 %1640
    %v1642 = vsel %vm1630, %v1641, %v1604
    %v1643 = vmul.f32 %v1627, %v1608
    %1644 = vadd.xlane.f32.xlu0 %v1643
    %v1645 = vpop.xlane.xlu0 %1644
    %v1646 = vsel %vm1630, %v1645, %v1608
    %v1647 = vmul.f32 %v1627, %v1612
    %1648 = vadd.xlane.f32.xlu0 %v1647
    %v1649 = vpop.xlane.xlu0 %1648
    %v1650 = vsel %vm1630, %v1649, %v1612
    %v1651 = vmul.f32 %v1627, %v1616
    %1652 = vadd.xlane.f32.xlu0 %v1651
    %v1653 = vpop.xlane.xlu0 %1652
    %v1654 = vsel %vm1630, %v1653, %v1616
    %v1655 = vmul.f32 %v1627, %v1620
    %1656 = vadd.xlane.f32.xlu0 %v1655
    %v1657 = vpop.xlane.xlu0 %1656
    %v1658 = vsel %vm1630, %v1657, %v1620
    %v1659 = vmul.f32 %v1627, %v1624
    %1660 = vadd.xlane.f32.xlu0 %v1659
    %v1661 = vpop.xlane.xlu0 %1660
    %v1662 = vsel %vm1630, %v1661, %v1624
    %s1663 = scalar_lea.vmem [#allocation2], 2
    %v1664 = vld [vmem:[%s1663] ss:$0 sm:$0xff]
    %v1665 = vxor.u32 %v1664, 2147483648
    %v1666 = vlaneseq
    %v1667 = vand.u32 %v1666, 127
    %vm1668 = vcmp.eq.s32.totalorder %v1667, 2
    %v1669 = vmul.f32 %v1665, %v1634
    %1670 = vadd.xlane.f32.xlu0 %v1669
    %v1671 = vpop.xlane.xlu0 %1670
    %v1672 = vsel %vm1668, %v1671, %v1634
    %v1673 = vmul.f32 %v1665, %v1638
    %1674 = vadd.xlane.f32.xlu0 %v1673
    %v1675 = vpop.xlane.xlu0 %1674
    %v1676 = vsel %vm1668, %v1675, %v1638
    %v1677 = vmul.f32 %v1665, %v1642
    %1678 = vadd.xlane.f32.xlu0 %v1677
    %v1679 = vpop.xlane.xlu0 %1678
    %v1680 = vsel %vm1668, %v1679, %v1642
    %v1681 = vmul.f32 %v1665, %v1646
    %1682 = vadd.xlane.f32.xlu0 %v1681
    %v1683 = vpop.xlane.xlu0 %1682
    %v1684 = vsel %vm1668, %v1683, %v1646
    %v1685 = vmul.f32 %v1665, %v1650
    %1686 = vadd.xlane.f32.xlu0 %v1685
    %v1687 = vpop.xlane.xlu0 %1686
    %v1688 = vsel %vm1668, %v1687, %v1650
    %v1689 = vmul.f32 %v1665, %v1654
    %1690 = vadd.xlane.f32.xlu0 %v1689
    %v1691 = vpop.xlane.xlu0 %1690
    %v1692 = vsel %vm1668, %v1691, %v1654
    %v1693 = vmul.f32 %v1665, %v1658
    %1694 = vadd.xlane.f32.xlu0 %v1693
    %v1695 = vpop.xlane.xlu0 %1694
    %v1696 = vsel %vm1668, %v1695, %v1658
    %v1697 = vmul.f32 %v1665, %v1662
    %1698 = vadd.xlane.f32.xlu0 %v1697
    %v1699 = vpop.xlane.xlu0 %1698
    %v1700 = vsel %vm1668, %v1699, %v1662
    %s1701 = scalar_lea.vmem [#allocation2], 1
    %v1702 = vld [vmem:[%s1701] ss:$0 sm:$0xff]
    %v1703 = vxor.u32 %v1702, 2147483648
    %v1704 = vlaneseq
    %v1705 = vand.u32 %v1704, 127
    %vm1706 = vcmp.eq.s32.totalorder %v1705, 1
    %v1707 = vmul.f32 %v1703, %v1672
    %1708 = vadd.xlane.f32.xlu0 %v1707
    %v1709 = vpop.xlane.xlu0 %1708
    %v1710 = vsel %vm1706, %v1709, %v1672
    %v1711 = vmul.f32 %v1703, %v1676
    %1712 = vadd.xlane.f32.xlu0 %v1711
    %v1713 = vpop.xlane.xlu0 %1712
    %v1714 = vsel %vm1706, %v1713, %v1676
    %v1715 = vmul.f32 %v1703, %v1680
    %1716 = vadd.xlane.f32.xlu0 %v1715
    %v1717 = vpop.xlane.xlu0 %1716
    %v1718 = vsel %vm1706, %v1717, %v1680
    %v1719 = vmul.f32 %v1703, %v1684
    %1720 = vadd.xlane.f32.xlu0 %v1719
    %v1721 = vpop.xlane.xlu0 %1720
    %v1722 = vsel %vm1706, %v1721, %v1684
    %v1723 = vmul.f32 %v1703, %v1688
    %1724 = vadd.xlane.f32.xlu0 %v1723
    %v1725 = vpop.xlane.xlu0 %1724
    %v1726 = vsel %vm1706, %v1725, %v1688
    %v1727 = vmul.f32 %v1703, %v1692
    %1728 = vadd.xlane.f32.xlu0 %v1727
    %v1729 = vpop.xlane.xlu0 %1728
    %v1730 = vsel %vm1706, %v1729, %v1692
    %v1731 = vmul.f32 %v1703, %v1696
    %1732 = vadd.xlane.f32.xlu0 %v1731
    %v1733 = vpop.xlane.xlu0 %1732
    %v1734 = vsel %vm1706, %v1733, %v1696
    %v1735 = vmul.f32 %v1703, %v1700
    %1736 = vadd.xlane.f32.xlu0 %v1735
    %v1737 = vpop.xlane.xlu0 %1736
    %v1738 = vsel %vm1706, %v1737, %v1700
    %v1739 = vld [vmem:[#allocation2] ss:$0 sm:$0xff]
    %v1740 = vxor.u32 %v1739, 2147483648
    %v1741 = vlaneseq
    %v1742 = vand.u32 %v1741, 127
    %vm1743 = vcmp.eq.s32.totalorder %v1742, 0
    %v1744 = vmul.f32 %v1740, %v1710
    %1745 = vadd.xlane.f32.xlu0 %v1744
    %v1746 = vpop.xlane.xlu0 %1745
    %v1747 = vsel %vm1743, %v1746, %v1710
    %v1748 = vmul.f32 %v1740, %v1714
    %1749 = vadd.xlane.f32.xlu0 %v1748
    %v1750 = vpop.xlane.xlu0 %1749
    %v1751 = vsel %vm1743, %v1750, %v1714
    %v1752 = vmul.f32 %v1740, %v1718
    %1753 = vadd.xlane.f32.xlu0 %v1752
    %v1754 = vpop.xlane.xlu0 %1753
    %v1755 = vsel %vm1743, %v1754, %v1718
    %v1756 = vmul.f32 %v1740, %v1722
    %1757 = vadd.xlane.f32.xlu0 %v1756
    %v1758 = vpop.xlane.xlu0 %1757
    %v1759 = vsel %vm1743, %v1758, %v1722
    %v1760 = vmul.f32 %v1740, %v1726
    %1761 = vadd.xlane.f32.xlu0 %v1760
    %v1762 = vpop.xlane.xlu0 %1761
    %v1763 = vsel %vm1743, %v1762, %v1726
    %v1764 = vmul.f32 %v1740, %v1730
    %1765 = vadd.xlane.f32.xlu0 %v1764
    %v1766 = vpop.xlane.xlu0 %1765
    %v1767 = vsel %vm1743, %v1766, %v1730
    %v1768 = vmul.f32 %v1740, %v1734
    %1769 = vadd.xlane.f32.xlu0 %v1768
    %v1770 = vpop.xlane.xlu0 %1769
    %v1771 = vsel %vm1743, %v1770, %v1734
    %v1772 = vmul.f32 %v1740, %v1738
    %1773 = vadd.xlane.f32.xlu0 %v1772
    %v1774 = vpop.xlane.xlu0 %1773
    %v1775 = vsel %vm1743, %v1774, %v1738
    %v1776 = vrcp.pop %v72
    %v1777 = vmul.f32 %v1747, %v1776
    %vm1778 = vweird.f32 %v72
    %v1779 = vsel %vm1778, %v1747, %v1777
    %1780 = vst [vmem:[#allocation1] sm:$0xff] %v1779
    %v1781 = vrcp.pop %v88
    %v1782 = vmul.f32 %v1751, %v1781
    %vm1783 = vweird.f32 %v88
    %v1784 = vsel %vm1783, %v1751, %v1782
    %s1785 = scalar_lea.vmem [#allocation1], 8
    %1786 = vst [vmem:[%s1785] sm:$0xff] %v1784
    %v1787 = vrcp.pop %v104
    %v1788 = vmul.f32 %v1755, %v1787
    %vm1789 = vweird.f32 %v104
    %v1790 = vsel %vm1789, %v1755, %v1788
    %s1791 = scalar_lea.vmem [#allocation1], 16
    %1792 = vst [vmem:[%s1791] sm:$0xff] %v1790
    %v1793 = vrcp.pop %v120
    %v1794 = vmul.f32 %v1759, %v1793
    %vm1795 = vweird.f32 %v120
    %v1796 = vsel %vm1795, %v1759, %v1794
    %s1797 = scalar_lea.vmem [#allocation1], 24
    %1798 = vst [vmem:[%s1797] sm:$0xff] %v1796
    %v1799 = vrcp.pop %v136
    %v1800 = vmul.f32 %v1763, %v1799
    %vm1801 = vweird.f32 %v136
    %v1802 = vsel %vm1801, %v1763, %v1800
    %s1803 = scalar_lea.vmem [#allocation1], 32
    %1804 = vst [vmem:[%s1803] sm:$0xff] %v1802
    %v1805 = vrcp.pop %v152
    %v1806 = vmul.f32 %v1767, %v1805
    %vm1807 = vweird.f32 %v152
    %v1808 = vsel %vm1807, %v1767, %v1806
    %s1809 = scalar_lea.vmem [#allocation1], 40
    %1810 = vst [vmem:[%s1809] sm:$0xff] %v1808
    %v1811 = vrcp.pop %v168
    %v1812 = vmul.f32 %v1771, %v1811
    %vm1813 = vweird.f32 %v168
    %v1814 = vsel %vm1813, %v1771, %v1812
    %s1815 = scalar_lea.vmem [#allocation1], 48
    %1816 = vst [vmem:[%s1815] sm:$0xff] %v1814
    %v1817 = vrcp.pop %v184
    %v1818 = vmul.f32 %v1775, %v1817
    %vm1819 = vweird.f32 %v184
    %v1820 = vsel %vm1819, %v1775, %v1818
    %s1821 = scalar_lea.vmem [#allocation1], 56
    %1822 = vst [vmem:[%s1821] sm:$0xff] %v1820
    // Predicated region
    $region36: #{custom-call.12} parent=1 // pred_check
      _
    $region37: #{custom-call.12} parent=1 // pred_check_branch
      %1824 = sbr.rel (0) target = $region39
    $region38: #{custom-call.12} parent=1 // pred_region
      // Predicated region
      $region40: #{custom-call.12} parent=38 // pred_check
        _
      $region41: #{custom-call.12} parent=38 // pred_check_branch
        %1826 = sbr.rel (0) target = $region43
      $region42: #{custom-call.12} parent=38 // pred_region
        // Predicated region
        $region55: #{custom-call.12} parent=42 // pred_check
          _
        $region56: #{custom-call.12} parent=42 // pred_check_branch
          %1855 = sbr.rel (0) target = $region58
        $region57: #{custom-call.12} parent=42 // pred_region
          loop: start=0, step=1, limit=1
          $region59: #{custom-call.12} parent=57 // loop_pre_header
            _
          $region60: #{custom-call.12} parent=57 // loop_header
            %s1857 = sphi 0, %s1861
            %p1858 = scmp.ge.s32.totalorder %s1857, 1
            %s1862 = sphi [#allocation1], [#allocation1]
            %s1863 = sphi %s1, %s1
          $region61: #{custom-call.12} parent=57 // loop_header_branch
            %1860 = sbr.rel (%p1858) target = $region65
          $region62: #{custom-call.12} parent=57 // loop_body
            %v1864 = vld [vmem:[%s1862] sm:$0xff]
            %1865 = vst [vmem:[%s1863] sm:$0xff] %v1864
            %v1866 = vld [vmem:[%s1862 + $0x8] sm:$0xff]
            %1867 = vst [vmem:[%s1863 + $0x8] sm:$0xff] %v1866
            %v1868 = vld [vmem:[%s1862 + $0x10] sm:$0xff]
            %1869 = vst [vmem:[%s1863 + $0x10] sm:$0xff] %v1868
            %v1870 = vld [vmem:[%s1862 + $0x18] sm:$0xff]
            %1871 = vst [vmem:[%s1863 + $0x18] sm:$0xff] %v1870
            %v1872 = vld [vmem:[%s1862 + $0x20] sm:$0xff]
            %1873 = vst [vmem:[%s1863 + $0x20] sm:$0xff] %v1872
            %v1874 = vld [vmem:[%s1862 + $0x28] sm:$0xff]
            %1875 = vst [vmem:[%s1863 + $0x28] sm:$0xff] %v1874
            %v1876 = vld [vmem:[%s1862 + $0x30] sm:$0xff]
            %1877 = vst [vmem:[%s1863 + $0x30] sm:$0xff] %v1876
            %v1878 = vld [vmem:[%s1862 + $0x38] sm:$0xff]
            %1879 = vst [vmem:[%s1863 + $0x38] sm:$0xff] %v1878
          $region63: #{custom-call.12} parent=57 // loop_footer
            %s1861 = sadd.s32 1, %s1857
          $region64: #{custom-call.12} parent=57 // loop_footer_branch
            %1856 = sbr.rel target = $region60
          $region65: #{custom-call.12} parent=57 // loop_exit
            _
        $region58: #{custom-call.12} parent=42 // pred_fallthru
          _
        // Predicated region
        $region66: #{custom-call.12} parent=42 // pred_check
          _
        $region67: #{custom-call.12} parent=42 // pred_check_branch
          %1881 = sbr.rel target = $region69
        $region68: #{custom-call.12} parent=42 // pred_region
          _
        $region69: #{custom-call.12} parent=42 // pred_fallthru
          _
      $region43: #{custom-call.12} parent=38 // pred_fallthru
        _
      // Predicated region
      $region44: #{custom-call.12} parent=38 // pred_check
        _
      $region45: #{custom-call.12} parent=38 // pred_check_branch
        %1828 = sbr.rel target = $region47
      $region46: #{custom-call.12} parent=38 // pred_region
        loop: start=0, step=1, limit=1
        $region48: #{custom-call.12} parent=46 // loop_pre_header
          _
        $region49: #{custom-call.12} parent=46 // loop_header
          %s1831 = sphi 0, %s1835
          %p1832 = scmp.ge.s32.totalorder %s1831, 1
          %s1836 = sphi [#allocation1], [#allocation1]
          %s1837 = sphi %s1, %s1
        $region50: #{custom-call.12} parent=46 // loop_header_branch
          %1834 = sbr.rel (%p1832) target = $region54
        $region51: #{custom-call.12} parent=46 // loop_body
          %v1838 = vld [vmem:[%s1836] sm:$0xff]
          %1839 = vst [vmem:[%s1837] sm:$0xff] %v1838
          %v1840 = vld [vmem:[%s1836 + $0x8] sm:$0xff]
          %1841 = vst [vmem:[%s1837 + $0x8] sm:$0xff] %v1840
          %v1842 = vld [vmem:[%s1836 + $0x10] sm:$0xff]
          %1843 = vst [vmem:[%s1837 + $0x10] sm:$0xff] %v1842
          %v1844 = vld [vmem:[%s1836 + $0x18] sm:$0xff]
          %1845 = vst [vmem:[%s1837 + $0x18] sm:$0xff] %v1844
          %v1846 = vld [vmem:[%s1836 + $0x20] sm:$0xff]
          %1847 = vst [vmem:[%s1837 + $0x20] sm:$0xff] %v1846
          %v1848 = vld [vmem:[%s1836 + $0x28] sm:$0xff]
          %1849 = vst [vmem:[%s1837 + $0x28] sm:$0xff] %v1848
          %v1850 = vld [vmem:[%s1836 + $0x30] sm:$0xff]
          %1851 = vst [vmem:[%s1837 + $0x30] sm:$0xff] %v1850
          %v1852 = vld [vmem:[%s1836 + $0x38] sm:$0xff]
          %1853 = vst [vmem:[%s1837 + $0x38] sm:$0xff] %v1852
        $region52: #{custom-call.12} parent=46 // loop_footer
          %s1835 = sadd.s32 1, %s1831
        $region53: #{custom-call.12} parent=46 // loop_footer_branch
          %1830 = sbr.rel target = $region49
        $region54: #{custom-call.12} parent=46 // loop_exit
          _
      $region47: #{custom-call.12} parent=38 // pred_fallthru
        _
    $region39: #{custom-call.12} parent=1 // pred_fallthru
      _
    %1882 = vnop

// kernel: ssm_calc.1
$region0: #{ssm_calc.1}
  #allocation0 [shape = 'u32[]', space=smem, size = 0x4, offset = 0x4, fixed_abs, tag = 'smem constant byte address 0x4 - core index']
  #allocation1 [shape = 'u32[144,128]{1,0:T(1,128)}', space=vmem, size = 0x12000, scoped, tag = 'internal scratch']
  %s0 = inlined_call_operand.vmem [shape: f32[64,128], index: 0, kind: input, shape index: {}]
  %s1 = inlined_call_operand.vmem [shape: bf16[64,64], index: 1, kind: input, shape index: {}]
  %s2 = inlined_call_operand.vmem [shape: bf16[64,64], index: 2, kind: input, shape index: {}]
  %s3 = inlined_call_operand.vmem [shape: bf16[64,64], index: 3, kind: input, shape index: {}]
  %s4 = inlined_call_operand.vmem [shape: f32[64,128], index: 4, kind: input, shape index: {}]
  %s5 = inlined_call_operand.vmem [shape: f32[64,128], index: 5, kind: output, shape index: {}]
  %s6 = sld [smem:[#allocation0]]
  $region30: #{ssm_calc.1} parent=0
    _
  %s8 = ssub.s32 1, %s6
  %s9 = scalar_select 0, %s8, %s6
  // Predicated region
  $region2: #{ssm_calc.1} parent=0 // pred_check
    _
  $region3: #{ssm_calc.1} parent=0 // pred_check_branch
    %11 = sbr.rel (0) target = $region5
  $region4: #{ssm_calc.1} parent=0 // pred_region
    _
  $region5: #{ssm_calc.1} parent=0 // pred_fallthru
    _
  // Predicated region
  $region6: #{ssm_calc.1} parent=0 // pred_check
    _
  $region7: #{ssm_calc.1} parent=0 // pred_check_branch
    %13 = sbr.rel (0) target = $region9
  $region8: #{ssm_calc.1} parent=0 // pred_region
    _
  $region9: #{ssm_calc.1} parent=0 // pred_fallthru
    _
  // Predicated region
  $region10: #{ssm_calc.1} parent=0 // pred_check
    _
  $region11: #{ssm_calc.1} parent=0 // pred_check_branch
    %15 = sbr.rel (0) target = $region13
  $region12: #{ssm_calc.1} parent=0 // pred_region
    _
  $region13: #{ssm_calc.1} parent=0 // pred_fallthru
    _
  // Predicated region
  $region14: #{ssm_calc.1} parent=0 // pred_check
    _
  $region15: #{ssm_calc.1} parent=0 // pred_check_branch
    %17 = sbr.rel (0) target = $region17
  $region16: #{ssm_calc.1} parent=0 // pred_region
    _
  $region17: #{ssm_calc.1} parent=0 // pred_fallthru
    _
  // Predicated region
  $region18: #{ssm_calc.1} parent=0 // pred_check
    _
  $region19: #{ssm_calc.1} parent=0 // pred_check_branch
    %19 = sbr.rel (0) target = $region21
  $region20: #{ssm_calc.1} parent=0 // pred_region
    _
  $region21: #{ssm_calc.1} parent=0 // pred_fallthru
    _
  %v21 = vld [vmem:[%s0] sm:$0xff]
  %v22 = vld [vmem:[%s0 + $0x8] sm:$0xff]
  %v23 = vld [vmem:[%s0 + $0x10] sm:$0xff]
  %v24 = vld [vmem:[%s0 + $0x18] sm:$0xff]
  %v25 = vld [vmem:[%s0 + $0x20] sm:$0xff]
  %v26 = vld [vmem:[%s0 + $0x28] sm:$0xff]
  %v27 = vld [vmem:[%s0 + $0x30] sm:$0xff]
  %v28 = vld [vmem:[%s0 + $0x38] sm:$0xff]
  %v29 = vpack.c.bf16 %v22, %v21
  %v30 = vpack.c.bf16 %v24, %v23
  %v31 = vpack.c.bf16 %v26, %v25
  %v32 = vpack.c.bf16 %v28, %v27
  %v33 = vld [vmem:[%s1] sm:$0xf]
  %v34 = vld [vmem:[%s1 + $0x4] sm:$0xf]
  %v35 = vld [vmem:[%s1 + $0x8] sm:$0xf]
  %v36 = vld [vmem:[%s1 + $0xc] sm:$0xf]
  %v37 = vld [vmem:[%s1 + $0x10] sm:$0xf]
  %v38 = vld [vmem:[%s1 + $0x14] sm:$0xf]
  %v39 = vld [vmem:[%s1 + $0x18] sm:$0xf]
  %v40 = vld [vmem:[%s1 + $0x1c] sm:$0xf]
  %v49 = vunpack.c.l.b16 %v33
  %v50 = vunpack.c.l.b16 %v34
  %v51 = vunpack.c.l.b16 %v35
  %v52 = vunpack.c.l.b16 %v36
  %v53 = vunpack.c.l.b16 %v37
  %v54 = vunpack.c.l.b16 %v38
  %v55 = vunpack.c.l.b16 %v39
  %v56 = vunpack.c.l.b16 %v40
  %v57 = vpack.c.b16 %v50, %v49
  %v58 = vpack.c.b16 %v52, %v51
  %v59 = vpack.c.b16 %v54, %v53
  %v60 = vpack.c.b16 %v56, %v55
  %vm61 = vcmask 523264
  %v63 = vsel %vm61, %v57, 0
  %v66 = vsel %vm61, %v58, 0
  %v69 = vsel %vm61, %v59, 0
  %v72 = vsel %vm61, %v60, 0
  %74 = vmatprep.subr.bf16.mxu0 0
  %75 = vmatpush1.bf16.msra.mxu0 %v29
  %76 = vmatprep.subr.bf16.mxu0 0
  %77 = vmatpush1.bf16.msra.mxu0 %v30
  %78 = vmatprep.subr.bf16.mxu0 0
  %79 = vmatpush1.bf16.msra.mxu0 %v31
  %80 = vmatprep.subr.bf16.mxu0 0
  %81 = vmatpush1.bf16.msra.mxu0 %v32
  %82 = vmatprep.subr.bf16.mxu0 0
  %83 = vmatpush1.bf16.msra.mxu0 0
  %84 = vmatprep.subr.bf16.mxu0 0
  %85 = vmatpush1.bf16.msra.mxu0 0
  %86 = vmatprep.subr.bf16.mxu0 0
  %87 = vmatpush1.bf16.msra.mxu0 0
  %88 = vmatprep.subr.bf16.mxu0 0
  %89 = vmatpush1.bf16.msra.mxu0 0
  %90 = vmatprep.subr.bf16.mxu0 0
  %91 = vmatpush1.bf16.msra.mxu0 0
  %92 = vmatprep.subr.bf16.mxu0 0
  %93 = vmatpush1.bf16.msra.mxu0 0
  %94 = vmatprep.subr.bf16.mxu0 0
  %95 = vmatpush1.bf16.msra.mxu0 0
  %96 = vmatprep.subr.bf16.mxu0 0
  %97 = vmatpush1.bf16.msra.mxu0 0
  %98 = vmatprep.subr.bf16.mxu0 0
  %99 = vmatpush1.bf16.msra.mxu0 0
  %100 = vmatprep.subr.bf16.mxu0 0
  %101 = vmatpush1.bf16.msra.mxu0 0
  %102 = vmatprep.subr.bf16.mxu0 0
  %103 = vmatpush1.bf16.msra.mxu0 0
  %104 = vmatprep.subr.bf16.mxu0 0
  %105 = vmatpush1.bf16.msra.mxu0 0
  %106 = vmatprep.mubr.bf16.mxu0 0
  %107 = vmatmul.mubr.bf16.gmra.mrb[0].mxu0 %v63
  %v108 = vpop.f32.mrb[0].mxu0
  %v109 = vadd.f32 0.0, %v108
  %v110 = vpop.f32.mrb[0].mxu0
  %v111 = vpop.f32.mrb[0].mxu0
  %v112 = vadd.f32 0.0, %v111
  %v113 = vpop.f32.mrb[0].mxu0
  %114 = vmatprep.mubr.bf16.mxu0 0
  %115 = vmatmul.mubr.bf16.gmra.mrb[0].mxu0 %v66
  %v116 = vpop.f32.mrb[0].mxu0
  %v117 = vadd.f32 0.0, %v116
  %v118 = vpop.f32.mrb[0].mxu0
  %v119 = vpop.f32.mrb[0].mxu0
  %v120 = vadd.f32 0.0, %v119
  %v121 = vpop.f32.mrb[0].mxu0
  %122 = vmatprep.mubr.bf16.mxu0 0
  %123 = vmatmul.mubr.bf16.gmra.mrb[0].mxu0 %v69
  %v124 = vpop.f32.mrb[0].mxu0
  %v125 = vadd.f32 0.0, %v124
  %v126 = vpop.f32.mrb[0].mxu0
  %v127 = vpop.f32.mrb[0].mxu0
  %v128 = vadd.f32 0.0, %v127
  %v129 = vpop.f32.mrb[0].mxu0
  %130 = vmatprep.mubr.bf16.mxu0 0
  %131 = vmatmul.mubr.bf16.gmra.mrb[0].mxu0 %v72
  %v132 = vpop.f32.mrb[0].mxu0
  %v133 = vadd.f32 0.0, %v132
  %v134 = vpop.f32.mrb[0].mxu0
  %v135 = vpop.f32.mrb[0].mxu0
  %v136 = vadd.f32 0.0, %v135
  %v137 = vpop.f32.mrb[0].mxu0
  %138 = vdwg.mxu0
  %v139 = vld [vmem:[%s2] sm:$0xf]
  %v140 = vld [vmem:[%s2 + $0x4] sm:$0xf]
  %v141 = vld [vmem:[%s2 + $0x8] sm:$0xf]
  %v142 = vld [vmem:[%s2 + $0xc] sm:$0xf]
  %v143 = vld [vmem:[%s2 + $0x10] sm:$0xf]
  %v144 = vld [vmem:[%s2 + $0x14] sm:$0xf]
  %v145 = vld [vmem:[%s2 + $0x18] sm:$0xf]
  %v146 = vld [vmem:[%s2 + $0x1c] sm:$0xf]
  %v147 = vpack.c.bf16 %v112, %v109
  %v148 = vpack.c.bf16 %v120, %v117
  %v149 = vpack.c.bf16 %v128, %v125
  %v150 = vpack.c.bf16 %v136, %v133
  %v159 = vunpack.c.l.b16 %v139
  %v160 = vunpack.c.l.b16 %v140
  %v161 = vunpack.c.l.b16 %v141
  %v162 = vunpack.c.l.b16 %v142
  %v163 = vunpack.c.l.b16 %v143
  %v164 = vunpack.c.l.b16 %v144
  %v165 = vunpack.c.l.b16 %v145
  %v166 = vunpack.c.l.b16 %v146
  %v167 = vpack.c.b16 %v160, %v159
  %v168 = vpack.c.b16 %v162, %v161
  %v169 = vpack.c.b16 %v164, %v163
  %v170 = vpack.c.b16 %v166, %v165
  %v172 = vsel %vm61, %v167, 0
  %v175 = vsel %vm61, %v168, 0
  %v178 = vsel %vm61, %v169, 0
  %v181 = vsel %vm61, %v170, 0
  %183 = vmatprep.subr.bf16.mxu0 0
  %184 = vmatpush1.bf16.msra.mxu0 %v147
  %185 = vmatprep.subr.bf16.mxu0 0
  %186 = vmatpush1.bf16.msra.mxu0 %v148
  %187 = vmatprep.subr.bf16.mxu0 0
  %188 = vmatpush1.bf16.msra.mxu0 %v149
  %189 = vmatprep.subr.bf16.mxu0 0
  %190 = vmatpush1.bf16.msra.mxu0 %v150
  %191 = vmatprep.subr.bf16.mxu0 0
  %192 = vmatpush1.bf16.msra.mxu0 0
  %193 = vmatprep.subr.bf16.mxu0 0
  %194 = vmatpush1.bf16.msra.mxu0 0
  %195 = vmatprep.subr.bf16.mxu0 0
  %196 = vmatpush1.bf16.msra.mxu0 0
  %197 = vmatprep.subr.bf16.mxu0 0
  %198 = vmatpush1.bf16.msra.mxu0 0
  %199 = vmatprep.subr.bf16.mxu0 0
  %200 = vmatpush1.bf16.msra.mxu0 0
  %201 = vmatprep.subr.bf16.mxu0 0
  %202 = vmatpush1.bf16.msra.mxu0 0
  %203 = vmatprep.subr.bf16.mxu0 0
  %204 = vmatpush1.bf16.msra.mxu0 0
  %205 = vmatprep.subr.bf16.mxu0 0
  %206 = vmatpush1.bf16.msra.mxu0 0
  %207 = vmatprep.subr.bf16.mxu0 0
  %208 = vmatpush1.bf16.msra.mxu0 0
  %209 = vmatprep.subr.bf16.mxu0 0
  %210 = vmatpush1.bf16.msra.mxu0 0
  %211 = vmatprep.subr.bf16.mxu0 0
  %212 = vmatpush1.bf16.msra.mxu0 0
  %213 = vmatprep.subr.bf16.mxu0 0
  %214 = vmatpush1.bf16.msra.mxu0 0
  %215 = vmatprep.mubr.bf16.mxu0 0
  %216 = vmatmul.mubr.bf16.gmra.mrb[0].mxu0 %v172
  %v217 = vpop.f32.mrb[0].mxu0
  %v218 = vadd.f32 0.0, %v217
  %v219 = vpop.f32.mrb[0].mxu0
  %v220 = vpop.f32.mrb[0].mxu0
  %v221 = vadd.f32 0.0, %v220
  %v222 = vpop.f32.mrb[0].mxu0
  %223 = vmatprep.mubr.bf16.mxu0 0
  %224 = vmatmul.mubr.bf16.gmra.mrb[0].mxu0 %v175
  %v225 = vpop.f32.mrb[0].mxu0
  %v226 = vadd.f32 0.0, %v225
  %v227 = vpop.f32.mrb[0].mxu0
  %v228 = vpop.f32.mrb[0].mxu0
  %v229 = vadd.f32 0.0, %v228
  %v230 = vpop.f32.mrb[0].mxu0
  %231 = vmatprep.mubr.bf16.mxu0 0
  %232 = vmatmul.mubr.bf16.gmra.mrb[0].mxu0 %v178
  %v233 = vpop.f32.mrb[0].mxu0
  %v234 = vadd.f32 0.0, %v233
  %v235 = vpop.f32.mrb[0].mxu0
  %v236 = vpop.f32.mrb[0].mxu0
  %v237 = vadd.f32 0.0, %v236
  %v238 = vpop.f32.mrb[0].mxu0
  %239 = vmatprep.mubr.bf16.mxu0 0
  %240 = vmatmul.mubr.bf16.gmra.mrb[0].mxu0 %v181
  %v241 = vpop.f32.mrb[0].mxu0
  %v242 = vadd.f32 0.0, %v241
  %v243 = vpop.f32.mrb[0].mxu0
  %v244 = vpop.f32.mrb[0].mxu0
  %v245 = vadd.f32 0.0, %v244
  %v246 = vpop.f32.mrb[0].mxu0
  %247 = vdwg.mxu0
  %v248 = vtanh.pop %v218
  %v249 = vtanh.pop %v221
  %v250 = vtanh.pop %v226
  %v251 = vtanh.pop %v229
  %v252 = vtanh.pop %v234
  %v253 = vtanh.pop %v237
  %v254 = vtanh.pop %v242
  %v255 = vtanh.pop %v245
  %v256 = vld [vmem:[%s3] sm:$0xf]
  %v257 = vld [vmem:[%s3 + $0x4] sm:$0xf]
  %v258 = vld [vmem:[%s3 + $0x8] sm:$0xf]
  %v259 = vld [vmem:[%s3 + $0xc] sm:$0xf]
  %v260 = vld [vmem:[%s3 + $0x10] sm:$0xf]
  %v261 = vld [vmem:[%s3 + $0x14] sm:$0xf]
  %v262 = vld [vmem:[%s3 + $0x18] sm:$0xf]
  %v263 = vld [vmem:[%s3 + $0x1c] sm:$0xf]
  %v264 = vpack.c.bf16 %v249, %v248
  %v265 = vpack.c.bf16 %v251, %v250
  %v266 = vpack.c.bf16 %v253, %v252
  %v267 = vpack.c.bf16 %v255, %v254
  %v268 = vld [vmem:[%s4] sm:$0xff]
  %v269 = vld [vmem:[%s4 + $0x8] sm:$0xff]
  %v270 = vld [vmem:[%s4 + $0x10] sm:$0xff]
  %v271 = vld [vmem:[%s4 + $0x18] sm:$0xff]
  %v272 = vld [vmem:[%s4 + $0x20] sm:$0xff]
  %v273 = vld [vmem:[%s4 + $0x28] sm:$0xff]
  %v274 = vld [vmem:[%s4 + $0x30] sm:$0xff]
  %v275 = vld [vmem:[%s4 + $0x38] sm:$0xff]
  %v284 = vunpack.c.l.b16 %v256
  %v285 = vunpack.c.l.b16 %v257
  %v286 = vunpack.c.l.b16 %v258
  %v287 = vunpack.c.l.b16 %v259
  %v288 = vunpack.c.l.b16 %v260
  %v289 = vunpack.c.l.b16 %v261
  %v290 = vunpack.c.l.b16 %v262
  %v291 = vunpack.c.l.b16 %v263
  %v292 = vpack.c.b16 %v285, %v284
  %v293 = vpack.c.b16 %v287, %v286
  %v294 = vpack.c.b16 %v289, %v288
  %v295 = vpack.c.b16 %v291, %v290
  %v297 = vsel %vm61, %v292, 0
  %v300 = vsel %vm61, %v293, 0
  %v303 = vsel %vm61, %v294, 0
  %v306 = vsel %vm61, %v295, 0
  %308 = vmatprep.subr.bf16.mxu0 0
  %309 = vmatpush1.bf16.msra.mxu0 %v264
  %310 = vmatprep.subr.bf16.mxu0 0
  %311 = vmatpush1.bf16.msra.mxu0 %v265
  %312 = vmatprep.subr.bf16.mxu0 0
  %313 = vmatpush1.bf16.msra.mxu0 %v266
  %314 = vmatprep.subr.bf16.mxu0 0
  %315 = vmatpush1.bf16.msra.mxu0 %v267
  %316 = vmatprep.subr.bf16.mxu0 0
  %317 = vmatpush1.bf16.msra.mxu0 0
  %318 = vmatprep.subr.bf16.mxu0 0
  %319 = vmatpush1.bf16.msra.mxu0 0
  %320 = vmatprep.subr.bf16.mxu0 0
  %321 = vmatpush1.bf16.msra.mxu0 0
  %322 = vmatprep.subr.bf16.mxu0 0
  %323 = vmatpush1.bf16.msra.mxu0 0
  %324 = vmatprep.subr.bf16.mxu0 0
  %325 = vmatpush1.bf16.msra.mxu0 0
  %326 = vmatprep.subr.bf16.mxu0 0
  %327 = vmatpush1.bf16.msra.mxu0 0
  %328 = vmatprep.subr.bf16.mxu0 0
  %329 = vmatpush1.bf16.msra.mxu0 0
  %330 = vmatprep.subr.bf16.mxu0 0
  %331 = vmatpush1.bf16.msra.mxu0 0
  %332 = vmatprep.subr.bf16.mxu0 0
  %333 = vmatpush1.bf16.msra.mxu0 0
  %334 = vmatprep.subr.bf16.mxu0 0
  %335 = vmatpush1.bf16.msra.mxu0 0
  %336 = vmatprep.subr.bf16.mxu0 0
  %337 = vmatpush1.bf16.msra.mxu0 0
  %338 = vmatprep.subr.bf16.mxu0 0
  %339 = vmatpush1.bf16.msra.mxu0 0
  %340 = vmatprep.mubr.bf16.mxu0 0
  %341 = vmatmul.mubr.bf16.gmra.mrb[0].mxu0 %v297
  %v342 = vpop.f32.mrb[0].mxu0
  %v343 = vadd.f32 %v268, %v342
  %v344 = vpop.f32.mrb[0].mxu0
  %v345 = vpop.f32.mrb[0].mxu0
  %v346 = vadd.f32 %v269, %v345
  %v347 = vpop.f32.mrb[0].mxu0
  %348 = vmatprep.mubr.bf16.mxu0 0
  %349 = vmatmul.mubr.bf16.gmra.mrb[0].mxu0 %v300
  %v350 = vpop.f32.mrb[0].mxu0
  %v351 = vadd.f32 %v270, %v350
  %v352 = vpop.f32.mrb[0].mxu0
  %v353 = vpop.f32.mrb[0].mxu0
  %v354 = vadd.f32 %v271, %v353
  %v355 = vpop.f32.mrb[0].mxu0
  %356 = vmatprep.mubr.bf16.mxu0 0
  %357 = vmatmul.mubr.bf16.gmra.mrb[0].mxu0 %v303
  %v358 = vpop.f32.mrb[0].mxu0
  %v359 = vadd.f32 %v272, %v358
  %v360 = vpop.f32.mrb[0].mxu0
  %v361 = vpop.f32.mrb[0].mxu0
  %v362 = vadd.f32 %v273, %v361
  %v363 = vpop.f32.mrb[0].mxu0
  %364 = vmatprep.mubr.bf16.mxu0 0
  %365 = vmatmul.mubr.bf16.gmra.mrb[0].mxu0 %v306
  %v366 = vpop.f32.mrb[0].mxu0
  %v367 = vadd.f32 %v274, %v366
  %v368 = vpop.f32.mrb[0].mxu0
  %v369 = vpop.f32.mrb[0].mxu0
  %v370 = vadd.f32 %v275, %v369
  %v371 = vpop.f32.mrb[0].mxu0
  %372 = vdwg.mxu0
  %373 = vst [vmem:[%s5] sm:$0xff] %v343
  %374 = vst [vmem:[%s5 + $0x8] sm:$0xff] %v346
  %375 = vst [vmem:[%s5 + $0x10] sm:$0xff] %v351
  %376 = vst [vmem:[%s5 + $0x18] sm:$0xff] %v354
  %377 = vst [vmem:[%s5 + $0x20] sm:$0xff] %v359
  %378 = vst [vmem:[%s5 + $0x28] sm:$0xff] %v362
  %379 = vst [vmem:[%s5 + $0x30] sm:$0xff] %v367
  %380 = vst [vmem:[%s5 + $0x38] sm:$0xff] %v370
  // Predicated region
  $region22: #{ssm_calc.1} parent=0 // pred_check
    _
  $region23: #{ssm_calc.1} parent=0 // pred_check_branch
    %382 = sbr.rel (0) target = $region25
  $region24: #{ssm_calc.1} parent=0 // pred_region
    _
  $region25: #{ssm_calc.1} parent=0 // pred_fallthru
    _
  // Predicated region
  $region26: #{ssm_calc.1} parent=0 // pred_check
    _
  $region27: #{ssm_calc.1} parent=0 // pred_check_branch
    %384 = sbr.rel (0) target = $region29
  $region28: #{ssm_calc.1} parent=0 // pred_region
    _
  $region29: #{ssm_calc.1} parent=0 // pred_fallthru
    _

</llo_original>
